<compile_context>
chip_gen: v5e
topology: v5e:2x2
jax: 0.10.0
libtpu: 0.0.40
codegen_flags: <defaults>
</compile_context>

<pallas_src>
import functools

import jax
import jax.numpy as jnp
from jax.experimental import pallas as pl
from jax.experimental.pallas import tpu as pltpu

LN_EPS = 1e-5


def _layernorm(v_f32, gamma_row, beta_row):
    # v_f32: [N, D]; gamma_row/beta_row: [1, D] (lane broadcast).
    mu = jnp.mean(v_f32, axis=-1, keepdims=True)
    c = v_f32 - mu
    var = jnp.mean(c * c, axis=-1, keepdims=True)
    return c * jax.lax.rsqrt(var + LN_EPS) * gamma_row + beta_row


# ---------------------------------------------------------------------------
# Fused AttentionLayer kernel
# ---------------------------------------------------------------------------
def attention_layer_kernel(
    x_ref,                               # [bb, T, D]   activations
    wq_ref, wk_ref, wout_ref,            # bf16, pre-transposed linear weights
    g_attn_ref, b_attn_ref,              # [1, D] f32 LayerNorm(attn) params
    wff_ref, bff_ref,                    # bf16 [D, D], f32 [1, D]
    g_ff_ref, b_ff_ref,                  # [1, D] f32 LayerNorm(ff) params
    o_ref,                               # [bb, T, D]
    *, num_heads, k_dim_head, v_dim_head, skip,
):
    bb, T, d_in = x_ref.shape
    d_out = o_ref.shape[-1]
    n = bb * T

    x32 = x_ref[...].astype(jnp.float32).reshape(n, d_in)
    xb = x32.astype(jnp.bfloat16)

    # Q / K projections (bf16 operands, f32 MXU accumulation).
    # TODO(synk): the original forward projects V with w_k (w_v is dead weight);
    # since Q == K == V == x, v == k and we reuse the k projection.
    q = jnp.dot(xb, wq_ref[...], preferred_element_type=jnp.float32)
    k = jnp.dot(xb, wk_ref[...], preferred_element_type=jnp.float32)

    qb = q.astype(jnp.bfloat16).reshape(bb, T, num_heads * k_dim_head)
    kb = k.astype(jnp.bfloat16).reshape(bb, T, num_heads * k_dim_head)
    vb = kb  # v_i = rearrange(w_k(V), ...)

    wout = wout_ref[...]                 # bf16 [num_heads * v_dim_head, d_in]
    scale = 1.0 / (k_dim_head ** 0.5)

    # Per-head attention; the concat + w_out is folded into a per-head
    # accumulation over row-slices of the (pre-transposed) output weight.
    attn_acc = jnp.zeros((n, d_in), jnp.float32)
    for h in range(num_heads):
        lo = h * k_dim_head
        q_h = qb[:, :, lo:lo + k_dim_head]
        k_h = kb[:, :, lo:lo + k_dim_head]
        v_h = vb[:, :, lo:lo + k_dim_head]

        s = jnp.einsum('btd,bsd->bts', q_h, k_h,
                       preferred_element_type=jnp.float32) * scale
        s = s - jnp.max(s, axis=-1, keepdims=True)
        p = jnp.exp(s)
        p = p / jnp.sum(p, axis=-1, keepdims=True)

        val = jnp.einsum('bts,bsd->btd', p.astype(jnp.bfloat16), v_h,
                         preferred_element_type=jnp.float32)
        attn_acc = attn_acc + jnp.dot(
            val.reshape(n, k_dim_head).astype(jnp.bfloat16),
            wout[h * v_dim_head:(h + 1) * v_dim_head, :],
            preferred_element_type=jnp.float32)

    if skip:
        attn_acc = attn_acc + x32

    h1 = _layernorm(attn_acc, g_attn_ref[...], b_attn_ref[...])

    ff = jnp.dot(h1.astype(jnp.bfloat16), wff_ref[...],
                 preferred_element_type=jnp.float32) + bff_ref[...]

    out = _layernorm(h1 + ff, g_ff_ref[...], b_ff_ref[...])
    o_ref[...] = out.reshape(bb, T, d_out).astype(o_ref.dtype)


def attention_layer_forward(x, lp, *, skip, num_heads, k_dim_head, v_dim_head,
                            block_b=64):
    B, T, d_in = x.shape
    d_out = lp["norm_attn_g"].shape[-1]
    # TODO(synk): the original module's norm_attn(out_features) only
    # type-checks when in_features == out_features; we require it here.
    assert d_in == d_out
    assert k_dim_head == v_dim_head  # required because the forward reuses w_k for V

    bb = min(block_b, B)
    assert B % bb == 0, "batch must divide block size for this tiling"
    grid = (B // bb,)

    q_dim = num_heads * k_dim_head
    v_dim = num_heads * v_dim_head

    kernel = functools.partial(
        attention_layer_kernel, num_heads=num_heads, k_dim_head=k_dim_head,
        v_dim_head=v_dim_head, skip=skip)

    act_spec = pl.BlockSpec((bb, T, d_in), lambda i: (i, 0, 0))
    out_spec = pl.BlockSpec((bb, T, d_out), lambda i: (i, 0, 0))

    def full2d(a):
        return pl.BlockSpec(a.shape, lambda i: (0, 0))

    # Advisory cost estimate so XLA schedules surrounding ops sensibly.
    flops = (2 * B * T * d_in * q_dim * 2                    # q + k projections
             + 2 * B * num_heads * T * T * k_dim_head * 2    # scores + attn @ v
             + 2 * B * T * v_dim * d_in                      # attention out proj
             + 2 * B * T * d_out * d_out)                    # feed-forward
    transcendentals = B * num_heads * T * T
    bytes_accessed = (2 * B * T * d_in * 4
                      + (d_in * q_dim * 2 + v_dim * d_in + d_out * d_out) * 2
                      + 6 * d_out * 4)

    # Explicit scoped-VMEM budget from actual tile sizes (+ headroom), capped
    # below v7x's 64 MiB physical VMEM.
    weight_vmem = 2 * 2 * (d_in * q_dim * 2 + v_dim * d_in + d_out * d_out)
    act_vmem = 2 * 4 * (bb * T * d_in + bb * T * d_out)
    scratch_vmem = 16 * bb * T * max(d_in, q_dim, d_out) * 4
    vmem_limit = min(int(weight_vmem + act_vmem + scratch_vmem) + (8 << 20),
                     64 << 20)

    return pl.pallas_call(
        kernel,
        out_shape=jax.ShapeDtypeStruct((B, T, d_out), x.dtype),
        grid_spec=pltpu.PrefetchScalarGridSpec(
            num_scalar_prefetch=0,
            grid=grid,
            in_specs=[
                act_spec,
                full2d(lp["wq_t"]), full2d(lp["wk_t"]), full2d(lp["wout_t"]),
                full2d(lp["norm_attn_g"]), full2d(lp["norm_attn_b"]),
                full2d(lp["wff_t"]), full2d(lp["bff"]),
                full2d(lp["norm_ff_g"]), full2d(lp["norm_ff_b"]),
            ],
            out_specs=out_spec),
        compiler_params=pltpu.CompilerParams(
            dimension_semantics=("parallel",),
            vmem_limit_bytes=vmem_limit),
        cost_estimate=pl.CostEstimate(flops=flops,
                                      transcendentals=transcendentals,
                                      bytes_accessed=bytes_accessed),
    )(x, lp["wq_t"], lp["wk_t"], lp["wout_t"],
      lp["norm_attn_g"], lp["norm_attn_b"],
      lp["wff_t"], lp["bff"],
      lp["norm_ff_g"], lp["norm_ff_b"])


def build_forward_fn(skips, num_heads, k_dim_head, v_dim_head, block_b=64):
    @jax.jit
    def forward(x, layers):
        y = x
        for lp, skip in zip(layers, skips):
            y = attention_layer_forward(
                y, lp, skip=skip, num_heads=num_heads,
                k_dim_head=k_dim_head, v_dim_head=v_dim_head, block_b=block_b)
        return y
    return forward


# ---------------------------------------------------------------------------
# Parameter construction (torch layout) and one-time kernel-layout preparation
# ---------------------------------------------------------------------------
def init_short_context_transformer(key, n_layers, embed_dim, feature_dim,
                                   num_heads, k_dim_head, v_dim_head):
    assert n_layers >= 2
    layer_dims = [(embed_dim, embed_dim, True)]
    prev = embed_dim
    for layer in range(1, n_layers):
        out_dim = embed_dim // 2 if layer != n_layers - 1 else feature_dim
        out_dim = max(out_dim, feature_dim)
        layer_dims.append((prev, out_dim, False))
        prev = out_dim

    q_dim = num_heads * k_dim_head
    v_dim = num_heads * v_dim_head

    def lin(k_, fan_out, fan_in):
        bound = 1.0 / (fan_in ** 0.5)
        return jax.random.uniform(k_, (fan_out, fan_in), jnp.float32,
                                  -bound, bound)

    params, skips = [], []
    for d_in, d_out, skip in layer_dims:
        assert d_in == d_out, (
            "original ShortContextTransformer is only shape-consistent when "
            "in_features == out_features")
        key, *ks = jax.random.split(key, 6)
        params.append(dict(
            wq=lin(ks[0], q_dim, d_in),            # torch layout [out, in]
            wk=lin(ks[1], q_dim, d_in),
            # TODO(synk): w_v exists in the torch module but is never used by
            # its forward (V is projected with w_k); we do not materialize it.
            wout=lin(ks[2], d_in, v_dim),          # value_dim = dim = d_in
            norm_attn_g=jnp.ones((d_out,), jnp.float32),
            norm_attn_b=jnp.zeros((d_out,), jnp.float32),
            wff=lin(ks[3], d_out, d_out),
            bff=jax.random.uniform(ks[4], (d_out,), jnp.float32,
                                   -1.0 / d_out ** 0.5, 1.0 / d_out ** 0.5),
            norm_ff_g=jnp.ones((d_out,), jnp.float32),
            norm_ff_b=jnp.zeros((d_out,), jnp.float32),
        ))
        skips.append(skip)
    return params, tuple(skips)


def prepare_params(params):
    """Transpose + bf16-cast weights ONCE (outside the jitted step)."""
    prepped = []
    for p in params:
        d_out = p["norm_attn_g"].shape[0]
        prepped.append(dict(
            wq_t=jnp.asarray(p["wq"].T, jnp.bfloat16),
            wk_t=jnp.asarray(p["wk"].T, jnp.bfloat16),
            wout_t=jnp.asarray(p["wout"].T, jnp.bfloat16),
            wff_t=jnp.asarray(p["wff"].T, jnp.bfloat16),
            bff=p["bff"].reshape(1, d_out),
            norm_attn_g=p["norm_attn_g"].reshape(1, d_out),
            norm_attn_b=p["norm_attn_b"].reshape(1, d_out),
            norm_ff_g=p["norm_ff_g"].reshape(1, d_out),
            norm_ff_b=p["norm_ff_b"].reshape(1, d_out),
        ))
    return tuple(prepped)


# ---------------------------------------------------------------------------
# Pure-JAX reference (same bf16/f32 precision choices as the kernel)
# ---------------------------------------------------------------------------
def _ln_ref(v, g, b):
    mu = jnp.mean(v, axis=-1, keepdims=True)
    c = v - mu
    var = jnp.mean(c * c, axis=-1, keepdims=True)
    return c * jax.lax.rsqrt(var + LN_EPS) * g + b


def reference_forward(x, prepped, skips, *, num_heads, k_dim_head, v_dim_head):
    H, dk, dv = num_heads, k_dim_head, v_dim_head
    y = x.astype(jnp.float32)
    for lp, skip in zip(prepped, skips):
        B, T, D = y.shape
        yb = y.astype(jnp.bfloat16)
        q = jnp.einsum('btd,dk->btk', yb, lp["wq_t"],
                       preferred_element_type=jnp.float32)
        k = jnp.einsum('btd,dk->btk', yb, lp["wk_t"],
                       preferred_element_type=jnp.float32)
        v = k  # original forward uses w_k for V
        qh = q.reshape(B, T, H, dk).astype(jnp.bfloat16)
        kh = k.reshape(B, T, H, dk).astype(jnp.bfloat16)
        vh = v.reshape(B, T, H, dv).astype(jnp.bfloat16)
        s = jnp.einsum('bihd,bjhd->bhij', qh, kh,
                       preferred_element_type=jnp.float32) / (dk ** 0.5)
        p = jax.nn.softmax(s, axis=-1)
        vals = jnp.einsum('bhij,bjhd->bihd', p.astype(jnp.bfloat16), vh,
                          preferred_element_type=jnp.float32)
        attn = jnp.einsum('btv,vd->btd',
                          vals.reshape(B, T, H * dv).astype(jnp.bfloat16),
                          lp["wout_t"], preferred_element_type=jnp.float32)
        if skip:
            attn = y + attn
        h1 = _ln_ref(attn, lp["norm_attn_g"][0], lp["norm_attn_b"][0])
        ff = jnp.einsum('btd,de->bte', h1.astype(jnp.bfloat16), lp["wff_t"],
                        preferred_element_type=jnp.float32) + lp["bff"][0]
        y = _ln_ref(h1 + ff, lp["norm_ff_g"][0], lp["norm_ff_b"][0])
    return y


if __name__ == "__main__":
    # Small config consistent with the module (production: EMBED_DIM=1024,
    # 8 heads x 64, n_layers=8).  feature_dim == embed_dim so every layer has
    # in_features == out_features, which the original module requires.
    n_layers = 3
    embed_dim = 128
    feature_dim = 128
    num_heads = 4
    k_dim_head = 32
    v_dim_head = 32
    B, T = 2, 8

    key = jax.random.PRNGKey(0)
    pkey, xkey = jax.random.split(key)

    params, skips = init_short_context_transformer(
        pkey, n_layers, embed_dim, feature_dim, num_heads, k_dim_head,
        v_dim_head)
    prepped = prepare_params(params)

    x = jax.random.normal(xkey, (B, T, embed_dim), jnp.float32)

    forward = build_forward_fn(skips, num_heads, k_dim_head, v_dim_head,
                               block_b=64)
    out = forward(x, prepped)
    jax.block_until_ready(out)

    ref = reference_forward(x, prepped, skips, num_heads=num_heads,
                            k_dim_head=k_dim_head, v_dim_head=v_dim_head)
    assert out.shape == (B, T, feature_dim)
    assert jnp.allclose(out, ref, atol=2e-2, rtol=2e-2), \
        float(jnp.max(jnp.abs(out - ref)))

    print("KERNEL_OK")
</pallas_src>

<mosaic_0001>
module attributes {stable_mosaic.version = 11 : i64} {
  func.func @attention_layer_kernel(%arg0: i32, %arg1: memref<2x8x128xf32, #tpu.memory_space<vmem>>, %arg2: memref<128x128xbf16, #tpu.memory_space<vmem>>, %arg3: memref<128x128xbf16, #tpu.memory_space<vmem>>, %arg4: memref<128x128xbf16, #tpu.memory_space<vmem>>, %arg5: memref<1x128xf32, #tpu.memory_space<vmem>>, %arg6: memref<1x128xf32, #tpu.memory_space<vmem>>, %arg7: memref<128x128xbf16, #tpu.memory_space<vmem>>, %arg8: memref<1x128xf32, #tpu.memory_space<vmem>>, %arg9: memref<1x128xf32, #tpu.memory_space<vmem>>, %arg10: memref<1x128xf32, #tpu.memory_space<vmem>>, %arg11: memref<2x8x128xf32, #tpu.memory_space<vmem>>) attributes {dimension_semantics = [#tpu.dimension_semantics<parallel>], iteration_bounds = array<i64: 1>, scalar_prefetch = 0 : i64, scratch_operands = 0 : i64, tpu.core_type = #tpu.core_type<tc>, window_params = [{transform_indices = @transform_0, window_bounds = array<i64: 2, 8, 128>}, {pipeline_mode = #tpu.pipeline_mode<synchronous>, transform_indices = @transform_1, window_bounds = array<i64: 128, 128>}, {pipeline_mode = #tpu.pipeline_mode<synchronous>, transform_indices = @transform_2, window_bounds = array<i64: 128, 128>}, {pipeline_mode = #tpu.pipeline_mode<synchronous>, transform_indices = @transform_3, window_bounds = array<i64: 128, 128>}, {pipeline_mode = #tpu.pipeline_mode<synchronous>, transform_indices = @transform_4, window_bounds = array<i64: 1, 128>}, {pipeline_mode = #tpu.pipeline_mode<synchronous>, transform_indices = @transform_5, window_bounds = array<i64: 1, 128>}, {pipeline_mode = #tpu.pipeline_mode<synchronous>, transform_indices = @transform_6, window_bounds = array<i64: 128, 128>}, {pipeline_mode = #tpu.pipeline_mode<synchronous>, transform_indices = @transform_7, window_bounds = array<i64: 1, 128>}, {pipeline_mode = #tpu.pipeline_mode<synchronous>, transform_indices = @transform_8, window_bounds = array<i64: 1, 128>}, {pipeline_mode = #tpu.pipeline_mode<synchronous>, transform_indices = @transform_9, window_bounds = array<i64: 1, 128>}, {transform_indices = @transform_10, window_bounds = array<i64: 2, 8, 128>}]} {
    %c0 = arith.constant 0 : index
    %c0_0 = arith.constant 0 : index
    %c0_1 = arith.constant 0 : index
    %0 = vector.load %arg1[%c0, %c0_0, %c0_1] : memref<2x8x128xf32, #tpu.memory_space<vmem>>, vector<2x8x128xf32>
    %1 = vector.shape_cast %0 : vector<2x8x128xf32> to vector<16x128xf32>
    %2 = arith.truncf %1 : vector<16x128xf32> to vector<16x128xbf16>
    %c0_2 = arith.constant 0 : index
    %c0_3 = arith.constant 0 : index
    %3 = vector.load %arg2[%c0_2, %c0_3] : memref<128x128xbf16, #tpu.memory_space<vmem>>, vector<128x128xbf16>
    %cst = arith.constant dense<0.000000e+00> : vector<16x128xf32>
    %4 = tpu.matmul %2, %3, %cst {dimension_numbers = #tpu.dot_dimension_numbers<[1], [0], [0], [1], [0, 0, 1, 1], [], []>} : vector<16x128xbf16>, vector<128x128xbf16>, vector<16x128xf32> -> vector<16x128xf32>
    %c0_4 = arith.constant 0 : index
    %c0_5 = arith.constant 0 : index
    %5 = vector.load %arg3[%c0_4, %c0_5] : memref<128x128xbf16, #tpu.memory_space<vmem>>, vector<128x128xbf16>
    %cst_6 = arith.constant dense<0.000000e+00> : vector<16x128xf32>
    %6 = tpu.matmul %2, %5, %cst_6 {dimension_numbers = #tpu.dot_dimension_numbers<[1], [0], [0], [1], [0, 0, 1, 1], [], []>} : vector<16x128xbf16>, vector<128x128xbf16>, vector<16x128xf32> -> vector<16x128xf32>
    %7 = arith.truncf %4 : vector<16x128xf32> to vector<16x128xbf16>
    %8 = vector.shape_cast %7 : vector<16x128xbf16> to vector<2x8x128xbf16>
    %9 = arith.truncf %6 : vector<16x128xf32> to vector<16x128xbf16>
    %10 = vector.shape_cast %9 : vector<16x128xbf16> to vector<2x8x128xbf16>
    %c0_7 = arith.constant 0 : index
    %c0_8 = arith.constant 0 : index
    %11 = vector.load %arg4[%c0_7, %c0_8] : memref<128x128xbf16, #tpu.memory_space<vmem>>, vector<128x128xbf16>
    %cst_9 = arith.constant 0.000000e+00 : f32
    %12 = vector.broadcast %cst_9 : f32 to vector<16x128xf32>
    %13 = vector.extract_strided_slice %8 {offsets = [0, 0, 0], sizes = [2, 8, 32], strides = [1, 1, 1]} : vector<2x8x128xbf16> to vector<2x8x32xbf16>
    %14 = vector.extract_strided_slice %10 {offsets = [0, 0, 0], sizes = [2, 8, 32], strides = [1, 1, 1]} : vector<2x8x128xbf16> to vector<2x8x32xbf16>
    %15 = vector.extract_strided_slice %10 {offsets = [0, 0, 0], sizes = [2, 8, 32], strides = [1, 1, 1]} : vector<2x8x128xbf16> to vector<2x8x32xbf16>
    "tpu.trace_start"() <{level = 10 : i32, message = "btd,bsd->bts"}> : () -> ()
    %cst_10 = arith.constant dense<0.000000e+00> : vector<2x8x8xf32>
    %16 = tpu.matmul %13, %14, %cst_10 {dimension_numbers = #tpu.dot_dimension_numbers<[2], [2], [1], [1], [0, 0, 0, 1, 1, 1], [0], [0]>} : vector<2x8x32xbf16>, vector<2x8x32xbf16>, vector<2x8x8xf32> -> vector<2x8x8xf32>
    "tpu.trace_stop"() : () -> ()
    %cst_11 = arith.constant 0.176776692 : f32
    %17 = vector.broadcast %cst_11 : f32 to vector<2x8x8xf32>
    %18 = arith.mulf %16, %17 : vector<2x8x8xf32>
    %cst_12 = arith.constant dense<0xFF800000> : vector<2x8xf32>
    %19 = vector.multi_reduction <maximumf>, %18, %cst_12 [2] : vector<2x8x8xf32> to vector<2x8xf32>
    %20 = vector.shape_cast %19 : vector<2x8xf32> to vector<2x8x1xf32>
    %21 = vector.broadcast %20 : vector<2x8x1xf32> to vector<2x8x8xf32>
    %22 = arith.subf %18, %21 : vector<2x8x8xf32>
    %23 = math.exp %22 : vector<2x8x8xf32>
    %cst_13 = arith.constant dense<0.000000e+00> : vector<2x8xf32>
    %24 = vector.multi_reduction <add>, %23, %cst_13 [2] : vector<2x8x8xf32> to vector<2x8xf32>
    %25 = vector.shape_cast %24 : vector<2x8xf32> to vector<2x8x1xf32>
    %26 = vector.broadcast %25 : vector<2x8x1xf32> to vector<2x8x8xf32>
    %27 = arith.divf %23, %26 : vector<2x8x8xf32>
    %28 = arith.truncf %27 : vector<2x8x8xf32> to vector<2x8x8xbf16>
    "tpu.trace_start"() <{level = 10 : i32, message = "bts,bsd->btd"}> : () -> ()
    %cst_14 = arith.constant dense<0.000000e+00> : vector<2x8x32xf32>
    %29 = tpu.matmul %28, %15, %cst_14 {dimension_numbers = #tpu.dot_dimension_numbers<[2], [1], [1], [2], [0, 0, 0, 1, 1, 2], [0], [0]>} : vector<2x8x8xbf16>, vector<2x8x32xbf16>, vector<2x8x32xf32> -> vector<2x8x32xf32>
    "tpu.trace_stop"() : () -> ()
    %30 = vector.shape_cast %29 : vector<2x8x32xf32> to vector<16x32xf32>
    %31 = arith.truncf %30 : vector<16x32xf32> to vector<16x32xbf16>
    %32 = vector.extract_strided_slice %11 {offsets = [0, 0], sizes = [32, 128], strides = [1, 1]} : vector<128x128xbf16> to vector<32x128xbf16>
    %cst_15 = arith.constant dense<0.000000e+00> : vector<16x128xf32>
    %33 = tpu.matmul %31, %32, %cst_15 {dimension_numbers = #tpu.dot_dimension_numbers<[1], [0], [0], [1], [0, 0, 1, 1], [], []>} : vector<16x32xbf16>, vector<32x128xbf16>, vector<16x128xf32> -> vector<16x128xf32>
    %34 = arith.addf %12, %33 : vector<16x128xf32>
    %35 = vector.extract_strided_slice %8 {offsets = [0, 0, 32], sizes = [2, 8, 32], strides = [1, 1, 1]} : vector<2x8x128xbf16> to vector<2x8x32xbf16>
    %36 = vector.extract_strided_slice %10 {offsets = [0, 0, 32], sizes = [2, 8, 32], strides = [1, 1, 1]} : vector<2x8x128xbf16> to vector<2x8x32xbf16>
    %37 = vector.extract_strided_slice %10 {offsets = [0, 0, 32], sizes = [2, 8, 32], strides = [1, 1, 1]} : vector<2x8x128xbf16> to vector<2x8x32xbf16>
    "tpu.trace_start"() <{level = 10 : i32, message = "btd,bsd->bts"}> : () -> ()
    %cst_16 = arith.constant dense<0.000000e+00> : vector<2x8x8xf32>
    %38 = tpu.matmul %35, %36, %cst_16 {dimension_numbers = #tpu.dot_dimension_numbers<[2], [2], [1], [1], [0, 0, 0, 1, 1, 1], [0], [0]>} : vector<2x8x32xbf16>, vector<2x8x32xbf16>, vector<2x8x8xf32> -> vector<2x8x8xf32>
    "tpu.trace_stop"() : () -> ()
    %cst_17 = arith.constant 0.176776692 : f32
    %39 = vector.broadcast %cst_17 : f32 to vector<2x8x8xf32>
    %40 = arith.mulf %38, %39 : vector<2x8x8xf32>
    %cst_18 = arith.constant dense<0xFF800000> : vector<2x8xf32>
    %41 = vector.multi_reduction <maximumf>, %40, %cst_18 [2] : vector<2x8x8xf32> to vector<2x8xf32>
    %42 = vector.shape_cast %41 : vector<2x8xf32> to vector<2x8x1xf32>
    %43 = vector.broadcast %42 : vector<2x8x1xf32> to vector<2x8x8xf32>
    %44 = arith.subf %40, %43 : vector<2x8x8xf32>
    %45 = math.exp %44 : vector<2x8x8xf32>
    %cst_19 = arith.constant dense<0.000000e+00> : vector<2x8xf32>
    %46 = vector.multi_reduction <add>, %45, %cst_19 [2] : vector<2x8x8xf32> to vector<2x8xf32>
    %47 = vector.shape_cast %46 : vector<2x8xf32> to vector<2x8x1xf32>
    %48 = vector.broadcast %47 : vector<2x8x1xf32> to vector<2x8x8xf32>
    %49 = arith.divf %45, %48 : vector<2x8x8xf32>
    %50 = arith.truncf %49 : vector<2x8x8xf32> to vector<2x8x8xbf16>
    "tpu.trace_start"() <{level = 10 : i32, message = "bts,bsd->btd"}> : () -> ()
    %cst_20 = arith.constant dense<0.000000e+00> : vector<2x8x32xf32>
    %51 = tpu.matmul %50, %37, %cst_20 {dimension_numbers = #tpu.dot_dimension_numbers<[2], [1], [1], [2], [0, 0, 0, 1, 1, 2], [0], [0]>} : vector<2x8x8xbf16>, vector<2x8x32xbf16>, vector<2x8x32xf32> -> vector<2x8x32xf32>
    "tpu.trace_stop"() : () -> ()
    %52 = vector.shape_cast %51 : vector<2x8x32xf32> to vector<16x32xf32>
    %53 = arith.truncf %52 : vector<16x32xf32> to vector<16x32xbf16>
    %54 = vector.extract_strided_slice %11 {offsets = [32, 0], sizes = [32, 128], strides = [1, 1]} : vector<128x128xbf16> to vector<32x128xbf16>
    %cst_21 = arith.constant dense<0.000000e+00> : vector<16x128xf32>
    %55 = tpu.matmul %53, %54, %cst_21 {dimension_numbers = #tpu.dot_dimension_numbers<[1], [0], [0], [1], [0, 0, 1, 1], [], []>} : vector<16x32xbf16>, vector<32x128xbf16>, vector<16x128xf32> -> vector<16x128xf32>
    %56 = arith.addf %34, %55 : vector<16x128xf32>
    %57 = vector.extract_strided_slice %8 {offsets = [0, 0, 64], sizes = [2, 8, 32], strides = [1, 1, 1]} : vector<2x8x128xbf16> to vector<2x8x32xbf16>
    %58 = vector.extract_strided_slice %10 {offsets = [0, 0, 64], sizes = [2, 8, 32], strides = [1, 1, 1]} : vector<2x8x128xbf16> to vector<2x8x32xbf16>
    %59 = vector.extract_strided_slice %10 {offsets = [0, 0, 64], sizes = [2, 8, 32], strides = [1, 1, 1]} : vector<2x8x128xbf16> to vector<2x8x32xbf16>
    "tpu.trace_start"() <{level = 10 : i32, message = "btd,bsd->bts"}> : () -> ()
    %cst_22 = arith.constant dense<0.000000e+00> : vector<2x8x8xf32>
    %60 = tpu.matmul %57, %58, %cst_22 {dimension_numbers = #tpu.dot_dimension_numbers<[2], [2], [1], [1], [0, 0, 0, 1, 1, 1], [0], [0]>} : vector<2x8x32xbf16>, vector<2x8x32xbf16>, vector<2x8x8xf32> -> vector<2x8x8xf32>
    "tpu.trace_stop"() : () -> ()
    %cst_23 = arith.constant 0.176776692 : f32
    %61 = vector.broadcast %cst_23 : f32 to vector<2x8x8xf32>
    %62 = arith.mulf %60, %61 : vector<2x8x8xf32>
    %cst_24 = arith.constant dense<0xFF800000> : vector<2x8xf32>
    %63 = vector.multi_reduction <maximumf>, %62, %cst_24 [2] : vector<2x8x8xf32> to vector<2x8xf32>
    %64 = vector.shape_cast %63 : vector<2x8xf32> to vector<2x8x1xf32>
    %65 = vector.broadcast %64 : vector<2x8x1xf32> to vector<2x8x8xf32>
    %66 = arith.subf %62, %65 : vector<2x8x8xf32>
    %67 = math.exp %66 : vector<2x8x8xf32>
    %cst_25 = arith.constant dense<0.000000e+00> : vector<2x8xf32>
    %68 = vector.multi_reduction <add>, %67, %cst_25 [2] : vector<2x8x8xf32> to vector<2x8xf32>
    %69 = vector.shape_cast %68 : vector<2x8xf32> to vector<2x8x1xf32>
    %70 = vector.broadcast %69 : vector<2x8x1xf32> to vector<2x8x8xf32>
    %71 = arith.divf %67, %70 : vector<2x8x8xf32>
    %72 = arith.truncf %71 : vector<2x8x8xf32> to vector<2x8x8xbf16>
    "tpu.trace_start"() <{level = 10 : i32, message = "bts,bsd->btd"}> : () -> ()
    %cst_26 = arith.constant dense<0.000000e+00> : vector<2x8x32xf32>
    %73 = tpu.matmul %72, %59, %cst_26 {dimension_numbers = #tpu.dot_dimension_numbers<[2], [1], [1], [2], [0, 0, 0, 1, 1, 2], [0], [0]>} : vector<2x8x8xbf16>, vector<2x8x32xbf16>, vector<2x8x32xf32> -> vector<2x8x32xf32>
    "tpu.trace_stop"() : () -> ()
    %74 = vector.shape_cast %73 : vector<2x8x32xf32> to vector<16x32xf32>
    %75 = arith.truncf %74 : vector<16x32xf32> to vector<16x32xbf16>
    %76 = vector.extract_strided_slice %11 {offsets = [64, 0], sizes = [32, 128], strides = [1, 1]} : vector<128x128xbf16> to vector<32x128xbf16>
    %cst_27 = arith.constant dense<0.000000e+00> : vector<16x128xf32>
    %77 = tpu.matmul %75, %76, %cst_27 {dimension_numbers = #tpu.dot_dimension_numbers<[1], [0], [0], [1], [0, 0, 1, 1], [], []>} : vector<16x32xbf16>, vector<32x128xbf16>, vector<16x128xf32> -> vector<16x128xf32>
    %78 = arith.addf %56, %77 : vector<16x128xf32>
    %79 = vector.extract_strided_slice %8 {offsets = [0, 0, 96], sizes = [2, 8, 32], strides = [1, 1, 1]} : vector<2x8x128xbf16> to vector<2x8x32xbf16>
    %80 = vector.extract_strided_slice %10 {offsets = [0, 0, 96], sizes = [2, 8, 32], strides = [1, 1, 1]} : vector<2x8x128xbf16> to vector<2x8x32xbf16>
    %81 = vector.extract_strided_slice %10 {offsets = [0, 0, 96], sizes = [2, 8, 32], strides = [1, 1, 1]} : vector<2x8x128xbf16> to vector<2x8x32xbf16>
    "tpu.trace_start"() <{level = 10 : i32, message = "btd,bsd->bts"}> : () -> ()
    %cst_28 = arith.constant dense<0.000000e+00> : vector<2x8x8xf32>
    %82 = tpu.matmul %79, %80, %cst_28 {dimension_numbers = #tpu.dot_dimension_numbers<[2], [2], [1], [1], [0, 0, 0, 1, 1, 1], [0], [0]>} : vector<2x8x32xbf16>, vector<2x8x32xbf16>, vector<2x8x8xf32> -> vector<2x8x8xf32>
    "tpu.trace_stop"() : () -> ()
    %cst_29 = arith.constant 0.176776692 : f32
    %83 = vector.broadcast %cst_29 : f32 to vector<2x8x8xf32>
    %84 = arith.mulf %82, %83 : vector<2x8x8xf32>
    %cst_30 = arith.constant dense<0xFF800000> : vector<2x8xf32>
    %85 = vector.multi_reduction <maximumf>, %84, %cst_30 [2] : vector<2x8x8xf32> to vector<2x8xf32>
    %86 = vector.shape_cast %85 : vector<2x8xf32> to vector<2x8x1xf32>
    %87 = vector.broadcast %86 : vector<2x8x1xf32> to vector<2x8x8xf32>
    %88 = arith.subf %84, %87 : vector<2x8x8xf32>
    %89 = math.exp %88 : vector<2x8x8xf32>
    %cst_31 = arith.constant dense<0.000000e+00> : vector<2x8xf32>
    %90 = vector.multi_reduction <add>, %89, %cst_31 [2] : vector<2x8x8xf32> to vector<2x8xf32>
    %91 = vector.shape_cast %90 : vector<2x8xf32> to vector<2x8x1xf32>
    %92 = vector.broadcast %91 : vector<2x8x1xf32> to vector<2x8x8xf32>
    %93 = arith.divf %89, %92 : vector<2x8x8xf32>
    %94 = arith.truncf %93 : vector<2x8x8xf32> to vector<2x8x8xbf16>
    "tpu.trace_start"() <{level = 10 : i32, message = "bts,bsd->btd"}> : () -> ()
    %cst_32 = arith.constant dense<0.000000e+00> : vector<2x8x32xf32>
    %95 = tpu.matmul %94, %81, %cst_32 {dimension_numbers = #tpu.dot_dimension_numbers<[2], [1], [1], [2], [0, 0, 0, 1, 1, 2], [0], [0]>} : vector<2x8x8xbf16>, vector<2x8x32xbf16>, vector<2x8x32xf32> -> vector<2x8x32xf32>
    "tpu.trace_stop"() : () -> ()
    %96 = vector.shape_cast %95 : vector<2x8x32xf32> to vector<16x32xf32>
    %97 = arith.truncf %96 : vector<16x32xf32> to vector<16x32xbf16>
    %98 = vector.extract_strided_slice %11 {offsets = [96, 0], sizes = [32, 128], strides = [1, 1]} : vector<128x128xbf16> to vector<32x128xbf16>
    %cst_33 = arith.constant dense<0.000000e+00> : vector<16x128xf32>
    %99 = tpu.matmul %97, %98, %cst_33 {dimension_numbers = #tpu.dot_dimension_numbers<[1], [0], [0], [1], [0, 0, 1, 1], [], []>} : vector<16x32xbf16>, vector<32x128xbf16>, vector<16x128xf32> -> vector<16x128xf32>
    %100 = arith.addf %78, %99 : vector<16x128xf32>
    %c0_34 = arith.constant 0 : index
    %c0_35 = arith.constant 0 : index
    %101 = vector.load %arg5[%c0_34, %c0_35] : memref<1x128xf32, #tpu.memory_space<vmem>>, vector<1x128xf32>
    %c0_36 = arith.constant 0 : index
    %c0_37 = arith.constant 0 : index
    %102 = vector.load %arg6[%c0_36, %c0_37] : memref<1x128xf32, #tpu.memory_space<vmem>>, vector<1x128xf32>
    %cst_38 = arith.constant dense<0.000000e+00> : vector<16xf32>
    %103 = vector.multi_reduction <add>, %100, %cst_38 [1] : vector<16x128xf32> to vector<16xf32>
    %104 = vector.shape_cast %103 : vector<16xf32> to vector<16x1xf32>
    %cst_39 = arith.constant 1.280000e+02 : f32
    %105 = vector.broadcast %cst_39 : f32 to vector<16x1xf32>
    %106 = arith.divf %104, %105 : vector<16x1xf32>
    %107 = vector.broadcast %106 : vector<16x1xf32> to vector<16x128xf32>
    %108 = arith.subf %100, %107 : vector<16x128xf32>
    %109 = arith.mulf %108, %108 : vector<16x128xf32>
    %cst_40 = arith.constant dense<0.000000e+00> : vector<16xf32>
    %110 = vector.multi_reduction <add>, %109, %cst_40 [1] : vector<16x128xf32> to vector<16xf32>
    %111 = vector.shape_cast %110 : vector<16xf32> to vector<16x1xf32>
    %cst_41 = arith.constant 1.280000e+02 : f32
    %112 = vector.broadcast %cst_41 : f32 to vector<16x1xf32>
    %113 = arith.divf %111, %112 : vector<16x1xf32>
    %cst_42 = arith.constant 9.99999974E-6 : f32
    %114 = vector.broadcast %cst_42 : f32 to vector<16x1xf32>
    %115 = arith.addf %113, %114 : vector<16x1xf32>
    %116 = math.rsqrt %115 : vector<16x1xf32>
    %117 = vector.broadcast %116 : vector<16x1xf32> to vector<16x128xf32>
    %118 = arith.mulf %108, %117 : vector<16x128xf32>
    %119 = vector.broadcast %101 : vector<1x128xf32> to vector<16x128xf32>
    %120 = arith.mulf %118, %119 : vector<16x128xf32>
    %121 = vector.broadcast %102 : vector<1x128xf32> to vector<16x128xf32>
    %122 = arith.addf %120, %121 : vector<16x128xf32>
    %123 = arith.truncf %122 : vector<16x128xf32> to vector<16x128xbf16>
    %c0_43 = arith.constant 0 : index
    %c0_44 = arith.constant 0 : index
    %124 = vector.load %arg7[%c0_43, %c0_44] : memref<128x128xbf16, #tpu.memory_space<vmem>>, vector<128x128xbf16>
    %cst_45 = arith.constant dense<0.000000e+00> : vector<16x128xf32>
    %125 = tpu.matmul %123, %124, %cst_45 {dimension_numbers = #tpu.dot_dimension_numbers<[1], [0], [0], [1], [0, 0, 1, 1], [], []>} : vector<16x128xbf16>, vector<128x128xbf16>, vector<16x128xf32> -> vector<16x128xf32>
    %c0_46 = arith.constant 0 : index
    %c0_47 = arith.constant 0 : index
    %126 = vector.load %arg8[%c0_46, %c0_47] : memref<1x128xf32, #tpu.memory_space<vmem>>, vector<1x128xf32>
    %127 = vector.broadcast %126 : vector<1x128xf32> to vector<16x128xf32>
    %128 = arith.addf %125, %127 : vector<16x128xf32>
    %129 = arith.addf %122, %128 : vector<16x128xf32>
    %c0_48 = arith.constant 0 : index
    %c0_49 = arith.constant 0 : index
    %130 = vector.load %arg9[%c0_48, %c0_49] : memref<1x128xf32, #tpu.memory_space<vmem>>, vector<1x128xf32>
    %c0_50 = arith.constant 0 : index
    %c0_51 = arith.constant 0 : index
    %131 = vector.load %arg10[%c0_50, %c0_51] : memref<1x128xf32, #tpu.memory_space<vmem>>, vector<1x128xf32>
    %cst_52 = arith.constant dense<0.000000e+00> : vector<16xf32>
    %132 = vector.multi_reduction <add>, %129, %cst_52 [1] : vector<16x128xf32> to vector<16xf32>
    %133 = vector.shape_cast %132 : vector<16xf32> to vector<16x1xf32>
    %cst_53 = arith.constant 1.280000e+02 : f32
    %134 = vector.broadcast %cst_53 : f32 to vector<16x1xf32>
    %135 = arith.divf %133, %134 : vector<16x1xf32>
    %136 = vector.broadcast %135 : vector<16x1xf32> to vector<16x128xf32>
    %137 = arith.subf %129, %136 : vector<16x128xf32>
    %138 = arith.mulf %137, %137 : vector<16x128xf32>
    %cst_54 = arith.constant dense<0.000000e+00> : vector<16xf32>
    %139 = vector.multi_reduction <add>, %138, %cst_54 [1] : vector<16x128xf32> to vector<16xf32>
    %140 = vector.shape_cast %139 : vector<16xf32> to vector<16x1xf32>
    %cst_55 = arith.constant 1.280000e+02 : f32
    %141 = vector.broadcast %cst_55 : f32 to vector<16x1xf32>
    %142 = arith.divf %140, %141 : vector<16x1xf32>
    %cst_56 = arith.constant 9.99999974E-6 : f32
    %143 = vector.broadcast %cst_56 : f32 to vector<16x1xf32>
    %144 = arith.addf %142, %143 : vector<16x1xf32>
    %145 = math.rsqrt %144 : vector<16x1xf32>
    %146 = vector.broadcast %145 : vector<16x1xf32> to vector<16x128xf32>
    %147 = arith.mulf %137, %146 : vector<16x128xf32>
    %148 = vector.broadcast %130 : vector<1x128xf32> to vector<16x128xf32>
    %149 = arith.mulf %147, %148 : vector<16x128xf32>
    %150 = vector.broadcast %131 : vector<1x128xf32> to vector<16x128xf32>
    %151 = arith.addf %149, %150 : vector<16x128xf32>
    %152 = vector.shape_cast %151 : vector<16x128xf32> to vector<2x8x128xf32>
    %c0_57 = arith.constant 0 : index
    %c0_58 = arith.constant 0 : index
    %c0_59 = arith.constant 0 : index
    %153 = vector.load %arg11[%c0_57, %c0_58, %c0_59] : memref<2x8x128xf32, #tpu.memory_space<vmem>>, vector<2x8x128xf32>
    tpu.vector_store %arg11[%c0_57, %c0_58, %c0_59], %152 {strides = array<i32>} : memref<2x8x128xf32, #tpu.memory_space<vmem>>, vector<2x8x128xf32>,
    return
  }
  func.func @transform_0(%arg0: i32) -> (i32, i32, i32) {
    %c0_i32 = arith.constant 0 : i32
    %c0_i32_0 = arith.constant 0 : i32
    %c0_i32_1 = arith.constant 0 : i32
    return %arg0, %c0_i32, %c0_i32_0 : i32, i32, i32
  }
  func.func @transform_1(%arg0: i32) -> (i32, i32) {
    %c0_i32 = arith.constant 0 : i32
    %c0_i32_0 = arith.constant 0 : i32
    %c0_i32_1 = arith.constant 0 : i32
    return %c0_i32, %c0_i32_0 : i32, i32
  }
  func.func @transform_2(%arg0: i32) -> (i32, i32) {
    %c0_i32 = arith.constant 0 : i32
    %c0_i32_0 = arith.constant 0 : i32
    %c0_i32_1 = arith.constant 0 : i32
    return %c0_i32, %c0_i32_0 : i32, i32
  }
  func.func @transform_3(%arg0: i32) -> (i32, i32) {
    %c0_i32 = arith.constant 0 : i32
    %c0_i32_0 = arith.constant 0 : i32
    %c0_i32_1 = arith.constant 0 : i32
    return %c0_i32, %c0_i32_0 : i32, i32
  }
  func.func @transform_4(%arg0: i32) -> (i32, i32) {
    %c0_i32 = arith.constant 0 : i32
    %c0_i32_0 = arith.constant 0 : i32
    %c0_i32_1 = arith.constant 0 : i32
    return %c0_i32, %c0_i32_0 : i32, i32
  }
  func.func @transform_5(%arg0: i32) -> (i32, i32) {
    %c0_i32 = arith.constant 0 : i32
    %c0_i32_0 = arith.constant 0 : i32
    %c0_i32_1 = arith.constant 0 : i32
    return %c0_i32, %c0_i32_0 : i32, i32
  }
  func.func @transform_6(%arg0: i32) -> (i32, i32) {
    %c0_i32 = arith.constant 0 : i32
    %c0_i32_0 = arith.constant 0 : i32
    %c0_i32_1 = arith.constant 0 : i32
    return %c0_i32, %c0_i32_0 : i32, i32
  }
  func.func @transform_7(%arg0: i32) -> (i32, i32) {
    %c0_i32 = arith.constant 0 : i32
    %c0_i32_0 = arith.constant 0 : i32
    %c0_i32_1 = arith.constant 0 : i32
    return %c0_i32, %c0_i32_0 : i32, i32
  }
  func.func @transform_8(%arg0: i32) -> (i32, i32) {
    %c0_i32 = arith.constant 0 : i32
    %c0_i32_0 = arith.constant 0 : i32
    %c0_i32_1 = arith.constant 0 : i32
    return %c0_i32, %c0_i32_0 : i32, i32
  }
  func.func @transform_9(%arg0: i32) -> (i32, i32) {
    %c0_i32 = arith.constant 0 : i32
    %c0_i32_0 = arith.constant 0 : i32
    %c0_i32_1 = arith.constant 0 : i32
    return %c0_i32, %c0_i32_0 : i32, i32
  }
  func.func @transform_10(%arg0: i32) -> (i32, i32, i32) {
    %c0_i32 = arith.constant 0 : i32
    %c0_i32_0 = arith.constant 0 : i32
    %c0_i32_1 = arith.constant 0 : i32
    return %arg0, %c0_i32, %c0_i32_0 : i32, i32, i32
  }
}

module attributes {stable_mosaic.version = 11 : i64} {
  func.func @attention_layer_kernel(%arg0: i32, %arg1: memref<2x8x128xf32, #tpu.memory_space<vmem>>, %arg2: memref<128x128xbf16, #tpu.memory_space<vmem>>, %arg3: memref<128x128xbf16, #tpu.memory_space<vmem>>, %arg4: memref<128x128xbf16, #tpu.memory_space<vmem>>, %arg5: memref<1x128xf32, #tpu.memory_space<vmem>>, %arg6: memref<1x128xf32, #tpu.memory_space<vmem>>, %arg7: memref<128x128xbf16, #tpu.memory_space<vmem>>, %arg8: memref<1x128xf32, #tpu.memory_space<vmem>>, %arg9: memref<1x128xf32, #tpu.memory_space<vmem>>, %arg10: memref<1x128xf32, #tpu.memory_space<vmem>>, %arg11: memref<2x8x128xf32, #tpu.memory_space<vmem>>) attributes {dimension_semantics = [#tpu.dimension_semantics<parallel>], iteration_bounds = array<i64: 1>, scalar_prefetch = 0 : i64, scratch_operands = 0 : i64, tpu.core_type = #tpu.core_type<tc>, window_params = [{transform_indices = @transform_0, window_bounds = array<i64: 2, 8, 128>}, {pipeline_mode = #tpu.pipeline_mode<synchronous>, transform_indices = @transform_1, window_bounds = array<i64: 128, 128>}, {pipeline_mode = #tpu.pipeline_mode<synchronous>, transform_indices = @transform_2, window_bounds = array<i64: 128, 128>}, {pipeline_mode = #tpu.pipeline_mode<synchronous>, transform_indices = @transform_3, window_bounds = array<i64: 128, 128>}, {pipeline_mode = #tpu.pipeline_mode<synchronous>, transform_indices = @transform_4, window_bounds = array<i64: 1, 128>}, {pipeline_mode = #tpu.pipeline_mode<synchronous>, transform_indices = @transform_5, window_bounds = array<i64: 1, 128>}, {pipeline_mode = #tpu.pipeline_mode<synchronous>, transform_indices = @transform_6, window_bounds = array<i64: 128, 128>}, {pipeline_mode = #tpu.pipeline_mode<synchronous>, transform_indices = @transform_7, window_bounds = array<i64: 1, 128>}, {pipeline_mode = #tpu.pipeline_mode<synchronous>, transform_indices = @transform_8, window_bounds = array<i64: 1, 128>}, {pipeline_mode = #tpu.pipeline_mode<synchronous>, transform_indices = @transform_9, window_bounds = array<i64: 1, 128>}, {transform_indices = @transform_10, window_bounds = array<i64: 2, 8, 128>}]} {
    %c0 = arith.constant 0 : index
    %c0_0 = arith.constant 0 : index
    %c0_1 = arith.constant 0 : index
    %0 = vector.load %arg1[%c0, %c0_0, %c0_1] : memref<2x8x128xf32, #tpu.memory_space<vmem>>, vector<2x8x128xf32>
    %1 = vector.shape_cast %0 : vector<2x8x128xf32> to vector<16x128xf32>
    %2 = arith.truncf %1 : vector<16x128xf32> to vector<16x128xbf16>
    %c0_2 = arith.constant 0 : index
    %c0_3 = arith.constant 0 : index
    %3 = vector.load %arg2[%c0_2, %c0_3] : memref<128x128xbf16, #tpu.memory_space<vmem>>, vector<128x128xbf16>
    %cst = arith.constant dense<0.000000e+00> : vector<16x128xf32>
    %4 = tpu.matmul %2, %3, %cst {dimension_numbers = #tpu.dot_dimension_numbers<[1], [0], [0], [1], [0, 0, 1, 1], [], []>} : vector<16x128xbf16>, vector<128x128xbf16>, vector<16x128xf32> -> vector<16x128xf32>
    %c0_4 = arith.constant 0 : index
    %c0_5 = arith.constant 0 : index
    %5 = vector.load %arg3[%c0_4, %c0_5] : memref<128x128xbf16, #tpu.memory_space<vmem>>, vector<128x128xbf16>
    %cst_6 = arith.constant dense<0.000000e+00> : vector<16x128xf32>
    %6 = tpu.matmul %2, %5, %cst_6 {dimension_numbers = #tpu.dot_dimension_numbers<[1], [0], [0], [1], [0, 0, 1, 1], [], []>} : vector<16x128xbf16>, vector<128x128xbf16>, vector<16x128xf32> -> vector<16x128xf32>
    %7 = arith.truncf %4 : vector<16x128xf32> to vector<16x128xbf16>
    %8 = vector.shape_cast %7 : vector<16x128xbf16> to vector<2x8x128xbf16>
    %9 = arith.truncf %6 : vector<16x128xf32> to vector<16x128xbf16>
    %10 = vector.shape_cast %9 : vector<16x128xbf16> to vector<2x8x128xbf16>
    %c0_7 = arith.constant 0 : index
    %c0_8 = arith.constant 0 : index
    %11 = vector.load %arg4[%c0_7, %c0_8] : memref<128x128xbf16, #tpu.memory_space<vmem>>, vector<128x128xbf16>
    %cst_9 = arith.constant 0.000000e+00 : f32
    %12 = vector.broadcast %cst_9 : f32 to vector<16x128xf32>
    %13 = vector.extract_strided_slice %8 {offsets = [0, 0, 0], sizes = [2, 8, 32], strides = [1, 1, 1]} : vector<2x8x128xbf16> to vector<2x8x32xbf16>
    %14 = vector.extract_strided_slice %10 {offsets = [0, 0, 0], sizes = [2, 8, 32], strides = [1, 1, 1]} : vector<2x8x128xbf16> to vector<2x8x32xbf16>
    %15 = vector.extract_strided_slice %10 {offsets = [0, 0, 0], sizes = [2, 8, 32], strides = [1, 1, 1]} : vector<2x8x128xbf16> to vector<2x8x32xbf16>
    "tpu.trace_start"() <{level = 10 : i32, message = "btd,bsd->bts"}> : () -> ()
    %cst_10 = arith.constant dense<0.000000e+00> : vector<2x8x8xf32>
    %16 = tpu.matmul %13, %14, %cst_10 {dimension_numbers = #tpu.dot_dimension_numbers<[2], [2], [1], [1], [0, 0, 0, 1, 1, 1], [0], [0]>} : vector<2x8x32xbf16>, vector<2x8x32xbf16>, vector<2x8x8xf32> -> vector<2x8x8xf32>
    "tpu.trace_stop"() : () -> ()
    %cst_11 = arith.constant 0.176776692 : f32
    %17 = vector.broadcast %cst_11 : f32 to vector<2x8x8xf32>
    %18 = arith.mulf %16, %17 : vector<2x8x8xf32>
    %cst_12 = arith.constant dense<0xFF800000> : vector<2x8xf32>
    %19 = vector.multi_reduction <maximumf>, %18, %cst_12 [2] : vector<2x8x8xf32> to vector<2x8xf32>
    %20 = vector.shape_cast %19 : vector<2x8xf32> to vector<2x8x1xf32>
    %21 = vector.broadcast %20 : vector<2x8x1xf32> to vector<2x8x8xf32>
    %22 = arith.subf %18, %21 : vector<2x8x8xf32>
    %23 = math.exp %22 : vector<2x8x8xf32>
    %cst_13 = arith.constant dense<0.000000e+00> : vector<2x8xf32>
    %24 = vector.multi_reduction <add>, %23, %cst_13 [2] : vector<2x8x8xf32> to vector<2x8xf32>
    %25 = vector.shape_cast %24 : vector<2x8xf32> to vector<2x8x1xf32>
    %26 = vector.broadcast %25 : vector<2x8x1xf32> to vector<2x8x8xf32>
    %27 = arith.divf %23, %26 : vector<2x8x8xf32>
    %28 = arith.truncf %27 : vector<2x8x8xf32> to vector<2x8x8xbf16>
    "tpu.trace_start"() <{level = 10 : i32, message = "bts,bsd->btd"}> : () -> ()
    %cst_14 = arith.constant dense<0.000000e+00> : vector<2x8x32xf32>
    %29 = tpu.matmul %28, %15, %cst_14 {dimension_numbers = #tpu.dot_dimension_numbers<[2], [1], [1], [2], [0, 0, 0, 1, 1, 2], [0], [0]>} : vector<2x8x8xbf16>, vector<2x8x32xbf16>, vector<2x8x32xf32> -> vector<2x8x32xf32>
    "tpu.trace_stop"() : () -> ()
    %30 = vector.shape_cast %29 : vector<2x8x32xf32> to vector<16x32xf32>
    %31 = arith.truncf %30 : vector<16x32xf32> to vector<16x32xbf16>
    %32 = vector.extract_strided_slice %11 {offsets = [0, 0], sizes = [32, 128], strides = [1, 1]} : vector<128x128xbf16> to vector<32x128xbf16>
    %cst_15 = arith.constant dense<0.000000e+00> : vector<16x128xf32>
    %33 = tpu.matmul %31, %32, %cst_15 {dimension_numbers = #tpu.dot_dimension_numbers<[1], [0], [0], [1], [0, 0, 1, 1], [], []>} : vector<16x32xbf16>, vector<32x128xbf16>, vector<16x128xf32> -> vector<16x128xf32>
    %34 = arith.addf %12, %33 : vector<16x128xf32>
    %35 = vector.extract_strided_slice %8 {offsets = [0, 0, 32], sizes = [2, 8, 32], strides = [1, 1, 1]} : vector<2x8x128xbf16> to vector<2x8x32xbf16>
    %36 = vector.extract_strided_slice %10 {offsets = [0, 0, 32], sizes = [2, 8, 32], strides = [1, 1, 1]} : vector<2x8x128xbf16> to vector<2x8x32xbf16>
    %37 = vector.extract_strided_slice %10 {offsets = [0, 0, 32], sizes = [2, 8, 32], strides = [1, 1, 1]} : vector<2x8x128xbf16> to vector<2x8x32xbf16>
    "tpu.trace_start"() <{level = 10 : i32, message = "btd,bsd->bts"}> : () -> ()
    %cst_16 = arith.constant dense<0.000000e+00> : vector<2x8x8xf32>
    %38 = tpu.matmul %35, %36, %cst_16 {dimension_numbers = #tpu.dot_dimension_numbers<[2], [2], [1], [1], [0, 0, 0, 1, 1, 1], [0], [0]>} : vector<2x8x32xbf16>, vector<2x8x32xbf16>, vector<2x8x8xf32> -> vector<2x8x8xf32>
    "tpu.trace_stop"() : () -> ()
    %cst_17 = arith.constant 0.176776692 : f32
    %39 = vector.broadcast %cst_17 : f32 to vector<2x8x8xf32>
    %40 = arith.mulf %38, %39 : vector<2x8x8xf32>
    %cst_18 = arith.constant dense<0xFF800000> : vector<2x8xf32>
    %41 = vector.multi_reduction <maximumf>, %40, %cst_18 [2] : vector<2x8x8xf32> to vector<2x8xf32>
    %42 = vector.shape_cast %41 : vector<2x8xf32> to vector<2x8x1xf32>
    %43 = vector.broadcast %42 : vector<2x8x1xf32> to vector<2x8x8xf32>
    %44 = arith.subf %40, %43 : vector<2x8x8xf32>
    %45 = math.exp %44 : vector<2x8x8xf32>
    %cst_19 = arith.constant dense<0.000000e+00> : vector<2x8xf32>
    %46 = vector.multi_reduction <add>, %45, %cst_19 [2] : vector<2x8x8xf32> to vector<2x8xf32>
    %47 = vector.shape_cast %46 : vector<2x8xf32> to vector<2x8x1xf32>
    %48 = vector.broadcast %47 : vector<2x8x1xf32> to vector<2x8x8xf32>
    %49 = arith.divf %45, %48 : vector<2x8x8xf32>
    %50 = arith.truncf %49 : vector<2x8x8xf32> to vector<2x8x8xbf16>
    "tpu.trace_start"() <{level = 10 : i32, message = "bts,bsd->btd"}> : () -> ()
    %cst_20 = arith.constant dense<0.000000e+00> : vector<2x8x32xf32>
    %51 = tpu.matmul %50, %37, %cst_20 {dimension_numbers = #tpu.dot_dimension_numbers<[2], [1], [1], [2], [0, 0, 0, 1, 1, 2], [0], [0]>} : vector<2x8x8xbf16>, vector<2x8x32xbf16>, vector<2x8x32xf32> -> vector<2x8x32xf32>
    "tpu.trace_stop"() : () -> ()
    %52 = vector.shape_cast %51 : vector<2x8x32xf32> to vector<16x32xf32>
    %53 = arith.truncf %52 : vector<16x32xf32> to vector<16x32xbf16>
    %54 = vector.extract_strided_slice %11 {offsets = [32, 0], sizes = [32, 128], strides = [1, 1]} : vector<128x128xbf16> to vector<32x128xbf16>
    %cst_21 = arith.constant dense<0.000000e+00> : vector<16x128xf32>
    %55 = tpu.matmul %53, %54, %cst_21 {dimension_numbers = #tpu.dot_dimension_numbers<[1], [0], [0], [1], [0, 0, 1, 1], [], []>} : vector<16x32xbf16>, vector<32x128xbf16>, vector<16x128xf32> -> vector<16x128xf32>
    %56 = arith.addf %34, %55 : vector<16x128xf32>
    %57 = vector.extract_strided_slice %8 {offsets = [0, 0, 64], sizes = [2, 8, 32], strides = [1, 1, 1]} : vector<2x8x128xbf16> to vector<2x8x32xbf16>
    %58 = vector.extract_strided_slice %10 {offsets = [0, 0, 64], sizes = [2, 8, 32], strides = [1, 1, 1]} : vector<2x8x128xbf16> to vector<2x8x32xbf16>
    %59 = vector.extract_strided_slice %10 {offsets = [0, 0, 64], sizes = [2, 8, 32], strides = [1, 1, 1]} : vector<2x8x128xbf16> to vector<2x8x32xbf16>
    "tpu.trace_start"() <{level = 10 : i32, message = "btd,bsd->bts"}> : () -> ()
    %cst_22 = arith.constant dense<0.000000e+00> : vector<2x8x8xf32>
    %60 = tpu.matmul %57, %58, %cst_22 {dimension_numbers = #tpu.dot_dimension_numbers<[2], [2], [1], [1], [0, 0, 0, 1, 1, 1], [0], [0]>} : vector<2x8x32xbf16>, vector<2x8x32xbf16>, vector<2x8x8xf32> -> vector<2x8x8xf32>
    "tpu.trace_stop"() : () -> ()
    %cst_23 = arith.constant 0.176776692 : f32
    %61 = vector.broadcast %cst_23 : f32 to vector<2x8x8xf32>
    %62 = arith.mulf %60, %61 : vector<2x8x8xf32>
    %cst_24 = arith.constant dense<0xFF800000> : vector<2x8xf32>
    %63 = vector.multi_reduction <maximumf>, %62, %cst_24 [2] : vector<2x8x8xf32> to vector<2x8xf32>
    %64 = vector.shape_cast %63 : vector<2x8xf32> to vector<2x8x1xf32>
    %65 = vector.broadcast %64 : vector<2x8x1xf32> to vector<2x8x8xf32>
    %66 = arith.subf %62, %65 : vector<2x8x8xf32>
    %67 = math.exp %66 : vector<2x8x8xf32>
    %cst_25 = arith.constant dense<0.000000e+00> : vector<2x8xf32>
    %68 = vector.multi_reduction <add>, %67, %cst_25 [2] : vector<2x8x8xf32> to vector<2x8xf32>
    %69 = vector.shape_cast %68 : vector<2x8xf32> to vector<2x8x1xf32>
    %70 = vector.broadcast %69 : vector<2x8x1xf32> to vector<2x8x8xf32>
    %71 = arith.divf %67, %70 : vector<2x8x8xf32>
    %72 = arith.truncf %71 : vector<2x8x8xf32> to vector<2x8x8xbf16>
    "tpu.trace_start"() <{level = 10 : i32, message = "bts,bsd->btd"}> : () -> ()
    %cst_26 = arith.constant dense<0.000000e+00> : vector<2x8x32xf32>
    %73 = tpu.matmul %72, %59, %cst_26 {dimension_numbers = #tpu.dot_dimension_numbers<[2], [1], [1], [2], [0, 0, 0, 1, 1, 2], [0], [0]>} : vector<2x8x8xbf16>, vector<2x8x32xbf16>, vector<2x8x32xf32> -> vector<2x8x32xf32>
    "tpu.trace_stop"() : () -> ()
    %74 = vector.shape_cast %73 : vector<2x8x32xf32> to vector<16x32xf32>
    %75 = arith.truncf %74 : vector<16x32xf32> to vector<16x32xbf16>
    %76 = vector.extract_strided_slice %11 {offsets = [64, 0], sizes = [32, 128], strides = [1, 1]} : vector<128x128xbf16> to vector<32x128xbf16>
    %cst_27 = arith.constant dense<0.000000e+00> : vector<16x128xf32>
    %77 = tpu.matmul %75, %76, %cst_27 {dimension_numbers = #tpu.dot_dimension_numbers<[1], [0], [0], [1], [0, 0, 1, 1], [], []>} : vector<16x32xbf16>, vector<32x128xbf16>, vector<16x128xf32> -> vector<16x128xf32>
    %78 = arith.addf %56, %77 : vector<16x128xf32>
    %79 = vector.extract_strided_slice %8 {offsets = [0, 0, 96], sizes = [2, 8, 32], strides = [1, 1, 1]} : vector<2x8x128xbf16> to vector<2x8x32xbf16>
    %80 = vector.extract_strided_slice %10 {offsets = [0, 0, 96], sizes = [2, 8, 32], strides = [1, 1, 1]} : vector<2x8x128xbf16> to vector<2x8x32xbf16>
    %81 = vector.extract_strided_slice %10 {offsets = [0, 0, 96], sizes = [2, 8, 32], strides = [1, 1, 1]} : vector<2x8x128xbf16> to vector<2x8x32xbf16>
    "tpu.trace_start"() <{level = 10 : i32, message = "btd,bsd->bts"}> : () -> ()
    %cst_28 = arith.constant dense<0.000000e+00> : vector<2x8x8xf32>
    %82 = tpu.matmul %79, %80, %cst_28 {dimension_numbers = #tpu.dot_dimension_numbers<[2], [2], [1], [1], [0, 0, 0, 1, 1, 1], [0], [0]>} : vector<2x8x32xbf16>, vector<2x8x32xbf16>, vector<2x8x8xf32> -> vector<2x8x8xf32>
    "tpu.trace_stop"() : () -> ()
    %cst_29 = arith.constant 0.176776692 : f32
    %83 = vector.broadcast %cst_29 : f32 to vector<2x8x8xf32>
    %84 = arith.mulf %82, %83 : vector<2x8x8xf32>
    %cst_30 = arith.constant dense<0xFF800000> : vector<2x8xf32>
    %85 = vector.multi_reduction <maximumf>, %84, %cst_30 [2] : vector<2x8x8xf32> to vector<2x8xf32>
    %86 = vector.shape_cast %85 : vector<2x8xf32> to vector<2x8x1xf32>
    %87 = vector.broadcast %86 : vector<2x8x1xf32> to vector<2x8x8xf32>
    %88 = arith.subf %84, %87 : vector<2x8x8xf32>
    %89 = math.exp %88 : vector<2x8x8xf32>
    %cst_31 = arith.constant dense<0.000000e+00> : vector<2x8xf32>
    %90 = vector.multi_reduction <add>, %89, %cst_31 [2] : vector<2x8x8xf32> to vector<2x8xf32>
    %91 = vector.shape_cast %90 : vector<2x8xf32> to vector<2x8x1xf32>
    %92 = vector.broadcast %91 : vector<2x8x1xf32> to vector<2x8x8xf32>
    %93 = arith.divf %89, %92 : vector<2x8x8xf32>
    %94 = arith.truncf %93 : vector<2x8x8xf32> to vector<2x8x8xbf16>
    "tpu.trace_start"() <{level = 10 : i32, message = "bts,bsd->btd"}> : () -> ()
    %cst_32 = arith.constant dense<0.000000e+00> : vector<2x8x32xf32>
    %95 = tpu.matmul %94, %81, %cst_32 {dimension_numbers = #tpu.dot_dimension_numbers<[2], [1], [1], [2], [0, 0, 0, 1, 1, 2], [0], [0]>} : vector<2x8x8xbf16>, vector<2x8x32xbf16>, vector<2x8x32xf32> -> vector<2x8x32xf32>
    "tpu.trace_stop"() : () -> ()
    %96 = vector.shape_cast %95 : vector<2x8x32xf32> to vector<16x32xf32>
    %97 = arith.truncf %96 : vector<16x32xf32> to vector<16x32xbf16>
    %98 = vector.extract_strided_slice %11 {offsets = [96, 0], sizes = [32, 128], strides = [1, 1]} : vector<128x128xbf16> to vector<32x128xbf16>
    %cst_33 = arith.constant dense<0.000000e+00> : vector<16x128xf32>
    %99 = tpu.matmul %97, %98, %cst_33 {dimension_numbers = #tpu.dot_dimension_numbers<[1], [0], [0], [1], [0, 0, 1, 1], [], []>} : vector<16x32xbf16>, vector<32x128xbf16>, vector<16x128xf32> -> vector<16x128xf32>
    %100 = arith.addf %78, %99 : vector<16x128xf32>
    %c0_34 = arith.constant 0 : index
    %c0_35 = arith.constant 0 : index
    %101 = vector.load %arg5[%c0_34, %c0_35] : memref<1x128xf32, #tpu.memory_space<vmem>>, vector<1x128xf32>
    %c0_36 = arith.constant 0 : index
    %c0_37 = arith.constant 0 : index
    %102 = vector.load %arg6[%c0_36, %c0_37] : memref<1x128xf32, #tpu.memory_space<vmem>>, vector<1x128xf32>
    %cst_38 = arith.constant dense<0.000000e+00> : vector<16xf32>
    %103 = vector.multi_reduction <add>, %100, %cst_38 [1] : vector<16x128xf32> to vector<16xf32>
    %104 = vector.shape_cast %103 : vector<16xf32> to vector<16x1xf32>
    %cst_39 = arith.constant 1.280000e+02 : f32
    %105 = vector.broadcast %cst_39 : f32 to vector<16x1xf32>
    %106 = arith.divf %104, %105 : vector<16x1xf32>
    %107 = vector.broadcast %106 : vector<16x1xf32> to vector<16x128xf32>
    %108 = arith.subf %100, %107 : vector<16x128xf32>
    %109 = arith.mulf %108, %108 : vector<16x128xf32>
    %cst_40 = arith.constant dense<0.000000e+00> : vector<16xf32>
    %110 = vector.multi_reduction <add>, %109, %cst_40 [1] : vector<16x128xf32> to vector<16xf32>
    %111 = vector.shape_cast %110 : vector<16xf32> to vector<16x1xf32>
    %cst_41 = arith.constant 1.280000e+02 : f32
    %112 = vector.broadcast %cst_41 : f32 to vector<16x1xf32>
    %113 = arith.divf %111, %112 : vector<16x1xf32>
    %cst_42 = arith.constant 9.99999974E-6 : f32
    %114 = vector.broadcast %cst_42 : f32 to vector<16x1xf32>
    %115 = arith.addf %113, %114 : vector<16x1xf32>
    %116 = math.rsqrt %115 : vector<16x1xf32>
    %117 = vector.broadcast %116 : vector<16x1xf32> to vector<16x128xf32>
    %118 = arith.mulf %108, %117 : vector<16x128xf32>
    %119 = vector.broadcast %101 : vector<1x128xf32> to vector<16x128xf32>
    %120 = arith.mulf %118, %119 : vector<16x128xf32>
    %121 = vector.broadcast %102 : vector<1x128xf32> to vector<16x128xf32>
    %122 = arith.addf %120, %121 : vector<16x128xf32>
    %123 = arith.truncf %122 : vector<16x128xf32> to vector<16x128xbf16>
    %c0_43 = arith.constant 0 : index
    %c0_44 = arith.constant 0 : index
    %124 = vector.load %arg7[%c0_43, %c0_44] : memref<128x128xbf16, #tpu.memory_space<vmem>>, vector<128x128xbf16>
    %cst_45 = arith.constant dense<0.000000e+00> : vector<16x128xf32>
    %125 = tpu.matmul %123, %124, %cst_45 {dimension_numbers = #tpu.dot_dimension_numbers<[1], [0], [0], [1], [0, 0, 1, 1], [], []>} : vector<16x128xbf16>, vector<128x128xbf16>, vector<16x128xf32> -> vector<16x128xf32>
    %c0_46 = arith.constant 0 : index
    %c0_47 = arith.constant 0 : index
    %126 = vector.load %arg8[%c0_46, %c0_47] : memref<1x128xf32, #tpu.memory_space<vmem>>, vector<1x128xf32>
    %127 = vector.broadcast %126 : vector<1x128xf32> to vector<16x128xf32>
    %128 = arith.addf %125, %127 : vector<16x128xf32>
    %129 = arith.addf %122, %128 : vector<16x128xf32>
    %c0_48 = arith.constant 0 : index
    %c0_49 = arith.constant 0 : index
    %130 = vector.load %arg9[%c0_48, %c0_49] : memref<1x128xf32, #tpu.memory_space<vmem>>, vector<1x128xf32>
    %c0_50 = arith.constant 0 : index
    %c0_51 = arith.constant 0 : index
    %131 = vector.load %arg10[%c0_50, %c0_51] : memref<1x128xf32, #tpu.memory_space<vmem>>, vector<1x128xf32>
    %cst_52 = arith.constant dense<0.000000e+00> : vector<16xf32>
    %132 = vector.multi_reduction <add>, %129, %cst_52 [1] : vector<16x128xf32> to vector<16xf32>
    %133 = vector.shape_cast %132 : vector<16xf32> to vector<16x1xf32>
    %cst_53 = arith.constant 1.280000e+02 : f32
    %134 = vector.broadcast %cst_53 : f32 to vector<16x1xf32>
    %135 = arith.divf %133, %134 : vector<16x1xf32>
    %136 = vector.broadcast %135 : vector<16x1xf32> to vector<16x128xf32>
    %137 = arith.subf %129, %136 : vector<16x128xf32>
    %138 = arith.mulf %137, %137 : vector<16x128xf32>
    %cst_54 = arith.constant dense<0.000000e+00> : vector<16xf32>
    %139 = vector.multi_reduction <add>, %138, %cst_54 [1] : vector<16x128xf32> to vector<16xf32>
    %140 = vector.shape_cast %139 : vector<16xf32> to vector<16x1xf32>
    %cst_55 = arith.constant 1.280000e+02 : f32
    %141 = vector.broadcast %cst_55 : f32 to vector<16x1xf32>
    %142 = arith.divf %140, %141 : vector<16x1xf32>
    %cst_56 = arith.constant 9.99999974E-6 : f32
    %143 = vector.broadcast %cst_56 : f32 to vector<16x1xf32>
    %144 = arith.addf %142, %143 : vector<16x1xf32>
    %145 = math.rsqrt %144 : vector<16x1xf32>
    %146 = vector.broadcast %145 : vector<16x1xf32> to vector<16x128xf32>
    %147 = arith.mulf %137, %146 : vector<16x128xf32>
    %148 = vector.broadcast %130 : vector<1x128xf32> to vector<16x128xf32>
    %149 = arith.mulf %147, %148 : vector<16x128xf32>
    %150 = vector.broadcast %131 : vector<1x128xf32> to vector<16x128xf32>
    %151 = arith.addf %149, %150 : vector<16x128xf32>
    %152 = vector.shape_cast %151 : vector<16x128xf32> to vector<2x8x128xf32>
    %c0_57 = arith.constant 0 : index
    %c0_58 = arith.constant 0 : index
    %c0_59 = arith.constant 0 : index
    %153 = vector.load %arg11[%c0_57, %c0_58, %c0_59] : memref<2x8x128xf32, #tpu.memory_space<vmem>>, vector<2x8x128xf32>
    tpu.vector_store %arg11[%c0_57, %c0_58, %c0_59], %152 {strides = array<i32>} : memref<2x8x128xf32, #tpu.memory_space<vmem>>, vector<2x8x128xf32>,
    return
  }
  func.func @transform_0(%arg0: i32) -> (i32, i32, i32) {
    %c0_i32 = arith.constant 0 : i32
    %c0_i32_0 = arith.constant 0 : i32
    %c0_i32_1 = arith.constant 0 : i32
    return %arg0, %c0_i32, %c0_i32_0 : i32, i32, i32
  }
  func.func @transform_1(%arg0: i32) -> (i32, i32) {
    %c0_i32 = arith.constant 0 : i32
    %c0_i32_0 = arith.constant 0 : i32
    %c0_i32_1 = arith.constant 0 : i32
    return %c0_i32, %c0_i32_0 : i32, i32
  }
  func.func @transform_2(%arg0: i32) -> (i32, i32) {
    %c0_i32 = arith.constant 0 : i32
    %c0_i32_0 = arith.constant 0 : i32
    %c0_i32_1 = arith.constant 0 : i32
    return %c0_i32, %c0_i32_0 : i32, i32
  }
  func.func @transform_3(%arg0: i32) -> (i32, i32) {
    %c0_i32 = arith.constant 0 : i32
    %c0_i32_0 = arith.constant 0 : i32
    %c0_i32_1 = arith.constant 0 : i32
    return %c0_i32, %c0_i32_0 : i32, i32
  }
  func.func @transform_4(%arg0: i32) -> (i32, i32) {
    %c0_i32 = arith.constant 0 : i32
    %c0_i32_0 = arith.constant 0 : i32
    %c0_i32_1 = arith.constant 0 : i32
    return %c0_i32, %c0_i32_0 : i32, i32
  }
  func.func @transform_5(%arg0: i32) -> (i32, i32) {
    %c0_i32 = arith.constant 0 : i32
    %c0_i32_0 = arith.constant 0 : i32
    %c0_i32_1 = arith.constant 0 : i32
    return %c0_i32, %c0_i32_0 : i32, i32
  }
  func.func @transform_6(%arg0: i32) -> (i32, i32) {
    %c0_i32 = arith.constant 0 : i32
    %c0_i32_0 = arith.constant 0 : i32
    %c0_i32_1 = arith.constant 0 : i32
    return %c0_i32, %c0_i32_0 : i32, i32
  }
  func.func @transform_7(%arg0: i32) -> (i32, i32) {
    %c0_i32 = arith.constant 0 : i32
    %c0_i32_0 = arith.constant 0 : i32
    %c0_i32_1 = arith.constant 0 : i32
    return %c0_i32, %c0_i32_0 : i32, i32
  }
  func.func @transform_8(%arg0: i32) -> (i32, i32) {
    %c0_i32 = arith.constant 0 : i32
    %c0_i32_0 = arith.constant 0 : i32
    %c0_i32_1 = arith.constant 0 : i32
    return %c0_i32, %c0_i32_0 : i32, i32
  }
  func.func @transform_9(%arg0: i32) -> (i32, i32) {
    %c0_i32 = arith.constant 0 : i32
    %c0_i32_0 = arith.constant 0 : i32
    %c0_i32_1 = arith.constant 0 : i32
    return %c0_i32, %c0_i32_0 : i32, i32
  }
  func.func @transform_10(%arg0: i32) -> (i32, i32, i32) {
    %c0_i32 = arith.constant 0 : i32
    %c0_i32_0 = arith.constant 0 : i32
    %c0_i32_1 = arith.constant 0 : i32
    return %arg0, %c0_i32, %c0_i32_0 : i32, i32, i32
  }
}

module attributes {stable_mosaic.version = 11 : i64} {
  func.func @attention_layer_kernel(%arg0: i32, %arg1: memref<2x8x128xf32, #tpu.memory_space<vmem>>, %arg2: memref<128x128xbf16, #tpu.memory_space<vmem>>, %arg3: memref<128x128xbf16, #tpu.memory_space<vmem>>, %arg4: memref<128x128xbf16, #tpu.memory_space<vmem>>, %arg5: memref<1x128xf32, #tpu.memory_space<vmem>>, %arg6: memref<1x128xf32, #tpu.memory_space<vmem>>, %arg7: memref<128x128xbf16, #tpu.memory_space<vmem>>, %arg8: memref<1x128xf32, #tpu.memory_space<vmem>>, %arg9: memref<1x128xf32, #tpu.memory_space<vmem>>, %arg10: memref<1x128xf32, #tpu.memory_space<vmem>>, %arg11: memref<2x8x128xf32, #tpu.memory_space<vmem>>) attributes {dimension_semantics = [#tpu.dimension_semantics<parallel>], iteration_bounds = array<i64: 1>, scalar_prefetch = 0 : i64, scratch_operands = 0 : i64, tpu.core_type = #tpu.core_type<tc>, window_params = [{transform_indices = @transform_0, window_bounds = array<i64: 2, 8, 128>}, {pipeline_mode = #tpu.pipeline_mode<synchronous>, transform_indices = @transform_1, window_bounds = array<i64: 128, 128>}, {pipeline_mode = #tpu.pipeline_mode<synchronous>, transform_indices = @transform_2, window_bounds = array<i64: 128, 128>}, {pipeline_mode = #tpu.pipeline_mode<synchronous>, transform_indices = @transform_3, window_bounds = array<i64: 128, 128>}, {pipeline_mode = #tpu.pipeline_mode<synchronous>, transform_indices = @transform_4, window_bounds = array<i64: 1, 128>}, {pipeline_mode = #tpu.pipeline_mode<synchronous>, transform_indices = @transform_5, window_bounds = array<i64: 1, 128>}, {pipeline_mode = #tpu.pipeline_mode<synchronous>, transform_indices = @transform_6, window_bounds = array<i64: 128, 128>}, {pipeline_mode = #tpu.pipeline_mode<synchronous>, transform_indices = @transform_7, window_bounds = array<i64: 1, 128>}, {pipeline_mode = #tpu.pipeline_mode<synchronous>, transform_indices = @transform_8, window_bounds = array<i64: 1, 128>}, {pipeline_mode = #tpu.pipeline_mode<synchronous>, transform_indices = @transform_9, window_bounds = array<i64: 1, 128>}, {transform_indices = @transform_10, window_bounds = array<i64: 2, 8, 128>}]} {
    %c0 = arith.constant 0 : index
    %c0_0 = arith.constant 0 : index
    %c0_1 = arith.constant 0 : index
    %0 = vector.load %arg1[%c0, %c0_0, %c0_1] : memref<2x8x128xf32, #tpu.memory_space<vmem>>, vector<2x8x128xf32>
    %1 = vector.shape_cast %0 : vector<2x8x128xf32> to vector<16x128xf32>
    %2 = arith.truncf %1 : vector<16x128xf32> to vector<16x128xbf16>
    %c0_2 = arith.constant 0 : index
    %c0_3 = arith.constant 0 : index
    %3 = vector.load %arg2[%c0_2, %c0_3] : memref<128x128xbf16, #tpu.memory_space<vmem>>, vector<128x128xbf16>
    %cst = arith.constant dense<0.000000e+00> : vector<16x128xf32>
    %4 = tpu.matmul %2, %3, %cst {dimension_numbers = #tpu.dot_dimension_numbers<[1], [0], [0], [1], [0, 0, 1, 1], [], []>} : vector<16x128xbf16>, vector<128x128xbf16>, vector<16x128xf32> -> vector<16x128xf32>
    %c0_4 = arith.constant 0 : index
    %c0_5 = arith.constant 0 : index
    %5 = vector.load %arg3[%c0_4, %c0_5] : memref<128x128xbf16, #tpu.memory_space<vmem>>, vector<128x128xbf16>
    %cst_6 = arith.constant dense<0.000000e+00> : vector<16x128xf32>
    %6 = tpu.matmul %2, %5, %cst_6 {dimension_numbers = #tpu.dot_dimension_numbers<[1], [0], [0], [1], [0, 0, 1, 1], [], []>} : vector<16x128xbf16>, vector<128x128xbf16>, vector<16x128xf32> -> vector<16x128xf32>
    %7 = arith.truncf %4 : vector<16x128xf32> to vector<16x128xbf16>
    %8 = vector.shape_cast %7 : vector<16x128xbf16> to vector<2x8x128xbf16>
    %9 = arith.truncf %6 : vector<16x128xf32> to vector<16x128xbf16>
    %10 = vector.shape_cast %9 : vector<16x128xbf16> to vector<2x8x128xbf16>
    %c0_7 = arith.constant 0 : index
    %c0_8 = arith.constant 0 : index
    %11 = vector.load %arg4[%c0_7, %c0_8] : memref<128x128xbf16, #tpu.memory_space<vmem>>, vector<128x128xbf16>
    %cst_9 = arith.constant 0.000000e+00 : f32
    %12 = vector.broadcast %cst_9 : f32 to vector<16x128xf32>
    %13 = vector.extract_strided_slice %8 {offsets = [0, 0, 0], sizes = [2, 8, 32], strides = [1, 1, 1]} : vector<2x8x128xbf16> to vector<2x8x32xbf16>
    %14 = vector.extract_strided_slice %10 {offsets = [0, 0, 0], sizes = [2, 8, 32], strides = [1, 1, 1]} : vector<2x8x128xbf16> to vector<2x8x32xbf16>
    %15 = vector.extract_strided_slice %10 {offsets = [0, 0, 0], sizes = [2, 8, 32], strides = [1, 1, 1]} : vector<2x8x128xbf16> to vector<2x8x32xbf16>
    "tpu.trace_start"() <{level = 10 : i32, message = "btd,bsd->bts"}> : () -> ()
    %cst_10 = arith.constant dense<0.000000e+00> : vector<2x8x8xf32>
    %16 = tpu.matmul %13, %14, %cst_10 {dimension_numbers = #tpu.dot_dimension_numbers<[2], [2], [1], [1], [0, 0, 0, 1, 1, 1], [0], [0]>} : vector<2x8x32xbf16>, vector<2x8x32xbf16>, vector<2x8x8xf32> -> vector<2x8x8xf32>
    "tpu.trace_stop"() : () -> ()
    %cst_11 = arith.constant 0.176776692 : f32
    %17 = vector.broadcast %cst_11 : f32 to vector<2x8x8xf32>
    %18 = arith.mulf %16, %17 : vector<2x8x8xf32>
    %cst_12 = arith.constant dense<0xFF800000> : vector<2x8xf32>
    %19 = vector.multi_reduction <maximumf>, %18, %cst_12 [2] : vector<2x8x8xf32> to vector<2x8xf32>
    %20 = vector.shape_cast %19 : vector<2x8xf32> to vector<2x8x1xf32>
    %21 = vector.broadcast %20 : vector<2x8x1xf32> to vector<2x8x8xf32>
    %22 = arith.subf %18, %21 : vector<2x8x8xf32>
    %23 = math.exp %22 : vector<2x8x8xf32>
    %cst_13 = arith.constant dense<0.000000e+00> : vector<2x8xf32>
    %24 = vector.multi_reduction <add>, %23, %cst_13 [2] : vector<2x8x8xf32> to vector<2x8xf32>
    %25 = vector.shape_cast %24 : vector<2x8xf32> to vector<2x8x1xf32>
    %26 = vector.broadcast %25 : vector<2x8x1xf32> to vector<2x8x8xf32>
    %27 = arith.divf %23, %26 : vector<2x8x8xf32>
    %28 = arith.truncf %27 : vector<2x8x8xf32> to vector<2x8x8xbf16>
    "tpu.trace_start"() <{level = 10 : i32, message = "bts,bsd->btd"}> : () -> ()
    %cst_14 = arith.constant dense<0.000000e+00> : vector<2x8x32xf32>
    %29 = tpu.matmul %28, %15, %cst_14 {dimension_numbers = #tpu.dot_dimension_numbers<[2], [1], [1], [2], [0, 0, 0, 1, 1, 2], [0], [0]>} : vector<2x8x8xbf16>, vector<2x8x32xbf16>, vector<2x8x32xf32> -> vector<2x8x32xf32>
    "tpu.trace_stop"() : () -> ()
    %30 = vector.shape_cast %29 : vector<2x8x32xf32> to vector<16x32xf32>
    %31 = arith.truncf %30 : vector<16x32xf32> to vector<16x32xbf16>
    %32 = vector.extract_strided_slice %11 {offsets = [0, 0], sizes = [32, 128], strides = [1, 1]} : vector<128x128xbf16> to vector<32x128xbf16>
    %cst_15 = arith.constant dense<0.000000e+00> : vector<16x128xf32>
    %33 = tpu.matmul %31, %32, %cst_15 {dimension_numbers = #tpu.dot_dimension_numbers<[1], [0], [0], [1], [0, 0, 1, 1], [], []>} : vector<16x32xbf16>, vector<32x128xbf16>, vector<16x128xf32> -> vector<16x128xf32>
    %34 = arith.addf %12, %33 : vector<16x128xf32>
    %35 = vector.extract_strided_slice %8 {offsets = [0, 0, 32], sizes = [2, 8, 32], strides = [1, 1, 1]} : vector<2x8x128xbf16> to vector<2x8x32xbf16>
    %36 = vector.extract_strided_slice %10 {offsets = [0, 0, 32], sizes = [2, 8, 32], strides = [1, 1, 1]} : vector<2x8x128xbf16> to vector<2x8x32xbf16>
    %37 = vector.extract_strided_slice %10 {offsets = [0, 0, 32], sizes = [2, 8, 32], strides = [1, 1, 1]} : vector<2x8x128xbf16> to vector<2x8x32xbf16>
    "tpu.trace_start"() <{level = 10 : i32, message = "btd,bsd->bts"}> : () -> ()
    %cst_16 = arith.constant dense<0.000000e+00> : vector<2x8x8xf32>
    %38 = tpu.matmul %35, %36, %cst_16 {dimension_numbers = #tpu.dot_dimension_numbers<[2], [2], [1], [1], [0, 0, 0, 1, 1, 1], [0], [0]>} : vector<2x8x32xbf16>, vector<2x8x32xbf16>, vector<2x8x8xf32> -> vector<2x8x8xf32>
    "tpu.trace_stop"() : () -> ()
    %cst_17 = arith.constant 0.176776692 : f32
    %39 = vector.broadcast %cst_17 : f32 to vector<2x8x8xf32>
    %40 = arith.mulf %38, %39 : vector<2x8x8xf32>
    %cst_18 = arith.constant dense<0xFF800000> : vector<2x8xf32>
    %41 = vector.multi_reduction <maximumf>, %40, %cst_18 [2] : vector<2x8x8xf32> to vector<2x8xf32>
    %42 = vector.shape_cast %41 : vector<2x8xf32> to vector<2x8x1xf32>
    %43 = vector.broadcast %42 : vector<2x8x1xf32> to vector<2x8x8xf32>
    %44 = arith.subf %40, %43 : vector<2x8x8xf32>
    %45 = math.exp %44 : vector<2x8x8xf32>
    %cst_19 = arith.constant dense<0.000000e+00> : vector<2x8xf32>
    %46 = vector.multi_reduction <add>, %45, %cst_19 [2] : vector<2x8x8xf32> to vector<2x8xf32>
    %47 = vector.shape_cast %46 : vector<2x8xf32> to vector<2x8x1xf32>
    %48 = vector.broadcast %47 : vector<2x8x1xf32> to vector<2x8x8xf32>
    %49 = arith.divf %45, %48 : vector<2x8x8xf32>
    %50 = arith.truncf %49 : vector<2x8x8xf32> to vector<2x8x8xbf16>
    "tpu.trace_start"() <{level = 10 : i32, message = "bts,bsd->btd"}> : () -> ()
    %cst_20 = arith.constant dense<0.000000e+00> : vector<2x8x32xf32>
    %51 = tpu.matmul %50, %37, %cst_20 {dimension_numbers = #tpu.dot_dimension_numbers<[2], [1], [1], [2], [0, 0, 0, 1, 1, 2], [0], [0]>} : vector<2x8x8xbf16>, vector<2x8x32xbf16>, vector<2x8x32xf32> -> vector<2x8x32xf32>
    "tpu.trace_stop"() : () -> ()
    %52 = vector.shape_cast %51 : vector<2x8x32xf32> to vector<16x32xf32>
    %53 = arith.truncf %52 : vector<16x32xf32> to vector<16x32xbf16>
    %54 = vector.extract_strided_slice %11 {offsets = [32, 0], sizes = [32, 128], strides = [1, 1]} : vector<128x128xbf16> to vector<32x128xbf16>
    %cst_21 = arith.constant dense<0.000000e+00> : vector<16x128xf32>
    %55 = tpu.matmul %53, %54, %cst_21 {dimension_numbers = #tpu.dot_dimension_numbers<[1], [0], [0], [1], [0, 0, 1, 1], [], []>} : vector<16x32xbf16>, vector<32x128xbf16>, vector<16x128xf32> -> vector<16x128xf32>
    %56 = arith.addf %34, %55 : vector<16x128xf32>
    %57 = vector.extract_strided_slice %8 {offsets = [0, 0, 64], sizes = [2, 8, 32], strides = [1, 1, 1]} : vector<2x8x128xbf16> to vector<2x8x32xbf16>
    %58 = vector.extract_strided_slice %10 {offsets = [0, 0, 64], sizes = [2, 8, 32], strides = [1, 1, 1]} : vector<2x8x128xbf16> to vector<2x8x32xbf16>
    %59 = vector.extract_strided_slice %10 {offsets = [0, 0, 64], sizes = [2, 8, 32], strides = [1, 1, 1]} : vector<2x8x128xbf16> to vector<2x8x32xbf16>
    "tpu.trace_start"() <{level = 10 : i32, message = "btd,bsd->bts"}> : () -> ()
    %cst_22 = arith.constant dense<0.000000e+00> : vector<2x8x8xf32>
    %60 = tpu.matmul %57, %58, %cst_22 {dimension_numbers = #tpu.dot_dimension_numbers<[2], [2], [1], [1], [0, 0, 0, 1, 1, 1], [0], [0]>} : vector<2x8x32xbf16>, vector<2x8x32xbf16>, vector<2x8x8xf32> -> vector<2x8x8xf32>
    "tpu.trace_stop"() : () -> ()
    %cst_23 = arith.constant 0.176776692 : f32
    %61 = vector.broadcast %cst_23 : f32 to vector<2x8x8xf32>
    %62 = arith.mulf %60, %61 : vector<2x8x8xf32>
    %cst_24 = arith.constant dense<0xFF800000> : vector<2x8xf32>
    %63 = vector.multi_reduction <maximumf>, %62, %cst_24 [2] : vector<2x8x8xf32> to vector<2x8xf32>
    %64 = vector.shape_cast %63 : vector<2x8xf32> to vector<2x8x1xf32>
    %65 = vector.broadcast %64 : vector<2x8x1xf32> to vector<2x8x8xf32>
    %66 = arith.subf %62, %65 : vector<2x8x8xf32>
    %67 = math.exp %66 : vector<2x8x8xf32>
    %cst_25 = arith.constant dense<0.000000e+00> : vector<2x8xf32>
    %68 = vector.multi_reduction <add>, %67, %cst_25 [2] : vector<2x8x8xf32> to vector<2x8xf32>
    %69 = vector.shape_cast %68 : vector<2x8xf32> to vector<2x8x1xf32>
    %70 = vector.broadcast %69 : vector<2x8x1xf32> to vector<2x8x8xf32>
    %71 = arith.divf %67, %70 : vector<2x8x8xf32>
    %72 = arith.truncf %71 : vector<2x8x8xf32> to vector<2x8x8xbf16>
    "tpu.trace_start"() <{level = 10 : i32, message = "bts,bsd->btd"}> : () -> ()
    %cst_26 = arith.constant dense<0.000000e+00> : vector<2x8x32xf32>
    %73 = tpu.matmul %72, %59, %cst_26 {dimension_numbers = #tpu.dot_dimension_numbers<[2], [1], [1], [2], [0, 0, 0, 1, 1, 2], [0], [0]>} : vector<2x8x8xbf16>, vector<2x8x32xbf16>, vector<2x8x32xf32> -> vector<2x8x32xf32>
    "tpu.trace_stop"() : () -> ()
    %74 = vector.shape_cast %73 : vector<2x8x32xf32> to vector<16x32xf32>
    %75 = arith.truncf %74 : vector<16x32xf32> to vector<16x32xbf16>
    %76 = vector.extract_strided_slice %11 {offsets = [64, 0], sizes = [32, 128], strides = [1, 1]} : vector<128x128xbf16> to vector<32x128xbf16>
    %cst_27 = arith.constant dense<0.000000e+00> : vector<16x128xf32>
    %77 = tpu.matmul %75, %76, %cst_27 {dimension_numbers = #tpu.dot_dimension_numbers<[1], [0], [0], [1], [0, 0, 1, 1], [], []>} : vector<16x32xbf16>, vector<32x128xbf16>, vector<16x128xf32> -> vector<16x128xf32>
    %78 = arith.addf %56, %77 : vector<16x128xf32>
    %79 = vector.extract_strided_slice %8 {offsets = [0, 0, 96], sizes = [2, 8, 32], strides = [1, 1, 1]} : vector<2x8x128xbf16> to vector<2x8x32xbf16>
    %80 = vector.extract_strided_slice %10 {offsets = [0, 0, 96], sizes = [2, 8, 32], strides = [1, 1, 1]} : vector<2x8x128xbf16> to vector<2x8x32xbf16>
    %81 = vector.extract_strided_slice %10 {offsets = [0, 0, 96], sizes = [2, 8, 32], strides = [1, 1, 1]} : vector<2x8x128xbf16> to vector<2x8x32xbf16>
    "tpu.trace_start"() <{level = 10 : i32, message = "btd,bsd->bts"}> : () -> ()
    %cst_28 = arith.constant dense<0.000000e+00> : vector<2x8x8xf32>
    %82 = tpu.matmul %79, %80, %cst_28 {dimension_numbers = #tpu.dot_dimension_numbers<[2], [2], [1], [1], [0, 0, 0, 1, 1, 1], [0], [0]>} : vector<2x8x32xbf16>, vector<2x8x32xbf16>, vector<2x8x8xf32> -> vector<2x8x8xf32>
    "tpu.trace_stop"() : () -> ()
    %cst_29 = arith.constant 0.176776692 : f32
    %83 = vector.broadcast %cst_29 : f32 to vector<2x8x8xf32>
    %84 = arith.mulf %82, %83 : vector<2x8x8xf32>
    %cst_30 = arith.constant dense<0xFF800000> : vector<2x8xf32>
    %85 = vector.multi_reduction <maximumf>, %84, %cst_30 [2] : vector<2x8x8xf32> to vector<2x8xf32>
    %86 = vector.shape_cast %85 : vector<2x8xf32> to vector<2x8x1xf32>
    %87 = vector.broadcast %86 : vector<2x8x1xf32> to vector<2x8x8xf32>
    %88 = arith.subf %84, %87 : vector<2x8x8xf32>
    %89 = math.exp %88 : vector<2x8x8xf32>
    %cst_31 = arith.constant dense<0.000000e+00> : vector<2x8xf32>
    %90 = vector.multi_reduction <add>, %89, %cst_31 [2] : vector<2x8x8xf32> to vector<2x8xf32>
    %91 = vector.shape_cast %90 : vector<2x8xf32> to vector<2x8x1xf32>
    %92 = vector.broadcast %91 : vector<2x8x1xf32> to vector<2x8x8xf32>
    %93 = arith.divf %89, %92 : vector<2x8x8xf32>
    %94 = arith.truncf %93 : vector<2x8x8xf32> to vector<2x8x8xbf16>
    "tpu.trace_start"() <{level = 10 : i32, message = "bts,bsd->btd"}> : () -> ()
    %cst_32 = arith.constant dense<0.000000e+00> : vector<2x8x32xf32>
    %95 = tpu.matmul %94, %81, %cst_32 {dimension_numbers = #tpu.dot_dimension_numbers<[2], [1], [1], [2], [0, 0, 0, 1, 1, 2], [0], [0]>} : vector<2x8x8xbf16>, vector<2x8x32xbf16>, vector<2x8x32xf32> -> vector<2x8x32xf32>
    "tpu.trace_stop"() : () -> ()
    %96 = vector.shape_cast %95 : vector<2x8x32xf32> to vector<16x32xf32>
    %97 = arith.truncf %96 : vector<16x32xf32> to vector<16x32xbf16>
    %98 = vector.extract_strided_slice %11 {offsets = [96, 0], sizes = [32, 128], strides = [1, 1]} : vector<128x128xbf16> to vector<32x128xbf16>
    %cst_33 = arith.constant dense<0.000000e+00> : vector<16x128xf32>
    %99 = tpu.matmul %97, %98, %cst_33 {dimension_numbers = #tpu.dot_dimension_numbers<[1], [0], [0], [1], [0, 0, 1, 1], [], []>} : vector<16x32xbf16>, vector<32x128xbf16>, vector<16x128xf32> -> vector<16x128xf32>
    %100 = arith.addf %78, %99 : vector<16x128xf32>
    %101 = arith.addf %100, %1 : vector<16x128xf32>
    %c0_34 = arith.constant 0 : index
    %c0_35 = arith.constant 0 : index
    %102 = vector.load %arg5[%c0_34, %c0_35] : memref<1x128xf32, #tpu.memory_space<vmem>>, vector<1x128xf32>
    %c0_36 = arith.constant 0 : index
    %c0_37 = arith.constant 0 : index
    %103 = vector.load %arg6[%c0_36, %c0_37] : memref<1x128xf32, #tpu.memory_space<vmem>>, vector<1x128xf32>
    %cst_38 = arith.constant dense<0.000000e+00> : vector<16xf32>
    %104 = vector.multi_reduction <add>, %101, %cst_38 [1] : vector<16x128xf32> to vector<16xf32>
    %105 = vector.shape_cast %104 : vector<16xf32> to vector<16x1xf32>
    %cst_39 = arith.constant 1.280000e+02 : f32
    %106 = vector.broadcast %cst_39 : f32 to vector<16x1xf32>
    %107 = arith.divf %105, %106 : vector<16x1xf32>
    %108 = vector.broadcast %107 : vector<16x1xf32> to vector<16x128xf32>
    %109 = arith.subf %101, %108 : vector<16x128xf32>
    %110 = arith.mulf %109, %109 : vector<16x128xf32>
    %cst_40 = arith.constant dense<0.000000e+00> : vector<16xf32>
    %111 = vector.multi_reduction <add>, %110, %cst_40 [1] : vector<16x128xf32> to vector<16xf32>
    %112 = vector.shape_cast %111 : vector<16xf32> to vector<16x1xf32>
    %cst_41 = arith.constant 1.280000e+02 : f32
    %113 = vector.broadcast %cst_41 : f32 to vector<16x1xf32>
    %114 = arith.divf %112, %113 : vector<16x1xf32>
    %cst_42 = arith.constant 9.99999974E-6 : f32
    %115 = vector.broadcast %cst_42 : f32 to vector<16x1xf32>
    %116 = arith.addf %114, %115 : vector<16x1xf32>
    %117 = math.rsqrt %116 : vector<16x1xf32>
    %118 = vector.broadcast %117 : vector<16x1xf32> to vector<16x128xf32>
    %119 = arith.mulf %109, %118 : vector<16x128xf32>
    %120 = vector.broadcast %102 : vector<1x128xf32> to vector<16x128xf32>
    %121 = arith.mulf %119, %120 : vector<16x128xf32>
    %122 = vector.broadcast %103 : vector<1x128xf32> to vector<16x128xf32>
    %123 = arith.addf %121, %122 : vector<16x128xf32>
    %124 = arith.truncf %123 : vector<16x128xf32> to vector<16x128xbf16>
    %c0_43 = arith.constant 0 : index
    %c0_44 = arith.constant 0 : index
    %125 = vector.load %arg7[%c0_43, %c0_44] : memref<128x128xbf16, #tpu.memory_space<vmem>>, vector<128x128xbf16>
    %cst_45 = arith.constant dense<0.000000e+00> : vector<16x128xf32>
    %126 = tpu.matmul %124, %125, %cst_45 {dimension_numbers = #tpu.dot_dimension_numbers<[1], [0], [0], [1], [0, 0, 1, 1], [], []>} : vector<16x128xbf16>, vector<128x128xbf16>, vector<16x128xf32> -> vector<16x128xf32>
    %c0_46 = arith.constant 0 : index
    %c0_47 = arith.constant 0 : index
    %127 = vector.load %arg8[%c0_46, %c0_47] : memref<1x128xf32, #tpu.memory_space<vmem>>, vector<1x128xf32>
    %128 = vector.broadcast %127 : vector<1x128xf32> to vector<16x128xf32>
    %129 = arith.addf %126, %128 : vector<16x128xf32>
    %130 = arith.addf %123, %129 : vector<16x128xf32>
    %c0_48 = arith.constant 0 : index
    %c0_49 = arith.constant 0 : index
    %131 = vector.load %arg9[%c0_48, %c0_49] : memref<1x128xf32, #tpu.memory_space<vmem>>, vector<1x128xf32>
    %c0_50 = arith.constant 0 : index
    %c0_51 = arith.constant 0 : index
    %132 = vector.load %arg10[%c0_50, %c0_51] : memref<1x128xf32, #tpu.memory_space<vmem>>, vector<1x128xf32>
    %cst_52 = arith.constant dense<0.000000e+00> : vector<16xf32>
    %133 = vector.multi_reduction <add>, %130, %cst_52 [1] : vector<16x128xf32> to vector<16xf32>
    %134 = vector.shape_cast %133 : vector<16xf32> to vector<16x1xf32>
    %cst_53 = arith.constant 1.280000e+02 : f32
    %135 = vector.broadcast %cst_53 : f32 to vector<16x1xf32>
    %136 = arith.divf %134, %135 : vector<16x1xf32>
    %137 = vector.broadcast %136 : vector<16x1xf32> to vector<16x128xf32>
    %138 = arith.subf %130, %137 : vector<16x128xf32>
    %139 = arith.mulf %138, %138 : vector<16x128xf32>
    %cst_54 = arith.constant dense<0.000000e+00> : vector<16xf32>
    %140 = vector.multi_reduction <add>, %139, %cst_54 [1] : vector<16x128xf32> to vector<16xf32>
    %141 = vector.shape_cast %140 : vector<16xf32> to vector<16x1xf32>
    %cst_55 = arith.constant 1.280000e+02 : f32
    %142 = vector.broadcast %cst_55 : f32 to vector<16x1xf32>
    %143 = arith.divf %141, %142 : vector<16x1xf32>
    %cst_56 = arith.constant 9.99999974E-6 : f32
    %144 = vector.broadcast %cst_56 : f32 to vector<16x1xf32>
    %145 = arith.addf %143, %144 : vector<16x1xf32>
    %146 = math.rsqrt %145 : vector<16x1xf32>
    %147 = vector.broadcast %146 : vector<16x1xf32> to vector<16x128xf32>
    %148 = arith.mulf %138, %147 : vector<16x128xf32>
    %149 = vector.broadcast %131 : vector<1x128xf32> to vector<16x128xf32>
    %150 = arith.mulf %148, %149 : vector<16x128xf32>
    %151 = vector.broadcast %132 : vector<1x128xf32> to vector<16x128xf32>
    %152 = arith.addf %150, %151 : vector<16x128xf32>
    %153 = vector.shape_cast %152 : vector<16x128xf32> to vector<2x8x128xf32>
    %c0_57 = arith.constant 0 : index
    %c0_58 = arith.constant 0 : index
    %c0_59 = arith.constant 0 : index
    %154 = vector.load %arg11[%c0_57, %c0_58, %c0_59] : memref<2x8x128xf32, #tpu.memory_space<vmem>>, vector<2x8x128xf32>
    tpu.vector_store %arg11[%c0_57, %c0_58, %c0_59], %153 {strides = array<i32>} : memref<2x8x128xf32, #tpu.memory_space<vmem>>, vector<2x8x128xf32>,
    return
  }
  func.func @transform_0(%arg0: i32) -> (i32, i32, i32) {
    %c0_i32 = arith.constant 0 : i32
    %c0_i32_0 = arith.constant 0 : i32
    %c0_i32_1 = arith.constant 0 : i32
    return %arg0, %c0_i32, %c0_i32_0 : i32, i32, i32
  }
  func.func @transform_1(%arg0: i32) -> (i32, i32) {
    %c0_i32 = arith.constant 0 : i32
    %c0_i32_0 = arith.constant 0 : i32
    %c0_i32_1 = arith.constant 0 : i32
    return %c0_i32, %c0_i32_0 : i32, i32
  }
  func.func @transform_2(%arg0: i32) -> (i32, i32) {
    %c0_i32 = arith.constant 0 : i32
    %c0_i32_0 = arith.constant 0 : i32
    %c0_i32_1 = arith.constant 0 : i32
    return %c0_i32, %c0_i32_0 : i32, i32
  }
  func.func @transform_3(%arg0: i32) -> (i32, i32) {
    %c0_i32 = arith.constant 0 : i32
    %c0_i32_0 = arith.constant 0 : i32
    %c0_i32_1 = arith.constant 0 : i32
    return %c0_i32, %c0_i32_0 : i32, i32
  }
  func.func @transform_4(%arg0: i32) -> (i32, i32) {
    %c0_i32 = arith.constant 0 : i32
    %c0_i32_0 = arith.constant 0 : i32
    %c0_i32_1 = arith.constant 0 : i32
    return %c0_i32, %c0_i32_0 : i32, i32
  }
  func.func @transform_5(%arg0: i32) -> (i32, i32) {
    %c0_i32 = arith.constant 0 : i32
    %c0_i32_0 = arith.constant 0 : i32
    %c0_i32_1 = arith.constant 0 : i32
    return %c0_i32, %c0_i32_0 : i32, i32
  }
  func.func @transform_6(%arg0: i32) -> (i32, i32) {
    %c0_i32 = arith.constant 0 : i32
    %c0_i32_0 = arith.constant 0 : i32
    %c0_i32_1 = arith.constant 0 : i32
    return %c0_i32, %c0_i32_0 : i32, i32
  }
  func.func @transform_7(%arg0: i32) -> (i32, i32) {
    %c0_i32 = arith.constant 0 : i32
    %c0_i32_0 = arith.constant 0 : i32
    %c0_i32_1 = arith.constant 0 : i32
    return %c0_i32, %c0_i32_0 : i32, i32
  }
  func.func @transform_8(%arg0: i32) -> (i32, i32) {
    %c0_i32 = arith.constant 0 : i32
    %c0_i32_0 = arith.constant 0 : i32
    %c0_i32_1 = arith.constant 0 : i32
    return %c0_i32, %c0_i32_0 : i32, i32
  }
  func.func @transform_9(%arg0: i32) -> (i32, i32) {
    %c0_i32 = arith.constant 0 : i32
    %c0_i32_0 = arith.constant 0 : i32
    %c0_i32_1 = arith.constant 0 : i32
    return %c0_i32, %c0_i32_0 : i32, i32
  }
  func.func @transform_10(%arg0: i32) -> (i32, i32, i32) {
    %c0_i32 = arith.constant 0 : i32
    %c0_i32_0 = arith.constant 0 : i32
    %c0_i32_1 = arith.constant 0 : i32
    return %arg0, %c0_i32, %c0_i32_0 : i32, i32, i32
  }
}

</mosaic_0001>

<llo_original>
// kernel: forward.5
$region0: #{forward.5}
  #allocation0 [shape = 'u32[]', space=smem, size = 0x4, offset = 0x4, fixed_abs, tag = 'smem constant byte address 0x4 - core index']
  #allocation1 [shape = 'u32[72,128]{1,0:T(1,128)}', space=vmem, size = 0x9000, scoped, tag = 'internal scratch']
  %s0 = inlined_call_operand.vmem [shape: f32[2,8,128], index: 0, kind: input, shape index: {}]
  %s1 = inlined_call_operand.vmem [shape: bf16[128,128], index: 1, kind: input, shape index: {}]
  %s2 = inlined_call_operand.vmem [shape: bf16[128,128], index: 2, kind: input, shape index: {}]
  %s3 = inlined_call_operand.vmem [shape: bf16[128,128], index: 3, kind: input, shape index: {}]
  %s4 = inlined_call_operand.vmem [shape: f32[1,128], index: 4, kind: input, shape index: {}]
  %s5 = inlined_call_operand.vmem [shape: f32[1,128], index: 5, kind: input, shape index: {}]
  %s6 = inlined_call_operand.vmem [shape: bf16[128,128], index: 6, kind: input, shape index: {}]
  %s7 = inlined_call_operand.vmem [shape: f32[1,128], index: 7, kind: input, shape index: {}]
  %s8 = inlined_call_operand.vmem [shape: f32[1,128], index: 8, kind: input, shape index: {}]
  %s9 = inlined_call_operand.vmem [shape: f32[1,128], index: 9, kind: input, shape index: {}]
  %s10 = inlined_call_operand.hbm [shape: f32[2,8,128], index: 10, kind: output, shape index: {}]
  %s11 = sld [smem:[#allocation0]]
  $region50: #{forward.5} parent=0
    _
  %s13 = ssub.s32 1, %s11
  %s14 = scalar_select 0, %s13, %s11
  $region1: #{forward.5} parent=0
    #allocation2 [shape = 'u8[8192]{0}', space=vmem, size = 0x2000, scoped, tag = 'output window, operand 0, single buffered']
    #allocation3 [shape = 's32[1]{0}', space=sflag, size = 0x4, scoped, tag = 'scoped memory for forward.5']
    %15 = vsyncpa [#allocation3], 0
    // Predicated region
    $region2: #{forward.5} parent=1 // pred_check
      _
    $region3: #{forward.5} parent=1 // pred_check_branch
      %17 = sbr.rel (0) target = $region5
    $region4: #{forward.5} parent=1 // pred_region
      _
    $region5: #{forward.5} parent=1 // pred_fallthru
      _
    // Predicated region
    $region6: #{forward.5} parent=1 // pred_check
      _
    $region7: #{forward.5} parent=1 // pred_check_branch
      %19 = sbr.rel (0) target = $region9
    $region8: #{forward.5} parent=1 // pred_region
      _
    $region9: #{forward.5} parent=1 // pred_fallthru
      _
    // Predicated region
    $region10: #{forward.5} parent=1 // pred_check
      _
    $region11: #{forward.5} parent=1 // pred_check_branch
      %21 = sbr.rel (0) target = $region13
    $region12: #{forward.5} parent=1 // pred_region
      _
    $region13: #{forward.5} parent=1 // pred_fallthru
      _
    // Predicated region
    $region14: #{forward.5} parent=1 // pred_check
      _
    $region15: #{forward.5} parent=1 // pred_check_branch
      %23 = sbr.rel (0) target = $region17
    $region16: #{forward.5} parent=1 // pred_region
      _
    $region17: #{forward.5} parent=1 // pred_fallthru
      _
    // Predicated region
    $region18: #{forward.5} parent=1 // pred_check
      _
    $region19: #{forward.5} parent=1 // pred_check_branch
      %25 = sbr.rel (0) target = $region21
    $region20: #{forward.5} parent=1 // pred_region
      _
    $region21: #{forward.5} parent=1 // pred_fallthru
      _
    // Predicated region
    $region22: #{forward.5} parent=1 // pred_check
      _
    $region23: #{forward.5} parent=1 // pred_check_branch
      %27 = sbr.rel (0) target = $region25
    $region24: #{forward.5} parent=1 // pred_region
      _
    $region25: #{forward.5} parent=1 // pred_fallthru
      _
    // Predicated region
    $region26: #{forward.5} parent=1 // pred_check
      _
    $region27: #{forward.5} parent=1 // pred_check_branch
      %29 = sbr.rel (0) target = $region29
    $region28: #{forward.5} parent=1 // pred_region
      _
    $region29: #{forward.5} parent=1 // pred_fallthru
      _
    // Predicated region
    $region30: #{forward.5} parent=1 // pred_check
      _
    $region31: #{forward.5} parent=1 // pred_check_branch
      %31 = sbr.rel (0) target = $region33
    $region32: #{forward.5} parent=1 // pred_region
      _
    $region33: #{forward.5} parent=1 // pred_fallthru
      _
    // Predicated region
    $region34: #{forward.5} parent=1 // pred_check
      _
    $region35: #{forward.5} parent=1 // pred_check_branch
      %33 = sbr.rel (0) target = $region37
    $region36: #{forward.5} parent=1 // pred_region
      _
    $region37: #{forward.5} parent=1 // pred_fallthru
      _
    // Predicated region
    $region38: #{forward.5} parent=1 // pred_check
      _
    $region39: #{forward.5} parent=1 // pred_check_branch
      %35 = sbr.rel (0) target = $region41
    $region40: #{forward.5} parent=1 // pred_region
      _
    $region41: #{forward.5} parent=1 // pred_fallthru
      _
    %v37 = vld [vmem:[%s0] sm:$0xff]
    %v38 = vld [vmem:[%s0 + $0x8] sm:$0xff]
    %v39 = vpack.c.bf16 %v38, %v37
    %v40 = vld [vmem:[%s1] sm:$0xf]
    %v41 = vld [vmem:[%s1 + $0x4] sm:$0xf]
    %v42 = vld [vmem:[%s1 + $0x8] sm:$0xf]
    %v43 = vld [vmem:[%s1 + $0xc] sm:$0xf]
    %v44 = vld [vmem:[%s1 + $0x10] sm:$0xf]
    %v45 = vld [vmem:[%s1 + $0x14] sm:$0xf]
    %v46 = vld [vmem:[%s1 + $0x18] sm:$0xf]
    %v47 = vld [vmem:[%s1 + $0x1c] sm:$0xf]
    %v48 = vld [vmem:[%s1 + $0x20] sm:$0xf]
    %v49 = vld [vmem:[%s1 + $0x24] sm:$0xf]
    %v50 = vld [vmem:[%s1 + $0x28] sm:$0xf]
    %v51 = vld [vmem:[%s1 + $0x2c] sm:$0xf]
    %v52 = vld [vmem:[%s1 + $0x30] sm:$0xf]
    %v53 = vld [vmem:[%s1 + $0x34] sm:$0xf]
    %v54 = vld [vmem:[%s1 + $0x38] sm:$0xf]
    %v55 = vld [vmem:[%s1 + $0x3c] sm:$0xf]
    %v72 = vunpack.c.l.b16 %v40
    %v73 = vunpack.c.l.b16 %v41
    %v74 = vunpack.c.l.b16 %v42
    %v75 = vunpack.c.l.b16 %v43
    %v76 = vunpack.c.l.b16 %v44
    %v77 = vunpack.c.l.b16 %v45
    %v78 = vunpack.c.l.b16 %v46
    %v79 = vunpack.c.l.b16 %v47
    %v80 = vunpack.c.l.b16 %v48
    %v81 = vunpack.c.l.b16 %v49
    %v82 = vunpack.c.l.b16 %v50
    %v83 = vunpack.c.l.b16 %v51
    %v84 = vunpack.c.l.b16 %v52
    %v85 = vunpack.c.l.b16 %v53
    %v86 = vunpack.c.l.b16 %v54
    %v87 = vunpack.c.l.b16 %v55
    %v88 = vpack.c.b16 %v73, %v72
    %v89 = vpack.c.b16 %v75, %v74
    %v90 = vpack.c.b16 %v77, %v76
    %v91 = vpack.c.b16 %v79, %v78
    %v92 = vpack.c.b16 %v81, %v80
    %v93 = vpack.c.b16 %v83, %v82
    %v94 = vpack.c.b16 %v85, %v84
    %v95 = vpack.c.b16 %v87, %v86
    %104 = vmatpush.bf16.msra.mxu0 %v95
    %105 = vmatpush.bf16.msra.mxu0 %v94
    %106 = vmatpush.bf16.msra.mxu0 %v93
    %107 = vmatpush.bf16.msra.mxu0 %v92
    %108 = vmatpush.bf16.msra.mxu0 %v91
    %109 = vmatpush.bf16.msra.mxu0 %v90
    %110 = vmatpush.bf16.msra.mxu0 %v89
    %111 = vmatpush.bf16.msra.mxu0 %v88
    %112 = vmatmul.bf16.gmra.mxu0 %v39
    %v113 = vpop.f32.mrf.mxu0
    %v114 = vadd.f32 0.0, %v113
    %v115 = vpop.f32.mrf.mxu0
    %v116 = vadd.f32 0.0, %v115
    %117 = vdwg.mxu0
    %v118 = vld [vmem:[%s2] sm:$0xf]
    %v119 = vld [vmem:[%s2 + $0x4] sm:$0xf]
    %v120 = vld [vmem:[%s2 + $0x8] sm:$0xf]
    %v121 = vld [vmem:[%s2 + $0xc] sm:$0xf]
    %v122 = vld [vmem:[%s2 + $0x10] sm:$0xf]
    %v123 = vld [vmem:[%s2 + $0x14] sm:$0xf]
    %v124 = vld [vmem:[%s2 + $0x18] sm:$0xf]
    %v125 = vld [vmem:[%s2 + $0x1c] sm:$0xf]
    %v126 = vld [vmem:[%s2 + $0x20] sm:$0xf]
    %v127 = vld [vmem:[%s2 + $0x24] sm:$0xf]
    %v128 = vld [vmem:[%s2 + $0x28] sm:$0xf]
    %v129 = vld [vmem:[%s2 + $0x2c] sm:$0xf]
    %v130 = vld [vmem:[%s2 + $0x30] sm:$0xf]
    %v131 = vld [vmem:[%s2 + $0x34] sm:$0xf]
    %v132 = vld [vmem:[%s2 + $0x38] sm:$0xf]
    %v133 = vld [vmem:[%s2 + $0x3c] sm:$0xf]
    %v150 = vunpack.c.l.b16 %v118
    %v151 = vunpack.c.l.b16 %v119
    %v152 = vunpack.c.l.b16 %v120
    %v153 = vunpack.c.l.b16 %v121
    %v154 = vunpack.c.l.b16 %v122
    %v155 = vunpack.c.l.b16 %v123
    %v156 = vunpack.c.l.b16 %v124
    %v157 = vunpack.c.l.b16 %v125
    %v158 = vunpack.c.l.b16 %v126
    %v159 = vunpack.c.l.b16 %v127
    %v160 = vunpack.c.l.b16 %v128
    %v161 = vunpack.c.l.b16 %v129
    %v162 = vunpack.c.l.b16 %v130
    %v163 = vunpack.c.l.b16 %v131
    %v164 = vunpack.c.l.b16 %v132
    %v165 = vunpack.c.l.b16 %v133
    %v166 = vpack.c.b16 %v151, %v150
    %v167 = vpack.c.b16 %v153, %v152
    %v168 = vpack.c.b16 %v155, %v154
    %v169 = vpack.c.b16 %v157, %v156
    %v170 = vpack.c.b16 %v159, %v158
    %v171 = vpack.c.b16 %v161, %v160
    %v172 = vpack.c.b16 %v163, %v162
    %v173 = vpack.c.b16 %v165, %v164
    %182 = vmatpush.bf16.msra.mxu0 %v173
    %183 = vmatpush.bf16.msra.mxu0 %v172
    %184 = vmatpush.bf16.msra.mxu0 %v171
    %185 = vmatpush.bf16.msra.mxu0 %v170
    %186 = vmatpush.bf16.msra.mxu0 %v169
    %187 = vmatpush.bf16.msra.mxu0 %v168
    %188 = vmatpush.bf16.msra.mxu0 %v167
    %189 = vmatpush.bf16.msra.mxu0 %v166
    %190 = vmatmul.bf16.gmra.mxu0 %v39
    %v191 = vpop.f32.mrf.mxu0
    %v192 = vadd.f32 0.0, %v191
    %v193 = vpop.f32.mrf.mxu0
    %v194 = vadd.f32 0.0, %v193
    %195 = vdwg.mxu0
    %v196 = vpack.c.bf16 %v114, %v114
    %v197 = vpack.c.bf16 %v116, %v116
    %v198 = vpack.c.bf16 %v192, %v192
    %v199 = vpack.c.bf16 %v194, %v194
    %v200 = vld [vmem:[%s3] sm:$0xf]
    %v201 = vld [vmem:[%s3 + $0x4] sm:$0xf]
    %v202 = vld [vmem:[%s3 + $0x8] sm:$0xf]
    %v203 = vld [vmem:[%s3 + $0xc] sm:$0xf]
    %v204 = vld [vmem:[%s3 + $0x10] sm:$0xf]
    %v205 = vld [vmem:[%s3 + $0x14] sm:$0xf]
    %v206 = vld [vmem:[%s3 + $0x18] sm:$0xf]
    %v207 = vld [vmem:[%s3 + $0x1c] sm:$0xf]
    %v208 = vld [vmem:[%s3 + $0x20] sm:$0xf]
    %v209 = vld [vmem:[%s3 + $0x24] sm:$0xf]
    %v210 = vld [vmem:[%s3 + $0x28] sm:$0xf]
    %v211 = vld [vmem:[%s3 + $0x2c] sm:$0xf]
    %v212 = vld [vmem:[%s3 + $0x30] sm:$0xf]
    %v213 = vld [vmem:[%s3 + $0x34] sm:$0xf]
    %v214 = vld [vmem:[%s3 + $0x38] sm:$0xf]
    %v215 = vld [vmem:[%s3 + $0x3c] sm:$0xf]
    %vm216 = vcmask 261120
    %v218 = vsel %vm216, %v196, 0
    %v221 = vsel %vm216, %v198, 0
    %223 = vmatpush.bf16.xpose.msra.mxu0 0
    %224 = vmatpush.bf16.xpose.msra.mxu0 0
    %225 = vmatpush.bf16.xpose.msra.mxu0 0
    %226 = vmatpush.bf16.xpose.msra.mxu0 0
    %227 = vmatpush.bf16.xpose.msra.mxu0 0
    %228 = vmatpush.bf16.xpose.msra.mxu0 0
    %229 = vmatpush.bf16.xpose.msra.mxu0 0
    %230 = vmatpush.bf16.xpose.msra.mxu0 %v221
    %231 = vmatmul.bf16.gmra.mxu0 %v218
    %v232 = vpop.f32.mrf.mxu0
    %v233 = vadd.f32 0.0, %v232
    %v234 = vpop.f32.mrf.mxu0
    %235 = vdwg.mxu0
    %v237 = vsel %vm216, %v197, 0
    %v240 = vsel %vm216, %v199, 0
    %242 = vmatpush.bf16.xpose.msra.mxu0 0
    %243 = vmatpush.bf16.xpose.msra.mxu0 0
    %244 = vmatpush.bf16.xpose.msra.mxu0 0
    %245 = vmatpush.bf16.xpose.msra.mxu0 0
    %246 = vmatpush.bf16.xpose.msra.mxu0 0
    %247 = vmatpush.bf16.xpose.msra.mxu0 0
    %248 = vmatpush.bf16.xpose.msra.mxu0 0
    %249 = vmatpush.bf16.xpose.msra.mxu0 %v240
    %250 = vmatmul.bf16.gmra.mxu0 %v237
    %v251 = vpop.f32.mrf.mxu0
    %v252 = vadd.f32 0.0, %v251
    %v253 = vpop.f32.mrf.mxu0
    %254 = vdwg.mxu0
    %v255 = vmul.f32 %v233, 0.17677669
    %v256 = vmul.f32 %v252, 0.17677669
    %vm257 = vcmask 64512
    %v258 = vsel %vm257, %v255, -inf
    %259 = vmax.xlane.f32.xlu0 %v258
    %v260 = vpop.xlane.xlu0 %259
    %v261 = vsel %vm257, %v256, -inf
    %262 = vmax.xlane.f32.xlu0 %v261
    %v263 = vpop.xlane.xlu0 %262
    %v264 = vsub.f32 %v255, %v260
    %v265 = vsub.f32 %v256, %v263
    %v266 = vmul.f32 %v264, 1.442695
    %v267 = vpow.pop %v266
    %v268 = vmul.f32 %v265, 1.442695
    %v269 = vpow.pop %v268
    %v270 = vsel %vm257, %v267, 0.0
    %271 = vadd.xlane.f32.xlu0 %v270
    %v272 = vpop.xlane.xlu0 %271
    %v273 = vsel %vm257, %v269, 0.0
    %274 = vadd.xlane.f32.xlu0 %v273
    %v275 = vpop.xlane.xlu0 %274
    %v276 = vrcp.pop %v272
    %v277 = vmul.f32 %v272, %v276
    %v278 = vsub.f32 1.0, %v277
    %v279 = vmul.f32 %v276, %v278
    %v280 = vadd.f32 %v276, %v279
    %vm281 = vweird.f32 %v272
    %vm282 = vweird.f32 %v276
    %vm283 = vmor %vm281, %vm282
    %v284 = vsel %vm283, %v276, %v280
    %v285 = vand.u32 2147483647, %v272
    %vm286 = vcmp.eq.f32.partialorder %v285, 8.507059e+37
    %v287 = vand.u32 %v272, 2147483648
    %v288 = vor.u32 1.1754944e-38, %v287
    %v289 = vsel %vm286, %v288, %v284
    %v290 = vmul.f32 %v267, %v289
    %v291 = vrcp.pop %v275
    %v292 = vmul.f32 %v275, %v291
    %v293 = vsub.f32 1.0, %v292
    %v294 = vmul.f32 %v291, %v293
    %v295 = vadd.f32 %v291, %v294
    %vm296 = vweird.f32 %v275
    %vm297 = vweird.f32 %v291
    %vm298 = vmor %vm296, %vm297
    %v299 = vsel %vm298, %v291, %v295
    %v300 = vand.u32 2147483647, %v275
    %vm301 = vcmp.eq.f32.partialorder %v300, 8.507059e+37
    %v302 = vand.u32 %v275, 2147483648
    %v303 = vor.u32 1.1754944e-38, %v302
    %v304 = vsel %vm301, %v303, %v299
    %v305 = vmul.f32 %v269, %v304
    %v306 = vpack.c.bf16 %v290, %v290
    %v307 = vpack.c.bf16 %v305, %v305
    %v309 = vsel %vm257, %v306, 0
    %vm311 = vcmask 1043456
    %v312 = vsel %vm311, %v198, 0
    %314 = vmatpush.bf16.msra.mxu0 0
    %315 = vmatpush.bf16.msra.mxu0 0
    %316 = vmatpush.bf16.msra.mxu0 0
    %317 = vmatpush.bf16.msra.mxu0 0
    %318 = vmatpush.bf16.msra.mxu0 0
    %319 = vmatpush.bf16.msra.mxu0 0
    %320 = vmatpush.bf16.msra.mxu0 0
    %321 = vmatpush.bf16.msra.mxu0 %v312
    %322 = vmatmul.bf16.gmra.mxu0 %v309
    %v323 = vpop.f32.mrf.mxu0
    %v324 = vadd.f32 0.0, %v323
    %v325 = vpop.f32.mrf.mxu0
    %326 = vdwg.mxu0
    %v328 = vsel %vm257, %v307, 0
    %v330 = vsel %vm311, %v199, 0
    %332 = vmatpush.bf16.msra.mxu0 0
    %333 = vmatpush.bf16.msra.mxu0 0
    %334 = vmatpush.bf16.msra.mxu0 0
    %335 = vmatpush.bf16.msra.mxu0 0
    %336 = vmatpush.bf16.msra.mxu0 0
    %337 = vmatpush.bf16.msra.mxu0 0
    %338 = vmatpush.bf16.msra.mxu0 0
    %339 = vmatpush.bf16.msra.mxu0 %v330
    %340 = vmatmul.bf16.gmra.mxu0 %v328
    %v341 = vpop.f32.mrf.mxu0
    %v342 = vadd.f32 0.0, %v341
    %v343 = vpop.f32.mrf.mxu0
    %344 = vdwg.mxu0
    %v345 = vpack.c.bf16 %v342, %v324
    %v347 = vunpack.c.l.b16 %v196
    %v348 = vpack.c.b16 %v347, %v347
    %349 = vrot.lane.b32.xlu0 %v348, 96
    %v350 = vpop.permute.xlu0 %349
    %v352 = vunpack.c.l.b16 %v198
    %v353 = vpack.c.b16 %v352, %v352
    %354 = vrot.lane.b32.xlu0 %v353, 96
    %v355 = vpop.permute.xlu0 %354
    %v357 = vsel %vm216, %v350, 0
    %v360 = vsel %vm216, %v355, 0
    %362 = vmatpush.bf16.xpose.msra.mxu0 0
    %363 = vmatpush.bf16.xpose.msra.mxu0 0
    %364 = vmatpush.bf16.xpose.msra.mxu0 0
    %365 = vmatpush.bf16.xpose.msra.mxu0 0
    %366 = vmatpush.bf16.xpose.msra.mxu0 0
    %367 = vmatpush.bf16.xpose.msra.mxu0 0
    %368 = vmatpush.bf16.xpose.msra.mxu0 0
    %369 = vmatpush.bf16.xpose.msra.mxu0 %v360
    %370 = vmatmul.bf16.gmra.mxu0 %v357
    %v371 = vpop.f32.mrf.mxu0
    %v372 = vadd.f32 0.0, %v371
    %v373 = vpop.f32.mrf.mxu0
    %374 = vdwg.mxu0
    %v376 = vunpack.c.l.b16 %v197
    %v377 = vpack.c.b16 %v376, %v376
    %378 = vrot.lane.b32.xlu0 %v377, 96
    %v379 = vpop.permute.xlu0 %378
    %v381 = vunpack.c.l.b16 %v199
    %v382 = vpack.c.b16 %v381, %v381
    %383 = vrot.lane.b32.xlu0 %v382, 96
    %v384 = vpop.permute.xlu0 %383
    %v386 = vsel %vm216, %v379, 0
    %v389 = vsel %vm216, %v384, 0
    %391 = vmatpush.bf16.xpose.msra.mxu0 0
    %392 = vmatpush.bf16.xpose.msra.mxu0 0
    %393 = vmatpush.bf16.xpose.msra.mxu0 0
    %394 = vmatpush.bf16.xpose.msra.mxu0 0
    %395 = vmatpush.bf16.xpose.msra.mxu0 0
    %396 = vmatpush.bf16.xpose.msra.mxu0 0
    %397 = vmatpush.bf16.xpose.msra.mxu0 0
    %398 = vmatpush.bf16.xpose.msra.mxu0 %v389
    %399 = vmatmul.bf16.gmra.mxu0 %v386
    %v400 = vpop.f32.mrf.mxu0
    %v401 = vadd.f32 0.0, %v400
    %v402 = vpop.f32.mrf.mxu0
    %403 = vdwg.mxu0
    %v404 = vmul.f32 %v372, 0.17677669
    %v405 = vmul.f32 %v401, 0.17677669
    %v406 = vsel %vm257, %v404, -inf
    %407 = vmax.xlane.f32.xlu0 %v406
    %v408 = vpop.xlane.xlu0 %407
    %v409 = vsel %vm257, %v405, -inf
    %410 = vmax.xlane.f32.xlu0 %v409
    %v411 = vpop.xlane.xlu0 %410
    %v412 = vsub.f32 %v404, %v408
    %v413 = vsub.f32 %v405, %v411
    %v414 = vmul.f32 %v412, 1.442695
    %v415 = vpow.pop %v414
    %v416 = vmul.f32 %v413, 1.442695
    %v417 = vpow.pop %v416
    %v418 = vsel %vm257, %v415, 0.0
    %419 = vadd.xlane.f32.xlu0 %v418
    %v420 = vpop.xlane.xlu0 %419
    %v421 = vsel %vm257, %v417, 0.0
    %422 = vadd.xlane.f32.xlu0 %v421
    %v423 = vpop.xlane.xlu0 %422
    %v424 = vrcp.pop %v420
    %v425 = vmul.f32 %v420, %v424
    %v426 = vsub.f32 1.0, %v425
    %v427 = vmul.f32 %v424, %v426
    %v428 = vadd.f32 %v424, %v427
    %vm429 = vweird.f32 %v420
    %vm430 = vweird.f32 %v424
    %vm431 = vmor %vm429, %vm430
    %v432 = vsel %vm431, %v424, %v428
    %v433 = vand.u32 2147483647, %v420
    %vm434 = vcmp.eq.f32.partialorder %v433, 8.507059e+37
    %v435 = vand.u32 %v420, 2147483648
    %v436 = vor.u32 1.1754944e-38, %v435
    %v437 = vsel %vm434, %v436, %v432
    %v438 = vmul.f32 %v415, %v437
    %v439 = vrcp.pop %v423
    %v440 = vmul.f32 %v423, %v439
    %v441 = vsub.f32 1.0, %v440
    %v442 = vmul.f32 %v439, %v441
    %v443 = vadd.f32 %v439, %v442
    %vm444 = vweird.f32 %v423
    %vm445 = vweird.f32 %v439
    %vm446 = vmor %vm444, %vm445
    %v447 = vsel %vm446, %v439, %v443
    %v448 = vand.u32 2147483647, %v423
    %vm449 = vcmp.eq.f32.partialorder %v448, 8.507059e+37
    %v450 = vand.u32 %v423, 2147483648
    %v451 = vor.u32 1.1754944e-38, %v450
    %v452 = vsel %vm449, %v451, %v447
    %v453 = vmul.f32 %v417, %v452
    %v454 = vpack.c.bf16 %v438, %v438
    %v455 = vpack.c.bf16 %v453, %v453
    %v457 = vsel %vm257, %v454, 0
    %v459 = vsel %vm311, %v355, 0
    %461 = vmatpush.bf16.msra.mxu0 0
    %462 = vmatpush.bf16.msra.mxu0 0
    %463 = vmatpush.bf16.msra.mxu0 0
    %464 = vmatpush.bf16.msra.mxu0 0
    %465 = vmatpush.bf16.msra.mxu0 0
    %466 = vmatpush.bf16.msra.mxu0 0
    %467 = vmatpush.bf16.msra.mxu0 0
    %468 = vmatpush.bf16.msra.mxu0 %v459
    %469 = vmatmul.bf16.gmra.mxu0 %v457
    %v470 = vpop.f32.mrf.mxu0
    %v471 = vadd.f32 0.0, %v470
    %v472 = vpop.f32.mrf.mxu0
    %473 = vdwg.mxu0
    %v475 = vsel %vm257, %v455, 0
    %v477 = vsel %vm311, %v384, 0
    %479 = vmatpush.bf16.msra.mxu0 0
    %480 = vmatpush.bf16.msra.mxu0 0
    %481 = vmatpush.bf16.msra.mxu0 0
    %482 = vmatpush.bf16.msra.mxu0 0
    %483 = vmatpush.bf16.msra.mxu0 0
    %484 = vmatpush.bf16.msra.mxu0 0
    %485 = vmatpush.bf16.msra.mxu0 0
    %486 = vmatpush.bf16.msra.mxu0 %v477
    %487 = vmatmul.bf16.gmra.mxu0 %v475
    %v488 = vpop.f32.mrf.mxu0
    %v489 = vadd.f32 0.0, %v488
    %v490 = vpop.f32.mrf.mxu0
    %491 = vdwg.mxu0
    %v492 = vpack.c.bf16 %v489, %v471
    %v497 = vunpack.c.l.b16 %v204
    %v498 = vunpack.c.l.b16 %v205
    %v499 = vunpack.c.l.b16 %v206
    %v500 = vunpack.c.l.b16 %v207
    %v501 = vpack.c.b16 %v498, %v497
    %v502 = vpack.c.b16 %v500, %v499
    %v506 = vsel %vm216, %v492, 0
    %508 = vmatpush.bf16.msra.mxu0 0
    %509 = vmatpush.bf16.msra.mxu0 0
    %510 = vmatpush.bf16.msra.mxu0 0
    %511 = vmatpush.bf16.msra.mxu0 0
    %512 = vmatpush.bf16.msra.mxu0 0
    %513 = vmatpush.bf16.msra.mxu0 0
    %514 = vmatpush.bf16.msra.mxu0 %v502
    %515 = vmatpush.bf16.msra.mxu0 %v501
    %516 = vmatmul.bf16.gmra.mxu0 %v506
    %v517 = vpop.f32.mrf.mxu0
    %v518 = vadd.f32 0.0, %v517
    %v519 = vpop.f32.mrf.mxu0
    %v520 = vadd.f32 0.0, %v519
    %521 = vdwg.mxu0
    %v526 = vunpack.c.l.b16 %v200
    %v527 = vunpack.c.l.b16 %v201
    %v528 = vunpack.c.l.b16 %v202
    %v529 = vunpack.c.l.b16 %v203
    %v530 = vpack.c.b16 %v527, %v526
    %v531 = vpack.c.b16 %v529, %v528
    %v535 = vsel %vm216, %v345, 0
    %537 = vmatpush.bf16.msra.mxu0 0
    %538 = vmatpush.bf16.msra.mxu0 0
    %539 = vmatpush.bf16.msra.mxu0 0
    %540 = vmatpush.bf16.msra.mxu0 0
    %541 = vmatpush.bf16.msra.mxu0 0
    %542 = vmatpush.bf16.msra.mxu0 0
    %543 = vmatpush.bf16.msra.mxu0 %v531
    %544 = vmatpush.bf16.msra.mxu0 %v530
    %545 = vmatmul.bf16.gmra.mxu0 %v535
    %v546 = vpop.f32.mrf.mxu0
    %v547 = vadd.f32 %v518, %v546
    %v548 = vpop.f32.mrf.mxu0
    %v549 = vadd.f32 %v520, %v548
    %550 = vdwg.mxu0
    %551 = vrot.lane.b32.xlu0 %v348, 64
    %v552 = vpop.permute.xlu0 %551
    %553 = vrot.lane.b32.xlu0 %v353, 64
    %v554 = vpop.permute.xlu0 %553
    %v556 = vsel %vm216, %v552, 0
    %v559 = vsel %vm216, %v554, 0
    %561 = vmatpush.bf16.xpose.msra.mxu0 0
    %562 = vmatpush.bf16.xpose.msra.mxu0 0
    %563 = vmatpush.bf16.xpose.msra.mxu0 0
    %564 = vmatpush.bf16.xpose.msra.mxu0 0
    %565 = vmatpush.bf16.xpose.msra.mxu0 0
    %566 = vmatpush.bf16.xpose.msra.mxu0 0
    %567 = vmatpush.bf16.xpose.msra.mxu0 0
    %568 = vmatpush.bf16.xpose.msra.mxu0 %v559
    %569 = vmatmul.bf16.gmra.mxu0 %v556
    %v570 = vpop.f32.mrf.mxu0
    %v571 = vadd.f32 0.0, %v570
    %v572 = vpop.f32.mrf.mxu0
    %573 = vdwg.mxu0
    %574 = vrot.lane.b32.xlu0 %v377, 64
    %v575 = vpop.permute.xlu0 %574
    %576 = vrot.lane.b32.xlu0 %v382, 64
    %v577 = vpop.permute.xlu0 %576
    %v579 = vsel %vm216, %v575, 0
    %v582 = vsel %vm216, %v577, 0
    %584 = vmatpush.bf16.xpose.msra.mxu0 0
    %585 = vmatpush.bf16.xpose.msra.mxu0 0
    %586 = vmatpush.bf16.xpose.msra.mxu0 0
    %587 = vmatpush.bf16.xpose.msra.mxu0 0
    %588 = vmatpush.bf16.xpose.msra.mxu0 0
    %589 = vmatpush.bf16.xpose.msra.mxu0 0
    %590 = vmatpush.bf16.xpose.msra.mxu0 0
    %591 = vmatpush.bf16.xpose.msra.mxu0 %v582
    %592 = vmatmul.bf16.gmra.mxu0 %v579
    %v593 = vpop.f32.mrf.mxu0
    %v594 = vadd.f32 0.0, %v593
    %v595 = vpop.f32.mrf.mxu0
    %596 = vdwg.mxu0
    %v597 = vmul.f32 %v571, 0.17677669
    %v598 = vmul.f32 %v594, 0.17677669
    %v599 = vsel %vm257, %v597, -inf
    %600 = vmax.xlane.f32.xlu0 %v599
    %v601 = vpop.xlane.xlu0 %600
    %v602 = vsel %vm257, %v598, -inf
    %603 = vmax.xlane.f32.xlu0 %v602
    %v604 = vpop.xlane.xlu0 %603
    %v605 = vsub.f32 %v597, %v601
    %v606 = vsub.f32 %v598, %v604
    %v607 = vmul.f32 %v605, 1.442695
    %v608 = vpow.pop %v607
    %v609 = vmul.f32 %v606, 1.442695
    %v610 = vpow.pop %v609
    %v611 = vsel %vm257, %v608, 0.0
    %612 = vadd.xlane.f32.xlu0 %v611
    %v613 = vpop.xlane.xlu0 %612
    %v614 = vsel %vm257, %v610, 0.0
    %615 = vadd.xlane.f32.xlu0 %v614
    %v616 = vpop.xlane.xlu0 %615
    %v617 = vrcp.pop %v613
    %v618 = vmul.f32 %v613, %v617
    %v619 = vsub.f32 1.0, %v618
    %v620 = vmul.f32 %v617, %v619
    %v621 = vadd.f32 %v617, %v620
    %vm622 = vweird.f32 %v613
    %vm623 = vweird.f32 %v617
    %vm624 = vmor %vm622, %vm623
    %v625 = vsel %vm624, %v617, %v621
    %v626 = vand.u32 2147483647, %v613
    %vm627 = vcmp.eq.f32.partialorder %v626, 8.507059e+37
    %v628 = vand.u32 %v613, 2147483648
    %v629 = vor.u32 1.1754944e-38, %v628
    %v630 = vsel %vm627, %v629, %v625
    %v631 = vmul.f32 %v608, %v630
    %v632 = vrcp.pop %v616
    %v633 = vmul.f32 %v616, %v632
    %v634 = vsub.f32 1.0, %v633
    %v635 = vmul.f32 %v632, %v634
    %v636 = vadd.f32 %v632, %v635
    %vm637 = vweird.f32 %v616
    %vm638 = vweird.f32 %v632
    %vm639 = vmor %vm637, %vm638
    %v640 = vsel %vm639, %v632, %v636
    %v641 = vand.u32 2147483647, %v616
    %vm642 = vcmp.eq.f32.partialorder %v641, 8.507059e+37
    %v643 = vand.u32 %v616, 2147483648
    %v644 = vor.u32 1.1754944e-38, %v643
    %v645 = vsel %vm642, %v644, %v640
    %v646 = vmul.f32 %v610, %v645
    %v647 = vpack.c.bf16 %v631, %v631
    %v648 = vpack.c.bf16 %v646, %v646
    %v650 = vsel %vm257, %v647, 0
    %v652 = vsel %vm311, %v554, 0
    %654 = vmatpush.bf16.msra.mxu0 0
    %655 = vmatpush.bf16.msra.mxu0 0
    %656 = vmatpush.bf16.msra.mxu0 0
    %657 = vmatpush.bf16.msra.mxu0 0
    %658 = vmatpush.bf16.msra.mxu0 0
    %659 = vmatpush.bf16.msra.mxu0 0
    %660 = vmatpush.bf16.msra.mxu0 0
    %661 = vmatpush.bf16.msra.mxu0 %v652
    %662 = vmatmul.bf16.gmra.mxu0 %v650
    %v663 = vpop.f32.mrf.mxu0
    %v664 = vadd.f32 0.0, %v663
    %v665 = vpop.f32.mrf.mxu0
    %666 = vdwg.mxu0
    %v668 = vsel %vm257, %v648, 0
    %v670 = vsel %vm311, %v577, 0
    %672 = vmatpush.bf16.msra.mxu0 0
    %673 = vmatpush.bf16.msra.mxu0 0
    %674 = vmatpush.bf16.msra.mxu0 0
    %675 = vmatpush.bf16.msra.mxu0 0
    %676 = vmatpush.bf16.msra.mxu0 0
    %677 = vmatpush.bf16.msra.mxu0 0
    %678 = vmatpush.bf16.msra.mxu0 0
    %679 = vmatpush.bf16.msra.mxu0 %v670
    %680 = vmatmul.bf16.gmra.mxu0 %v668
    %v681 = vpop.f32.mrf.mxu0
    %v682 = vadd.f32 0.0, %v681
    %v683 = vpop.f32.mrf.mxu0
    %684 = vdwg.mxu0
    %v685 = vpack.c.bf16 %v682, %v664
    %v690 = vunpack.c.l.b16 %v208
    %v691 = vunpack.c.l.b16 %v209
    %v692 = vunpack.c.l.b16 %v210
    %v693 = vunpack.c.l.b16 %v211
    %v694 = vpack.c.b16 %v691, %v690
    %v695 = vpack.c.b16 %v693, %v692
    %v699 = vsel %vm216, %v685, 0
    %701 = vmatpush.bf16.msra.mxu0 0
    %702 = vmatpush.bf16.msra.mxu0 0
    %703 = vmatpush.bf16.msra.mxu0 0
    %704 = vmatpush.bf16.msra.mxu0 0
    %705 = vmatpush.bf16.msra.mxu0 0
    %706 = vmatpush.bf16.msra.mxu0 0
    %707 = vmatpush.bf16.msra.mxu0 %v695
    %708 = vmatpush.bf16.msra.mxu0 %v694
    %709 = vmatmul.bf16.gmra.mxu0 %v699
    %v710 = vpop.f32.mrf.mxu0
    %v711 = vadd.f32 0.0, %v710
    %v712 = vpop.f32.mrf.mxu0
    %v713 = vadd.f32 0.0, %v712
    %714 = vdwg.mxu0
    %v715 = vadd.f32 %v547, %v711
    %v716 = vadd.f32 %v549, %v713
    %717 = vrot.lane.b32.xlu0 %v348, 32
    %v718 = vpop.permute.xlu0 %717
    %719 = vrot.lane.b32.xlu0 %v353, 32
    %v720 = vpop.permute.xlu0 %719
    %v722 = vsel %vm216, %v718, 0
    %v725 = vsel %vm216, %v720, 0
    %727 = vmatpush.bf16.xpose.msra.mxu0 0
    %728 = vmatpush.bf16.xpose.msra.mxu0 0
    %729 = vmatpush.bf16.xpose.msra.mxu0 0
    %730 = vmatpush.bf16.xpose.msra.mxu0 0
    %731 = vmatpush.bf16.xpose.msra.mxu0 0
    %732 = vmatpush.bf16.xpose.msra.mxu0 0
    %733 = vmatpush.bf16.xpose.msra.mxu0 0
    %734 = vmatpush.bf16.xpose.msra.mxu0 %v725
    %735 = vmatmul.bf16.gmra.mxu0 %v722
    %v736 = vpop.f32.mrf.mxu0
    %v737 = vadd.f32 0.0, %v736
    %v738 = vpop.f32.mrf.mxu0
    %739 = vdwg.mxu0
    %740 = vrot.lane.b32.xlu0 %v377, 32
    %v741 = vpop.permute.xlu0 %740
    %742 = vrot.lane.b32.xlu0 %v382, 32
    %v743 = vpop.permute.xlu0 %742
    %v745 = vsel %vm216, %v741, 0
    %v748 = vsel %vm216, %v743, 0
    %750 = vmatpush.bf16.xpose.msra.mxu0 0
    %751 = vmatpush.bf16.xpose.msra.mxu0 0
    %752 = vmatpush.bf16.xpose.msra.mxu0 0
    %753 = vmatpush.bf16.xpose.msra.mxu0 0
    %754 = vmatpush.bf16.xpose.msra.mxu0 0
    %755 = vmatpush.bf16.xpose.msra.mxu0 0
    %756 = vmatpush.bf16.xpose.msra.mxu0 0
    %757 = vmatpush.bf16.xpose.msra.mxu0 %v748
    %758 = vmatmul.bf16.gmra.mxu0 %v745
    %v759 = vpop.f32.mrf.mxu0
    %v760 = vadd.f32 0.0, %v759
    %v761 = vpop.f32.mrf.mxu0
    %762 = vdwg.mxu0
    %v763 = vmul.f32 %v737, 0.17677669
    %v764 = vmul.f32 %v760, 0.17677669
    %v765 = vsel %vm257, %v763, -inf
    %766 = vmax.xlane.f32.xlu0 %v765
    %v767 = vpop.xlane.xlu0 %766
    %v768 = vsel %vm257, %v764, -inf
    %769 = vmax.xlane.f32.xlu0 %v768
    %v770 = vpop.xlane.xlu0 %769
    %v771 = vsub.f32 %v763, %v767
    %v772 = vsub.f32 %v764, %v770
    %v773 = vmul.f32 %v771, 1.442695
    %v774 = vpow.pop %v773
    %v775 = vmul.f32 %v772, 1.442695
    %v776 = vpow.pop %v775
    %v777 = vsel %vm257, %v774, 0.0
    %778 = vadd.xlane.f32.xlu0 %v777
    %v779 = vpop.xlane.xlu0 %778
    %v780 = vsel %vm257, %v776, 0.0
    %781 = vadd.xlane.f32.xlu0 %v780
    %v782 = vpop.xlane.xlu0 %781
    %v783 = vrcp.pop %v779
    %v784 = vmul.f32 %v779, %v783
    %v785 = vsub.f32 1.0, %v784
    %v786 = vmul.f32 %v783, %v785
    %v787 = vadd.f32 %v783, %v786
    %vm788 = vweird.f32 %v779
    %vm789 = vweird.f32 %v783
    %vm790 = vmor %vm788, %vm789
    %v791 = vsel %vm790, %v783, %v787
    %v792 = vand.u32 2147483647, %v779
    %vm793 = vcmp.eq.f32.partialorder %v792, 8.507059e+37
    %v794 = vand.u32 %v779, 2147483648
    %v795 = vor.u32 1.1754944e-38, %v794
    %v796 = vsel %vm793, %v795, %v791
    %v797 = vmul.f32 %v774, %v796
    %v798 = vrcp.pop %v782
    %v799 = vmul.f32 %v782, %v798
    %v800 = vsub.f32 1.0, %v799
    %v801 = vmul.f32 %v798, %v800
    %v802 = vadd.f32 %v798, %v801
    %vm803 = vweird.f32 %v782
    %vm804 = vweird.f32 %v798
    %vm805 = vmor %vm803, %vm804
    %v806 = vsel %vm805, %v798, %v802
    %v807 = vand.u32 2147483647, %v782
    %vm808 = vcmp.eq.f32.partialorder %v807, 8.507059e+37
    %v809 = vand.u32 %v782, 2147483648
    %v810 = vor.u32 1.1754944e-38, %v809
    %v811 = vsel %vm808, %v810, %v806
    %v812 = vmul.f32 %v776, %v811
    %v813 = vpack.c.bf16 %v797, %v797
    %v814 = vpack.c.bf16 %v812, %v812
    %v816 = vsel %vm257, %v813, 0
    %v818 = vsel %vm311, %v720, 0
    %820 = vmatpush.bf16.msra.mxu0 0
    %821 = vmatpush.bf16.msra.mxu0 0
    %822 = vmatpush.bf16.msra.mxu0 0
    %823 = vmatpush.bf16.msra.mxu0 0
    %824 = vmatpush.bf16.msra.mxu0 0
    %825 = vmatpush.bf16.msra.mxu0 0
    %826 = vmatpush.bf16.msra.mxu0 0
    %827 = vmatpush.bf16.msra.mxu0 %v818
    %828 = vmatmul.bf16.gmra.mxu0 %v816
    %v829 = vpop.f32.mrf.mxu0
    %v830 = vadd.f32 0.0, %v829
    %v831 = vpop.f32.mrf.mxu0
    %832 = vdwg.mxu0
    %v834 = vsel %vm257, %v814, 0
    %v836 = vsel %vm311, %v743, 0
    %838 = vmatpush.bf16.msra.mxu0 0
    %839 = vmatpush.bf16.msra.mxu0 0
    %840 = vmatpush.bf16.msra.mxu0 0
    %841 = vmatpush.bf16.msra.mxu0 0
    %842 = vmatpush.bf16.msra.mxu0 0
    %843 = vmatpush.bf16.msra.mxu0 0
    %844 = vmatpush.bf16.msra.mxu0 0
    %845 = vmatpush.bf16.msra.mxu0 %v836
    %846 = vmatmul.bf16.gmra.mxu0 %v834
    %v847 = vpop.f32.mrf.mxu0
    %v848 = vadd.f32 0.0, %v847
    %v849 = vpop.f32.mrf.mxu0
    %850 = vdwg.mxu0
    %v851 = vpack.c.bf16 %v848, %v830
    %v856 = vunpack.c.l.b16 %v212
    %v857 = vunpack.c.l.b16 %v213
    %v858 = vunpack.c.l.b16 %v214
    %v859 = vunpack.c.l.b16 %v215
    %v860 = vpack.c.b16 %v857, %v856
    %v861 = vpack.c.b16 %v859, %v858
    %v865 = vsel %vm216, %v851, 0
    %867 = vmatpush.bf16.msra.mxu0 0
    %868 = vmatpush.bf16.msra.mxu0 0
    %869 = vmatpush.bf16.msra.mxu0 0
    %870 = vmatpush.bf16.msra.mxu0 0
    %871 = vmatpush.bf16.msra.mxu0 0
    %872 = vmatpush.bf16.msra.mxu0 0
    %873 = vmatpush.bf16.msra.mxu0 %v861
    %874 = vmatpush.bf16.msra.mxu0 %v860
    %875 = vmatmul.bf16.gmra.mxu0 %v865
    %v876 = vpop.f32.mrf.mxu0
    %v877 = vadd.f32 0.0, %v876
    %v878 = vpop.f32.mrf.mxu0
    %v879 = vadd.f32 0.0, %v878
    %880 = vdwg.mxu0
    %v881 = vadd.f32 %v715, %v877
    %v882 = vadd.f32 %v716, %v879
    %v883 = vld [vmem:[%s4] sm:$0x1]
    %v884 = vld [vmem:[%s5] sm:$0x1]
    %885 = vadd.xlane.f32.xlu0 %v881
    %v886 = vpop.xlane.xlu0 %885
    %887 = vadd.xlane.f32.xlu0 %v882
    %v888 = vpop.xlane.xlu0 %887
    %v889 = vrcp.pop 128.0
    %v890 = vmul.f32 128.0, %v889
    %v891 = vsub.f32 1.0, %v890
    %v892 = vmul.f32 %v889, %v891
    %v893 = vadd.f32 %v889, %v892
    %vm894 = vweird.f32 %v889
    %v895 = vsel %vm894, %v889, %v893
    %v896 = vmul.f32 %v886, %v895
    %v897 = vmul.f32 %v888, %v895
    %v898 = vsub.f32 %v881, %v896
    %v899 = vsub.f32 %v882, %v897
    %v900 = vmul.f32 %v898, %v898
    %v901 = vmul.f32 %v899, %v899
    %902 = vadd.xlane.f32.xlu0 %v900
    %v903 = vpop.xlane.xlu0 %902
    %904 = vadd.xlane.f32.xlu0 %v901
    %v905 = vpop.xlane.xlu0 %904
    %v906 = vmul.f32 %v903, %v895
    %v907 = vmul.f32 %v905, %v895
    %v908 = vadd.f32 %v906, 1e-05
    %v909 = vadd.f32 %v907, 1e-05
    %v910 = vrsqrt.pop %v908
    %v911 = vmul.f32 %v910, %v908
    %v912 = vmul.f32 %v911, %v910
    %v913 = vmul.f32 0.5, %v912
    %v914 = vsub.f32 1.5, %v913
    %v915 = vmul.f32 %v910, %v914
    %vm916 = vweird.f32 %v908
    %vm917 = vweird.f32 %v910
    %vm918 = vmor %vm916, %vm917
    %v919 = vsel %vm918, %v910, %v915
    %v920 = vrsqrt.pop %v909
    %v921 = vmul.f32 %v920, %v909
    %v922 = vmul.f32 %v921, %v920
    %v923 = vmul.f32 0.5, %v922
    %v924 = vsub.f32 1.5, %v923
    %v925 = vmul.f32 %v920, %v924
    %vm926 = vweird.f32 %v909
    %vm927 = vweird.f32 %v920
    %vm928 = vmor %vm926, %vm927
    %v929 = vsel %vm928, %v920, %v925
    %v930 = vmul.f32 %v898, %v919
    %v931 = vmul.f32 %v899, %v929
    %v933 = vperm.slane %v883, 0
    %v935 = vmul.f32 %v930, %v933
    %v936 = vmul.f32 %v931, %v933
    %v938 = vperm.slane %v884, 0
    %v940 = vadd.f32 %v935, %v938
    %v941 = vadd.f32 %v936, %v938
    %v942 = vpack.c.bf16 %v941, %v940
    %v943 = vld [vmem:[%s6] sm:$0xf]
    %v944 = vld [vmem:[%s6 + $0x4] sm:$0xf]
    %v945 = vld [vmem:[%s6 + $0x8] sm:$0xf]
    %v946 = vld [vmem:[%s6 + $0xc] sm:$0xf]
    %v947 = vld [vmem:[%s6 + $0x10] sm:$0xf]
    %v948 = vld [vmem:[%s6 + $0x14] sm:$0xf]
    %v949 = vld [vmem:[%s6 + $0x18] sm:$0xf]
    %v950 = vld [vmem:[%s6 + $0x1c] sm:$0xf]
    %v951 = vld [vmem:[%s6 + $0x20] sm:$0xf]
    %v952 = vld [vmem:[%s6 + $0x24] sm:$0xf]
    %v953 = vld [vmem:[%s6 + $0x28] sm:$0xf]
    %v954 = vld [vmem:[%s6 + $0x2c] sm:$0xf]
    %v955 = vld [vmem:[%s6 + $0x30] sm:$0xf]
    %v956 = vld [vmem:[%s6 + $0x34] sm:$0xf]
    %v957 = vld [vmem:[%s6 + $0x38] sm:$0xf]
    %v958 = vld [vmem:[%s6 + $0x3c] sm:$0xf]
    %v959 = vld [vmem:[%s7] sm:$0x1]
    %v961 = vperm.slane %v959, 0
    %v979 = vunpack.c.l.b16 %v943
    %v980 = vunpack.c.l.b16 %v944
    %v981 = vunpack.c.l.b16 %v945
    %v982 = vunpack.c.l.b16 %v946
    %v983 = vunpack.c.l.b16 %v947
    %v984 = vunpack.c.l.b16 %v948
    %v985 = vunpack.c.l.b16 %v949
    %v986 = vunpack.c.l.b16 %v950
    %v987 = vunpack.c.l.b16 %v951
    %v988 = vunpack.c.l.b16 %v952
    %v989 = vunpack.c.l.b16 %v953
    %v990 = vunpack.c.l.b16 %v954
    %v991 = vunpack.c.l.b16 %v955
    %v992 = vunpack.c.l.b16 %v956
    %v993 = vunpack.c.l.b16 %v957
    %v994 = vunpack.c.l.b16 %v958
    %v995 = vpack.c.b16 %v980, %v979
    %v996 = vpack.c.b16 %v982, %v981
    %v997 = vpack.c.b16 %v984, %v983
    %v998 = vpack.c.b16 %v986, %v985
    %v999 = vpack.c.b16 %v988, %v987
    %v1000 = vpack.c.b16 %v990, %v989
    %v1001 = vpack.c.b16 %v992, %v991
    %v1002 = vpack.c.b16 %v994, %v993
    %1011 = vmatpush.bf16.msra.mxu0 %v1002
    %1012 = vmatpush.bf16.msra.mxu0 %v1001
    %1013 = vmatpush.bf16.msra.mxu0 %v1000
    %1014 = vmatpush.bf16.msra.mxu0 %v999
    %1015 = vmatpush.bf16.msra.mxu0 %v998
    %1016 = vmatpush.bf16.msra.mxu0 %v997
    %1017 = vmatpush.bf16.msra.mxu0 %v996
    %1018 = vmatpush.bf16.msra.mxu0 %v995
    %1019 = vmatmul.bf16.gmra.mxu0 %v942
    %v1020 = vpop.f32.mrf.mxu0
    %v1021 = vadd.f32 %v961, %v1020
    %v1022 = vpop.f32.mrf.mxu0
    %v1023 = vadd.f32 %v961, %v1022
    %1024 = vdwg.mxu0
    %v1025 = vadd.f32 %v940, %v1021
    %v1026 = vadd.f32 %v941, %v1023
    %v1027 = vld [vmem:[%s8] sm:$0x1]
    %v1028 = vld [vmem:[%s9] sm:$0x1]
    %1029 = vadd.xlane.f32.xlu0 %v1025
    %v1030 = vpop.xlane.xlu0 %1029
    %1031 = vadd.xlane.f32.xlu0 %v1026
    %v1032 = vpop.xlane.xlu0 %1031
    %v1033 = vmul.f32 %v1030, %v895
    %v1034 = vmul.f32 %v1032, %v895
    %v1035 = vsub.f32 %v1025, %v1033
    %v1036 = vsub.f32 %v1026, %v1034
    %v1037 = vmul.f32 %v1035, %v1035
    %v1038 = vmul.f32 %v1036, %v1036
    %1039 = vadd.xlane.f32.xlu0 %v1037
    %v1040 = vpop.xlane.xlu0 %1039
    %1041 = vadd.xlane.f32.xlu0 %v1038
    %v1042 = vpop.xlane.xlu0 %1041
    %v1043 = vmul.f32 %v1040, %v895
    %v1044 = vmul.f32 %v1042, %v895
    %v1045 = vadd.f32 %v1043, 1e-05
    %v1046 = vadd.f32 %v1044, 1e-05
    %v1047 = vrsqrt.pop %v1045
    %v1048 = vmul.f32 %v1047, %v1045
    %v1049 = vmul.f32 %v1048, %v1047
    %v1050 = vmul.f32 0.5, %v1049
    %v1051 = vsub.f32 1.5, %v1050
    %v1052 = vmul.f32 %v1047, %v1051
    %vm1053 = vweird.f32 %v1045
    %vm1054 = vweird.f32 %v1047
    %vm1055 = vmor %vm1053, %vm1054
    %v1056 = vsel %vm1055, %v1047, %v1052
    %v1057 = vrsqrt.pop %v1046
    %v1058 = vmul.f32 %v1057, %v1046
    %v1059 = vmul.f32 %v1058, %v1057
    %v1060 = vmul.f32 0.5, %v1059
    %v1061 = vsub.f32 1.5, %v1060
    %v1062 = vmul.f32 %v1057, %v1061
    %vm1063 = vweird.f32 %v1046
    %vm1064 = vweird.f32 %v1057
    %vm1065 = vmor %vm1063, %vm1064
    %v1066 = vsel %vm1065, %v1057, %v1062
    %v1067 = vmul.f32 %v1035, %v1056
    %v1068 = vmul.f32 %v1036, %v1066
    %v1070 = vperm.slane %v1027, 0
    %v1072 = vmul.f32 %v1067, %v1070
    %v1073 = vmul.f32 %v1068, %v1070
    %v1075 = vperm.slane %v1028, 0
    %v1077 = vadd.f32 %v1072, %v1075
    %v1078 = vadd.f32 %v1073, %v1075
    %1079 = vst [vmem:[#allocation2] sm:$0xff] %v1077
    %1080 = vst [vmem:[#allocation2 + $0x8] sm:$0xff] %v1078
    // Predicated region
    $region42: #{forward.5} parent=1 // pred_check
      _
    $region43: #{forward.5} parent=1 // pred_check_branch
      %1082 = sbr.rel (0) target = $region45
    $region44: #{forward.5} parent=1 // pred_region
      %1084 = vsyncadd [#allocation3], 0
      %s1085 = sshll.u32 [#allocation2], 4
      %s1086 = int_to_ptr.vmem [resolvable:$true] %s1085
      %s1087 = sshll.u32 %s10, 4
      %s1088 = int_to_ptr.hbm [resolvable:$true] %s1087
      %1093 = dma.vmem_to_hbm [thread:$0]  %s1086, 256, %s1088, [#allocation3], 128, 128, 8
    $region45: #{forward.5} parent=1 // pred_fallthru
      _
    // Predicated region
    $region46: #{forward.5} parent=1 // pred_check
      _
    $region47: #{forward.5} parent=1 // pred_check_branch
      %1095 = sbr.rel (0) target = $region49
    $region48: #{forward.5} parent=1 // pred_region
      %1097 = dma.done [#allocation3], 256
    $region49: #{forward.5} parent=1 // pred_fallthru
      _
    %1098 = vsyncpa [#allocation3], 1

// kernel: forward.4
$region0: #{forward.4}
  #allocation0 [shape = 'u32[]', space=smem, size = 0x4, offset = 0x4, fixed_abs, tag = 'smem constant byte address 0x4 - core index']
  #allocation1 [shape = 'u32[72,128]{1,0:T(1,128)}', space=vmem, size = 0x9000, scoped, tag = 'internal scratch']
  %s0 = inlined_call_operand.vmem [shape: f32[2,8,128], index: 0, kind: input, shape index: {}]
  %s1 = inlined_call_operand.vmem [shape: bf16[128,128], index: 1, kind: input, shape index: {}]
  %s2 = inlined_call_operand.vmem [shape: bf16[128,128], index: 2, kind: input, shape index: {}]
  %s3 = inlined_call_operand.vmem [shape: bf16[128,128], index: 3, kind: input, shape index: {}]
  %s4 = inlined_call_operand.vmem [shape: f32[1,128], index: 4, kind: input, shape index: {}]
  %s5 = inlined_call_operand.vmem [shape: f32[1,128], index: 5, kind: input, shape index: {}]
  %s6 = inlined_call_operand.vmem [shape: bf16[128,128], index: 6, kind: input, shape index: {}]
  %s7 = inlined_call_operand.vmem [shape: f32[1,128], index: 7, kind: input, shape index: {}]
  %s8 = inlined_call_operand.vmem [shape: f32[1,128], index: 8, kind: input, shape index: {}]
  %s9 = inlined_call_operand.vmem [shape: f32[1,128], index: 9, kind: input, shape index: {}]
  %s10 = inlined_call_operand.vmem [shape: f32[2,8,128], index: 10, kind: output, shape index: {}]
  %s11 = sld [smem:[#allocation0]]
  $region50: #{forward.4} parent=0
    _
  %s13 = ssub.s32 1, %s11
  %s14 = scalar_select 0, %s13, %s11
  // Predicated region
  $region2: #{forward.4} parent=0 // pred_check
    _
  $region3: #{forward.4} parent=0 // pred_check_branch
    %16 = sbr.rel (0) target = $region5
  $region4: #{forward.4} parent=0 // pred_region
    _
  $region5: #{forward.4} parent=0 // pred_fallthru
    _
  // Predicated region
  $region6: #{forward.4} parent=0 // pred_check
    _
  $region7: #{forward.4} parent=0 // pred_check_branch
    %18 = sbr.rel (0) target = $region9
  $region8: #{forward.4} parent=0 // pred_region
    _
  $region9: #{forward.4} parent=0 // pred_fallthru
    _
  // Predicated region
  $region10: #{forward.4} parent=0 // pred_check
    _
  $region11: #{forward.4} parent=0 // pred_check_branch
    %20 = sbr.rel (0) target = $region13
  $region12: #{forward.4} parent=0 // pred_region
    _
  $region13: #{forward.4} parent=0 // pred_fallthru
    _
  // Predicated region
  $region14: #{forward.4} parent=0 // pred_check
    _
  $region15: #{forward.4} parent=0 // pred_check_branch
    %22 = sbr.rel (0) target = $region17
  $region16: #{forward.4} parent=0 // pred_region
    _
  $region17: #{forward.4} parent=0 // pred_fallthru
    _
  // Predicated region
  $region18: #{forward.4} parent=0 // pred_check
    _
  $region19: #{forward.4} parent=0 // pred_check_branch
    %24 = sbr.rel (0) target = $region21
  $region20: #{forward.4} parent=0 // pred_region
    _
  $region21: #{forward.4} parent=0 // pred_fallthru
    _
  // Predicated region
  $region22: #{forward.4} parent=0 // pred_check
    _
  $region23: #{forward.4} parent=0 // pred_check_branch
    %26 = sbr.rel (0) target = $region25
  $region24: #{forward.4} parent=0 // pred_region
    _
  $region25: #{forward.4} parent=0 // pred_fallthru
    _
  // Predicated region
  $region26: #{forward.4} parent=0 // pred_check
    _
  $region27: #{forward.4} parent=0 // pred_check_branch
    %28 = sbr.rel (0) target = $region29
  $region28: #{forward.4} parent=0 // pred_region
    _
  $region29: #{forward.4} parent=0 // pred_fallthru
    _
  // Predicated region
  $region30: #{forward.4} parent=0 // pred_check
    _
  $region31: #{forward.4} parent=0 // pred_check_branch
    %30 = sbr.rel (0) target = $region33
  $region32: #{forward.4} parent=0 // pred_region
    _
  $region33: #{forward.4} parent=0 // pred_fallthru
    _
  // Predicated region
  $region34: #{forward.4} parent=0 // pred_check
    _
  $region35: #{forward.4} parent=0 // pred_check_branch
    %32 = sbr.rel (0) target = $region37
  $region36: #{forward.4} parent=0 // pred_region
    _
  $region37: #{forward.4} parent=0 // pred_fallthru
    _
  // Predicated region
  $region38: #{forward.4} parent=0 // pred_check
    _
  $region39: #{forward.4} parent=0 // pred_check_branch
    %34 = sbr.rel (0) target = $region41
  $region40: #{forward.4} parent=0 // pred_region
    _
  $region41: #{forward.4} parent=0 // pred_fallthru
    _
  %v36 = vld [vmem:[%s0] sm:$0xff]
  %v37 = vld [vmem:[%s0 + $0x8] sm:$0xff]
  %v38 = vpack.c.bf16 %v37, %v36
  %v39 = vld [vmem:[%s1] sm:$0xf]
  %v40 = vld [vmem:[%s1 + $0x4] sm:$0xf]
  %v41 = vld [vmem:[%s1 + $0x8] sm:$0xf]
  %v42 = vld [vmem:[%s1 + $0xc] sm:$0xf]
  %v43 = vld [vmem:[%s1 + $0x10] sm:$0xf]
  %v44 = vld [vmem:[%s1 + $0x14] sm:$0xf]
  %v45 = vld [vmem:[%s1 + $0x18] sm:$0xf]
  %v46 = vld [vmem:[%s1 + $0x1c] sm:$0xf]
  %v47 = vld [vmem:[%s1 + $0x20] sm:$0xf]
  %v48 = vld [vmem:[%s1 + $0x24] sm:$0xf]
  %v49 = vld [vmem:[%s1 + $0x28] sm:$0xf]
  %v50 = vld [vmem:[%s1 + $0x2c] sm:$0xf]
  %v51 = vld [vmem:[%s1 + $0x30] sm:$0xf]
  %v52 = vld [vmem:[%s1 + $0x34] sm:$0xf]
  %v53 = vld [vmem:[%s1 + $0x38] sm:$0xf]
  %v54 = vld [vmem:[%s1 + $0x3c] sm:$0xf]
  %v71 = vunpack.c.l.b16 %v39
  %v72 = vunpack.c.l.b16 %v40
  %v73 = vunpack.c.l.b16 %v41
  %v74 = vunpack.c.l.b16 %v42
  %v75 = vunpack.c.l.b16 %v43
  %v76 = vunpack.c.l.b16 %v44
  %v77 = vunpack.c.l.b16 %v45
  %v78 = vunpack.c.l.b16 %v46
  %v79 = vunpack.c.l.b16 %v47
  %v80 = vunpack.c.l.b16 %v48
  %v81 = vunpack.c.l.b16 %v49
  %v82 = vunpack.c.l.b16 %v50
  %v83 = vunpack.c.l.b16 %v51
  %v84 = vunpack.c.l.b16 %v52
  %v85 = vunpack.c.l.b16 %v53
  %v86 = vunpack.c.l.b16 %v54
  %v87 = vpack.c.b16 %v72, %v71
  %v88 = vpack.c.b16 %v74, %v73
  %v89 = vpack.c.b16 %v76, %v75
  %v90 = vpack.c.b16 %v78, %v77
  %v91 = vpack.c.b16 %v80, %v79
  %v92 = vpack.c.b16 %v82, %v81
  %v93 = vpack.c.b16 %v84, %v83
  %v94 = vpack.c.b16 %v86, %v85
  %103 = vmatpush.bf16.msra.mxu0 %v94
  %104 = vmatpush.bf16.msra.mxu0 %v93
  %105 = vmatpush.bf16.msra.mxu0 %v92
  %106 = vmatpush.bf16.msra.mxu0 %v91
  %107 = vmatpush.bf16.msra.mxu0 %v90
  %108 = vmatpush.bf16.msra.mxu0 %v89
  %109 = vmatpush.bf16.msra.mxu0 %v88
  %110 = vmatpush.bf16.msra.mxu0 %v87
  %111 = vmatmul.bf16.gmra.mxu0 %v38
  %v112 = vpop.f32.mrf.mxu0
  %v113 = vadd.f32 0.0, %v112
  %v114 = vpop.f32.mrf.mxu0
  %v115 = vadd.f32 0.0, %v114
  %116 = vdwg.mxu0
  %v117 = vld [vmem:[%s2] sm:$0xf]
  %v118 = vld [vmem:[%s2 + $0x4] sm:$0xf]
  %v119 = vld [vmem:[%s2 + $0x8] sm:$0xf]
  %v120 = vld [vmem:[%s2 + $0xc] sm:$0xf]
  %v121 = vld [vmem:[%s2 + $0x10] sm:$0xf]
  %v122 = vld [vmem:[%s2 + $0x14] sm:$0xf]
  %v123 = vld [vmem:[%s2 + $0x18] sm:$0xf]
  %v124 = vld [vmem:[%s2 + $0x1c] sm:$0xf]
  %v125 = vld [vmem:[%s2 + $0x20] sm:$0xf]
  %v126 = vld [vmem:[%s2 + $0x24] sm:$0xf]
  %v127 = vld [vmem:[%s2 + $0x28] sm:$0xf]
  %v128 = vld [vmem:[%s2 + $0x2c] sm:$0xf]
  %v129 = vld [vmem:[%s2 + $0x30] sm:$0xf]
  %v130 = vld [vmem:[%s2 + $0x34] sm:$0xf]
  %v131 = vld [vmem:[%s2 + $0x38] sm:$0xf]
  %v132 = vld [vmem:[%s2 + $0x3c] sm:$0xf]
  %v149 = vunpack.c.l.b16 %v117
  %v150 = vunpack.c.l.b16 %v118
  %v151 = vunpack.c.l.b16 %v119
  %v152 = vunpack.c.l.b16 %v120
  %v153 = vunpack.c.l.b16 %v121
  %v154 = vunpack.c.l.b16 %v122
  %v155 = vunpack.c.l.b16 %v123
  %v156 = vunpack.c.l.b16 %v124
  %v157 = vunpack.c.l.b16 %v125
  %v158 = vunpack.c.l.b16 %v126
  %v159 = vunpack.c.l.b16 %v127
  %v160 = vunpack.c.l.b16 %v128
  %v161 = vunpack.c.l.b16 %v129
  %v162 = vunpack.c.l.b16 %v130
  %v163 = vunpack.c.l.b16 %v131
  %v164 = vunpack.c.l.b16 %v132
  %v165 = vpack.c.b16 %v150, %v149
  %v166 = vpack.c.b16 %v152, %v151
  %v167 = vpack.c.b16 %v154, %v153
  %v168 = vpack.c.b16 %v156, %v155
  %v169 = vpack.c.b16 %v158, %v157
  %v170 = vpack.c.b16 %v160, %v159
  %v171 = vpack.c.b16 %v162, %v161
  %v172 = vpack.c.b16 %v164, %v163
  %181 = vmatpush.bf16.msra.mxu0 %v172
  %182 = vmatpush.bf16.msra.mxu0 %v171
  %183 = vmatpush.bf16.msra.mxu0 %v170
  %184 = vmatpush.bf16.msra.mxu0 %v169
  %185 = vmatpush.bf16.msra.mxu0 %v168
  %186 = vmatpush.bf16.msra.mxu0 %v167
  %187 = vmatpush.bf16.msra.mxu0 %v166
  %188 = vmatpush.bf16.msra.mxu0 %v165
  %189 = vmatmul.bf16.gmra.mxu0 %v38
  %v190 = vpop.f32.mrf.mxu0
  %v191 = vadd.f32 0.0, %v190
  %v192 = vpop.f32.mrf.mxu0
  %v193 = vadd.f32 0.0, %v192
  %194 = vdwg.mxu0
  %v195 = vpack.c.bf16 %v113, %v113
  %v196 = vpack.c.bf16 %v115, %v115
  %v197 = vpack.c.bf16 %v191, %v191
  %v198 = vpack.c.bf16 %v193, %v193
  %v199 = vld [vmem:[%s3] sm:$0xf]
  %v200 = vld [vmem:[%s3 + $0x4] sm:$0xf]
  %v201 = vld [vmem:[%s3 + $0x8] sm:$0xf]
  %v202 = vld [vmem:[%s3 + $0xc] sm:$0xf]
  %v203 = vld [vmem:[%s3 + $0x10] sm:$0xf]
  %v204 = vld [vmem:[%s3 + $0x14] sm:$0xf]
  %v205 = vld [vmem:[%s3 + $0x18] sm:$0xf]
  %v206 = vld [vmem:[%s3 + $0x1c] sm:$0xf]
  %v207 = vld [vmem:[%s3 + $0x20] sm:$0xf]
  %v208 = vld [vmem:[%s3 + $0x24] sm:$0xf]
  %v209 = vld [vmem:[%s3 + $0x28] sm:$0xf]
  %v210 = vld [vmem:[%s3 + $0x2c] sm:$0xf]
  %v211 = vld [vmem:[%s3 + $0x30] sm:$0xf]
  %v212 = vld [vmem:[%s3 + $0x34] sm:$0xf]
  %v213 = vld [vmem:[%s3 + $0x38] sm:$0xf]
  %v214 = vld [vmem:[%s3 + $0x3c] sm:$0xf]
  %vm215 = vcmask 261120
  %v217 = vsel %vm215, %v195, 0
  %v220 = vsel %vm215, %v197, 0
  %222 = vmatpush.bf16.xpose.msra.mxu0 0
  %223 = vmatpush.bf16.xpose.msra.mxu0 0
  %224 = vmatpush.bf16.xpose.msra.mxu0 0
  %225 = vmatpush.bf16.xpose.msra.mxu0 0
  %226 = vmatpush.bf16.xpose.msra.mxu0 0
  %227 = vmatpush.bf16.xpose.msra.mxu0 0
  %228 = vmatpush.bf16.xpose.msra.mxu0 0
  %229 = vmatpush.bf16.xpose.msra.mxu0 %v220
  %230 = vmatmul.bf16.gmra.mxu0 %v217
  %v231 = vpop.f32.mrf.mxu0
  %v232 = vadd.f32 0.0, %v231
  %v233 = vpop.f32.mrf.mxu0
  %234 = vdwg.mxu0
  %v236 = vsel %vm215, %v196, 0
  %v239 = vsel %vm215, %v198, 0
  %241 = vmatpush.bf16.xpose.msra.mxu0 0
  %242 = vmatpush.bf16.xpose.msra.mxu0 0
  %243 = vmatpush.bf16.xpose.msra.mxu0 0
  %244 = vmatpush.bf16.xpose.msra.mxu0 0
  %245 = vmatpush.bf16.xpose.msra.mxu0 0
  %246 = vmatpush.bf16.xpose.msra.mxu0 0
  %247 = vmatpush.bf16.xpose.msra.mxu0 0
  %248 = vmatpush.bf16.xpose.msra.mxu0 %v239
  %249 = vmatmul.bf16.gmra.mxu0 %v236
  %v250 = vpop.f32.mrf.mxu0
  %v251 = vadd.f32 0.0, %v250
  %v252 = vpop.f32.mrf.mxu0
  %253 = vdwg.mxu0
  %v254 = vmul.f32 %v232, 0.17677669
  %v255 = vmul.f32 %v251, 0.17677669
  %vm256 = vcmask 64512
  %v257 = vsel %vm256, %v254, -inf
  %258 = vmax.xlane.f32.xlu0 %v257
  %v259 = vpop.xlane.xlu0 %258
  %v260 = vsel %vm256, %v255, -inf
  %261 = vmax.xlane.f32.xlu0 %v260
  %v262 = vpop.xlane.xlu0 %261
  %v263 = vsub.f32 %v254, %v259
  %v264 = vsub.f32 %v255, %v262
  %v265 = vmul.f32 %v263, 1.442695
  %v266 = vpow.pop %v265
  %v267 = vmul.f32 %v264, 1.442695
  %v268 = vpow.pop %v267
  %v269 = vsel %vm256, %v266, 0.0
  %270 = vadd.xlane.f32.xlu0 %v269
  %v271 = vpop.xlane.xlu0 %270
  %v272 = vsel %vm256, %v268, 0.0
  %273 = vadd.xlane.f32.xlu0 %v272
  %v274 = vpop.xlane.xlu0 %273
  %v275 = vrcp.pop %v271
  %v276 = vmul.f32 %v271, %v275
  %v277 = vsub.f32 1.0, %v276
  %v278 = vmul.f32 %v275, %v277
  %v279 = vadd.f32 %v275, %v278
  %vm280 = vweird.f32 %v271
  %vm281 = vweird.f32 %v275
  %vm282 = vmor %vm280, %vm281
  %v283 = vsel %vm282, %v275, %v279
  %v284 = vand.u32 2147483647, %v271
  %vm285 = vcmp.eq.f32.partialorder %v284, 8.507059e+37
  %v286 = vand.u32 %v271, 2147483648
  %v287 = vor.u32 1.1754944e-38, %v286
  %v288 = vsel %vm285, %v287, %v283
  %v289 = vmul.f32 %v266, %v288
  %v290 = vrcp.pop %v274
  %v291 = vmul.f32 %v274, %v290
  %v292 = vsub.f32 1.0, %v291
  %v293 = vmul.f32 %v290, %v292
  %v294 = vadd.f32 %v290, %v293
  %vm295 = vweird.f32 %v274
  %vm296 = vweird.f32 %v290
  %vm297 = vmor %vm295, %vm296
  %v298 = vsel %vm297, %v290, %v294
  %v299 = vand.u32 2147483647, %v274
  %vm300 = vcmp.eq.f32.partialorder %v299, 8.507059e+37
  %v301 = vand.u32 %v274, 2147483648
  %v302 = vor.u32 1.1754944e-38, %v301
  %v303 = vsel %vm300, %v302, %v298
  %v304 = vmul.f32 %v268, %v303
  %v305 = vpack.c.bf16 %v289, %v289
  %v306 = vpack.c.bf16 %v304, %v304
  %v308 = vsel %vm256, %v305, 0
  %vm310 = vcmask 1043456
  %v311 = vsel %vm310, %v197, 0
  %313 = vmatpush.bf16.msra.mxu0 0
  %314 = vmatpush.bf16.msra.mxu0 0
  %315 = vmatpush.bf16.msra.mxu0 0
  %316 = vmatpush.bf16.msra.mxu0 0
  %317 = vmatpush.bf16.msra.mxu0 0
  %318 = vmatpush.bf16.msra.mxu0 0
  %319 = vmatpush.bf16.msra.mxu0 0
  %320 = vmatpush.bf16.msra.mxu0 %v311
  %321 = vmatmul.bf16.gmra.mxu0 %v308
  %v322 = vpop.f32.mrf.mxu0
  %v323 = vadd.f32 0.0, %v322
  %v324 = vpop.f32.mrf.mxu0
  %325 = vdwg.mxu0
  %v327 = vsel %vm256, %v306, 0
  %v329 = vsel %vm310, %v198, 0
  %331 = vmatpush.bf16.msra.mxu0 0
  %332 = vmatpush.bf16.msra.mxu0 0
  %333 = vmatpush.bf16.msra.mxu0 0
  %334 = vmatpush.bf16.msra.mxu0 0
  %335 = vmatpush.bf16.msra.mxu0 0
  %336 = vmatpush.bf16.msra.mxu0 0
  %337 = vmatpush.bf16.msra.mxu0 0
  %338 = vmatpush.bf16.msra.mxu0 %v329
  %339 = vmatmul.bf16.gmra.mxu0 %v327
  %v340 = vpop.f32.mrf.mxu0
  %v341 = vadd.f32 0.0, %v340
  %v342 = vpop.f32.mrf.mxu0
  %343 = vdwg.mxu0
  %v344 = vpack.c.bf16 %v341, %v323
  %v346 = vunpack.c.l.b16 %v195
  %v347 = vpack.c.b16 %v346, %v346
  %348 = vrot.lane.b32.xlu0 %v347, 96
  %v349 = vpop.permute.xlu0 %348
  %v351 = vunpack.c.l.b16 %v197
  %v352 = vpack.c.b16 %v351, %v351
  %353 = vrot.lane.b32.xlu0 %v352, 96
  %v354 = vpop.permute.xlu0 %353
  %v356 = vsel %vm215, %v349, 0
  %v359 = vsel %vm215, %v354, 0
  %361 = vmatpush.bf16.xpose.msra.mxu0 0
  %362 = vmatpush.bf16.xpose.msra.mxu0 0
  %363 = vmatpush.bf16.xpose.msra.mxu0 0
  %364 = vmatpush.bf16.xpose.msra.mxu0 0
  %365 = vmatpush.bf16.xpose.msra.mxu0 0
  %366 = vmatpush.bf16.xpose.msra.mxu0 0
  %367 = vmatpush.bf16.xpose.msra.mxu0 0
  %368 = vmatpush.bf16.xpose.msra.mxu0 %v359
  %369 = vmatmul.bf16.gmra.mxu0 %v356
  %v370 = vpop.f32.mrf.mxu0
  %v371 = vadd.f32 0.0, %v370
  %v372 = vpop.f32.mrf.mxu0
  %373 = vdwg.mxu0
  %v375 = vunpack.c.l.b16 %v196
  %v376 = vpack.c.b16 %v375, %v375
  %377 = vrot.lane.b32.xlu0 %v376, 96
  %v378 = vpop.permute.xlu0 %377
  %v380 = vunpack.c.l.b16 %v198
  %v381 = vpack.c.b16 %v380, %v380
  %382 = vrot.lane.b32.xlu0 %v381, 96
  %v383 = vpop.permute.xlu0 %382
  %v385 = vsel %vm215, %v378, 0
  %v388 = vsel %vm215, %v383, 0
  %390 = vmatpush.bf16.xpose.msra.mxu0 0
  %391 = vmatpush.bf16.xpose.msra.mxu0 0
  %392 = vmatpush.bf16.xpose.msra.mxu0 0
  %393 = vmatpush.bf16.xpose.msra.mxu0 0
  %394 = vmatpush.bf16.xpose.msra.mxu0 0
  %395 = vmatpush.bf16.xpose.msra.mxu0 0
  %396 = vmatpush.bf16.xpose.msra.mxu0 0
  %397 = vmatpush.bf16.xpose.msra.mxu0 %v388
  %398 = vmatmul.bf16.gmra.mxu0 %v385
  %v399 = vpop.f32.mrf.mxu0
  %v400 = vadd.f32 0.0, %v399
  %v401 = vpop.f32.mrf.mxu0
  %402 = vdwg.mxu0
  %v403 = vmul.f32 %v371, 0.17677669
  %v404 = vmul.f32 %v400, 0.17677669
  %v405 = vsel %vm256, %v403, -inf
  %406 = vmax.xlane.f32.xlu0 %v405
  %v407 = vpop.xlane.xlu0 %406
  %v408 = vsel %vm256, %v404, -inf
  %409 = vmax.xlane.f32.xlu0 %v408
  %v410 = vpop.xlane.xlu0 %409
  %v411 = vsub.f32 %v403, %v407
  %v412 = vsub.f32 %v404, %v410
  %v413 = vmul.f32 %v411, 1.442695
  %v414 = vpow.pop %v413
  %v415 = vmul.f32 %v412, 1.442695
  %v416 = vpow.pop %v415
  %v417 = vsel %vm256, %v414, 0.0
  %418 = vadd.xlane.f32.xlu0 %v417
  %v419 = vpop.xlane.xlu0 %418
  %v420 = vsel %vm256, %v416, 0.0
  %421 = vadd.xlane.f32.xlu0 %v420
  %v422 = vpop.xlane.xlu0 %421
  %v423 = vrcp.pop %v419
  %v424 = vmul.f32 %v419, %v423
  %v425 = vsub.f32 1.0, %v424
  %v426 = vmul.f32 %v423, %v425
  %v427 = vadd.f32 %v423, %v426
  %vm428 = vweird.f32 %v419
  %vm429 = vweird.f32 %v423
  %vm430 = vmor %vm428, %vm429
  %v431 = vsel %vm430, %v423, %v427
  %v432 = vand.u32 2147483647, %v419
  %vm433 = vcmp.eq.f32.partialorder %v432, 8.507059e+37
  %v434 = vand.u32 %v419, 2147483648
  %v435 = vor.u32 1.1754944e-38, %v434
  %v436 = vsel %vm433, %v435, %v431
  %v437 = vmul.f32 %v414, %v436
  %v438 = vrcp.pop %v422
  %v439 = vmul.f32 %v422, %v438
  %v440 = vsub.f32 1.0, %v439
  %v441 = vmul.f32 %v438, %v440
  %v442 = vadd.f32 %v438, %v441
  %vm443 = vweird.f32 %v422
  %vm444 = vweird.f32 %v438
  %vm445 = vmor %vm443, %vm444
  %v446 = vsel %vm445, %v438, %v442
  %v447 = vand.u32 2147483647, %v422
  %vm448 = vcmp.eq.f32.partialorder %v447, 8.507059e+37
  %v449 = vand.u32 %v422, 2147483648
  %v450 = vor.u32 1.1754944e-38, %v449
  %v451 = vsel %vm448, %v450, %v446
  %v452 = vmul.f32 %v416, %v451
  %v453 = vpack.c.bf16 %v437, %v437
  %v454 = vpack.c.bf16 %v452, %v452
  %v456 = vsel %vm256, %v453, 0
  %v458 = vsel %vm310, %v354, 0
  %460 = vmatpush.bf16.msra.mxu0 0
  %461 = vmatpush.bf16.msra.mxu0 0
  %462 = vmatpush.bf16.msra.mxu0 0
  %463 = vmatpush.bf16.msra.mxu0 0
  %464 = vmatpush.bf16.msra.mxu0 0
  %465 = vmatpush.bf16.msra.mxu0 0
  %466 = vmatpush.bf16.msra.mxu0 0
  %467 = vmatpush.bf16.msra.mxu0 %v458
  %468 = vmatmul.bf16.gmra.mxu0 %v456
  %v469 = vpop.f32.mrf.mxu0
  %v470 = vadd.f32 0.0, %v469
  %v471 = vpop.f32.mrf.mxu0
  %472 = vdwg.mxu0
  %v474 = vsel %vm256, %v454, 0
  %v476 = vsel %vm310, %v383, 0
  %478 = vmatpush.bf16.msra.mxu0 0
  %479 = vmatpush.bf16.msra.mxu0 0
  %480 = vmatpush.bf16.msra.mxu0 0
  %481 = vmatpush.bf16.msra.mxu0 0
  %482 = vmatpush.bf16.msra.mxu0 0
  %483 = vmatpush.bf16.msra.mxu0 0
  %484 = vmatpush.bf16.msra.mxu0 0
  %485 = vmatpush.bf16.msra.mxu0 %v476
  %486 = vmatmul.bf16.gmra.mxu0 %v474
  %v487 = vpop.f32.mrf.mxu0
  %v488 = vadd.f32 0.0, %v487
  %v489 = vpop.f32.mrf.mxu0
  %490 = vdwg.mxu0
  %v491 = vpack.c.bf16 %v488, %v470
  %v496 = vunpack.c.l.b16 %v203
  %v497 = vunpack.c.l.b16 %v204
  %v498 = vunpack.c.l.b16 %v205
  %v499 = vunpack.c.l.b16 %v206
  %v500 = vpack.c.b16 %v497, %v496
  %v501 = vpack.c.b16 %v499, %v498
  %v505 = vsel %vm215, %v491, 0
  %507 = vmatpush.bf16.msra.mxu0 0
  %508 = vmatpush.bf16.msra.mxu0 0
  %509 = vmatpush.bf16.msra.mxu0 0
  %510 = vmatpush.bf16.msra.mxu0 0
  %511 = vmatpush.bf16.msra.mxu0 0
  %512 = vmatpush.bf16.msra.mxu0 0
  %513 = vmatpush.bf16.msra.mxu0 %v501
  %514 = vmatpush.bf16.msra.mxu0 %v500
  %515 = vmatmul.bf16.gmra.mxu0 %v505
  %v516 = vpop.f32.mrf.mxu0
  %v517 = vadd.f32 0.0, %v516
  %v518 = vpop.f32.mrf.mxu0
  %v519 = vadd.f32 0.0, %v518
  %520 = vdwg.mxu0
  %v525 = vunpack.c.l.b16 %v199
  %v526 = vunpack.c.l.b16 %v200
  %v527 = vunpack.c.l.b16 %v201
  %v528 = vunpack.c.l.b16 %v202
  %v529 = vpack.c.b16 %v526, %v525
  %v530 = vpack.c.b16 %v528, %v527
  %v534 = vsel %vm215, %v344, 0
  %536 = vmatpush.bf16.msra.mxu0 0
  %537 = vmatpush.bf16.msra.mxu0 0
  %538 = vmatpush.bf16.msra.mxu0 0
  %539 = vmatpush.bf16.msra.mxu0 0
  %540 = vmatpush.bf16.msra.mxu0 0
  %541 = vmatpush.bf16.msra.mxu0 0
  %542 = vmatpush.bf16.msra.mxu0 %v530
  %543 = vmatpush.bf16.msra.mxu0 %v529
  %544 = vmatmul.bf16.gmra.mxu0 %v534
  %v545 = vpop.f32.mrf.mxu0
  %v546 = vadd.f32 %v517, %v545
  %v547 = vpop.f32.mrf.mxu0
  %v548 = vadd.f32 %v519, %v547
  %549 = vdwg.mxu0
  %550 = vrot.lane.b32.xlu0 %v347, 64
  %v551 = vpop.permute.xlu0 %550
  %552 = vrot.lane.b32.xlu0 %v352, 64
  %v553 = vpop.permute.xlu0 %552
  %v555 = vsel %vm215, %v551, 0
  %v558 = vsel %vm215, %v553, 0
  %560 = vmatpush.bf16.xpose.msra.mxu0 0
  %561 = vmatpush.bf16.xpose.msra.mxu0 0
  %562 = vmatpush.bf16.xpose.msra.mxu0 0
  %563 = vmatpush.bf16.xpose.msra.mxu0 0
  %564 = vmatpush.bf16.xpose.msra.mxu0 0
  %565 = vmatpush.bf16.xpose.msra.mxu0 0
  %566 = vmatpush.bf16.xpose.msra.mxu0 0
  %567 = vmatpush.bf16.xpose.msra.mxu0 %v558
  %568 = vmatmul.bf16.gmra.mxu0 %v555
  %v569 = vpop.f32.mrf.mxu0
  %v570 = vadd.f32 0.0, %v569
  %v571 = vpop.f32.mrf.mxu0
  %572 = vdwg.mxu0
  %573 = vrot.lane.b32.xlu0 %v376, 64
  %v574 = vpop.permute.xlu0 %573
  %575 = vrot.lane.b32.xlu0 %v381, 64
  %v576 = vpop.permute.xlu0 %575
  %v578 = vsel %vm215, %v574, 0
  %v581 = vsel %vm215, %v576, 0
  %583 = vmatpush.bf16.xpose.msra.mxu0 0
  %584 = vmatpush.bf16.xpose.msra.mxu0 0
  %585 = vmatpush.bf16.xpose.msra.mxu0 0
  %586 = vmatpush.bf16.xpose.msra.mxu0 0
  %587 = vmatpush.bf16.xpose.msra.mxu0 0
  %588 = vmatpush.bf16.xpose.msra.mxu0 0
  %589 = vmatpush.bf16.xpose.msra.mxu0 0
  %590 = vmatpush.bf16.xpose.msra.mxu0 %v581
  %591 = vmatmul.bf16.gmra.mxu0 %v578
  %v592 = vpop.f32.mrf.mxu0
  %v593 = vadd.f32 0.0, %v592
  %v594 = vpop.f32.mrf.mxu0
  %595 = vdwg.mxu0
  %v596 = vmul.f32 %v570, 0.17677669
  %v597 = vmul.f32 %v593, 0.17677669
  %v598 = vsel %vm256, %v596, -inf
  %599 = vmax.xlane.f32.xlu0 %v598
  %v600 = vpop.xlane.xlu0 %599
  %v601 = vsel %vm256, %v597, -inf
  %602 = vmax.xlane.f32.xlu0 %v601
  %v603 = vpop.xlane.xlu0 %602
  %v604 = vsub.f32 %v596, %v600
  %v605 = vsub.f32 %v597, %v603
  %v606 = vmul.f32 %v604, 1.442695
  %v607 = vpow.pop %v606
  %v608 = vmul.f32 %v605, 1.442695
  %v609 = vpow.pop %v608
  %v610 = vsel %vm256, %v607, 0.0
  %611 = vadd.xlane.f32.xlu0 %v610
  %v612 = vpop.xlane.xlu0 %611
  %v613 = vsel %vm256, %v609, 0.0
  %614 = vadd.xlane.f32.xlu0 %v613
  %v615 = vpop.xlane.xlu0 %614
  %v616 = vrcp.pop %v612
  %v617 = vmul.f32 %v612, %v616
  %v618 = vsub.f32 1.0, %v617
  %v619 = vmul.f32 %v616, %v618
  %v620 = vadd.f32 %v616, %v619
  %vm621 = vweird.f32 %v612
  %vm622 = vweird.f32 %v616
  %vm623 = vmor %vm621, %vm622
  %v624 = vsel %vm623, %v616, %v620
  %v625 = vand.u32 2147483647, %v612
  %vm626 = vcmp.eq.f32.partialorder %v625, 8.507059e+37
  %v627 = vand.u32 %v612, 2147483648
  %v628 = vor.u32 1.1754944e-38, %v627
  %v629 = vsel %vm626, %v628, %v624
  %v630 = vmul.f32 %v607, %v629
  %v631 = vrcp.pop %v615
  %v632 = vmul.f32 %v615, %v631
  %v633 = vsub.f32 1.0, %v632
  %v634 = vmul.f32 %v631, %v633
  %v635 = vadd.f32 %v631, %v634
  %vm636 = vweird.f32 %v615
  %vm637 = vweird.f32 %v631
  %vm638 = vmor %vm636, %vm637
  %v639 = vsel %vm638, %v631, %v635
  %v640 = vand.u32 2147483647, %v615
  %vm641 = vcmp.eq.f32.partialorder %v640, 8.507059e+37
  %v642 = vand.u32 %v615, 2147483648
  %v643 = vor.u32 1.1754944e-38, %v642
  %v644 = vsel %vm641, %v643, %v639
  %v645 = vmul.f32 %v609, %v644
  %v646 = vpack.c.bf16 %v630, %v630
  %v647 = vpack.c.bf16 %v645, %v645
  %v649 = vsel %vm256, %v646, 0
  %v651 = vsel %vm310, %v553, 0
  %653 = vmatpush.bf16.msra.mxu0 0
  %654 = vmatpush.bf16.msra.mxu0 0
  %655 = vmatpush.bf16.msra.mxu0 0
  %656 = vmatpush.bf16.msra.mxu0 0
  %657 = vmatpush.bf16.msra.mxu0 0
  %658 = vmatpush.bf16.msra.mxu0 0
  %659 = vmatpush.bf16.msra.mxu0 0
  %660 = vmatpush.bf16.msra.mxu0 %v651
  %661 = vmatmul.bf16.gmra.mxu0 %v649
  %v662 = vpop.f32.mrf.mxu0
  %v663 = vadd.f32 0.0, %v662
  %v664 = vpop.f32.mrf.mxu0
  %665 = vdwg.mxu0
  %v667 = vsel %vm256, %v647, 0
  %v669 = vsel %vm310, %v576, 0
  %671 = vmatpush.bf16.msra.mxu0 0
  %672 = vmatpush.bf16.msra.mxu0 0
  %673 = vmatpush.bf16.msra.mxu0 0
  %674 = vmatpush.bf16.msra.mxu0 0
  %675 = vmatpush.bf16.msra.mxu0 0
  %676 = vmatpush.bf16.msra.mxu0 0
  %677 = vmatpush.bf16.msra.mxu0 0
  %678 = vmatpush.bf16.msra.mxu0 %v669
  %679 = vmatmul.bf16.gmra.mxu0 %v667
  %v680 = vpop.f32.mrf.mxu0
  %v681 = vadd.f32 0.0, %v680
  %v682 = vpop.f32.mrf.mxu0
  %683 = vdwg.mxu0
  %v684 = vpack.c.bf16 %v681, %v663
  %v689 = vunpack.c.l.b16 %v207
  %v690 = vunpack.c.l.b16 %v208
  %v691 = vunpack.c.l.b16 %v209
  %v692 = vunpack.c.l.b16 %v210
  %v693 = vpack.c.b16 %v690, %v689
  %v694 = vpack.c.b16 %v692, %v691
  %v698 = vsel %vm215, %v684, 0
  %700 = vmatpush.bf16.msra.mxu0 0
  %701 = vmatpush.bf16.msra.mxu0 0
  %702 = vmatpush.bf16.msra.mxu0 0
  %703 = vmatpush.bf16.msra.mxu0 0
  %704 = vmatpush.bf16.msra.mxu0 0
  %705 = vmatpush.bf16.msra.mxu0 0
  %706 = vmatpush.bf16.msra.mxu0 %v694
  %707 = vmatpush.bf16.msra.mxu0 %v693
  %708 = vmatmul.bf16.gmra.mxu0 %v698
  %v709 = vpop.f32.mrf.mxu0
  %v710 = vadd.f32 0.0, %v709
  %v711 = vpop.f32.mrf.mxu0
  %v712 = vadd.f32 0.0, %v711
  %713 = vdwg.mxu0
  %v714 = vadd.f32 %v546, %v710
  %v715 = vadd.f32 %v548, %v712
  %716 = vrot.lane.b32.xlu0 %v347, 32
  %v717 = vpop.permute.xlu0 %716
  %718 = vrot.lane.b32.xlu0 %v352, 32
  %v719 = vpop.permute.xlu0 %718
  %v721 = vsel %vm215, %v717, 0
  %v724 = vsel %vm215, %v719, 0
  %726 = vmatpush.bf16.xpose.msra.mxu0 0
  %727 = vmatpush.bf16.xpose.msra.mxu0 0
  %728 = vmatpush.bf16.xpose.msra.mxu0 0
  %729 = vmatpush.bf16.xpose.msra.mxu0 0
  %730 = vmatpush.bf16.xpose.msra.mxu0 0
  %731 = vmatpush.bf16.xpose.msra.mxu0 0
  %732 = vmatpush.bf16.xpose.msra.mxu0 0
  %733 = vmatpush.bf16.xpose.msra.mxu0 %v724
  %734 = vmatmul.bf16.gmra.mxu0 %v721
  %v735 = vpop.f32.mrf.mxu0
  %v736 = vadd.f32 0.0, %v735
  %v737 = vpop.f32.mrf.mxu0
  %738 = vdwg.mxu0
  %739 = vrot.lane.b32.xlu0 %v376, 32
  %v740 = vpop.permute.xlu0 %739
  %741 = vrot.lane.b32.xlu0 %v381, 32
  %v742 = vpop.permute.xlu0 %741
  %v744 = vsel %vm215, %v740, 0
  %v747 = vsel %vm215, %v742, 0
  %749 = vmatpush.bf16.xpose.msra.mxu0 0
  %750 = vmatpush.bf16.xpose.msra.mxu0 0
  %751 = vmatpush.bf16.xpose.msra.mxu0 0
  %752 = vmatpush.bf16.xpose.msra.mxu0 0
  %753 = vmatpush.bf16.xpose.msra.mxu0 0
  %754 = vmatpush.bf16.xpose.msra.mxu0 0
  %755 = vmatpush.bf16.xpose.msra.mxu0 0
  %756 = vmatpush.bf16.xpose.msra.mxu0 %v747
  %757 = vmatmul.bf16.gmra.mxu0 %v744
  %v758 = vpop.f32.mrf.mxu0
  %v759 = vadd.f32 0.0, %v758
  %v760 = vpop.f32.mrf.mxu0
  %761 = vdwg.mxu0
  %v762 = vmul.f32 %v736, 0.17677669
  %v763 = vmul.f32 %v759, 0.17677669
  %v764 = vsel %vm256, %v762, -inf
  %765 = vmax.xlane.f32.xlu0 %v764
  %v766 = vpop.xlane.xlu0 %765
  %v767 = vsel %vm256, %v763, -inf
  %768 = vmax.xlane.f32.xlu0 %v767
  %v769 = vpop.xlane.xlu0 %768
  %v770 = vsub.f32 %v762, %v766
  %v771 = vsub.f32 %v763, %v769
  %v772 = vmul.f32 %v770, 1.442695
  %v773 = vpow.pop %v772
  %v774 = vmul.f32 %v771, 1.442695
  %v775 = vpow.pop %v774
  %v776 = vsel %vm256, %v773, 0.0
  %777 = vadd.xlane.f32.xlu0 %v776
  %v778 = vpop.xlane.xlu0 %777
  %v779 = vsel %vm256, %v775, 0.0
  %780 = vadd.xlane.f32.xlu0 %v779
  %v781 = vpop.xlane.xlu0 %780
  %v782 = vrcp.pop %v778
  %v783 = vmul.f32 %v778, %v782
  %v784 = vsub.f32 1.0, %v783
  %v785 = vmul.f32 %v782, %v784
  %v786 = vadd.f32 %v782, %v785
  %vm787 = vweird.f32 %v778
  %vm788 = vweird.f32 %v782
  %vm789 = vmor %vm787, %vm788
  %v790 = vsel %vm789, %v782, %v786
  %v791 = vand.u32 2147483647, %v778
  %vm792 = vcmp.eq.f32.partialorder %v791, 8.507059e+37
  %v793 = vand.u32 %v778, 2147483648
  %v794 = vor.u32 1.1754944e-38, %v793
  %v795 = vsel %vm792, %v794, %v790
  %v796 = vmul.f32 %v773, %v795
  %v797 = vrcp.pop %v781
  %v798 = vmul.f32 %v781, %v797
  %v799 = vsub.f32 1.0, %v798
  %v800 = vmul.f32 %v797, %v799
  %v801 = vadd.f32 %v797, %v800
  %vm802 = vweird.f32 %v781
  %vm803 = vweird.f32 %v797
  %vm804 = vmor %vm802, %vm803
  %v805 = vsel %vm804, %v797, %v801
  %v806 = vand.u32 2147483647, %v781
  %vm807 = vcmp.eq.f32.partialorder %v806, 8.507059e+37
  %v808 = vand.u32 %v781, 2147483648
  %v809 = vor.u32 1.1754944e-38, %v808
  %v810 = vsel %vm807, %v809, %v805
  %v811 = vmul.f32 %v775, %v810
  %v812 = vpack.c.bf16 %v796, %v796
  %v813 = vpack.c.bf16 %v811, %v811
  %v815 = vsel %vm256, %v812, 0
  %v817 = vsel %vm310, %v719, 0
  %819 = vmatpush.bf16.msra.mxu0 0
  %820 = vmatpush.bf16.msra.mxu0 0
  %821 = vmatpush.bf16.msra.mxu0 0
  %822 = vmatpush.bf16.msra.mxu0 0
  %823 = vmatpush.bf16.msra.mxu0 0
  %824 = vmatpush.bf16.msra.mxu0 0
  %825 = vmatpush.bf16.msra.mxu0 0
  %826 = vmatpush.bf16.msra.mxu0 %v817
  %827 = vmatmul.bf16.gmra.mxu0 %v815
  %v828 = vpop.f32.mrf.mxu0
  %v829 = vadd.f32 0.0, %v828
  %v830 = vpop.f32.mrf.mxu0
  %831 = vdwg.mxu0
  %v833 = vsel %vm256, %v813, 0
  %v835 = vsel %vm310, %v742, 0
  %837 = vmatpush.bf16.msra.mxu0 0
  %838 = vmatpush.bf16.msra.mxu0 0
  %839 = vmatpush.bf16.msra.mxu0 0
  %840 = vmatpush.bf16.msra.mxu0 0
  %841 = vmatpush.bf16.msra.mxu0 0
  %842 = vmatpush.bf16.msra.mxu0 0
  %843 = vmatpush.bf16.msra.mxu0 0
  %844 = vmatpush.bf16.msra.mxu0 %v835
  %845 = vmatmul.bf16.gmra.mxu0 %v833
  %v846 = vpop.f32.mrf.mxu0
  %v847 = vadd.f32 0.0, %v846
  %v848 = vpop.f32.mrf.mxu0
  %849 = vdwg.mxu0
  %v850 = vpack.c.bf16 %v847, %v829
  %v855 = vunpack.c.l.b16 %v211
  %v856 = vunpack.c.l.b16 %v212
  %v857 = vunpack.c.l.b16 %v213
  %v858 = vunpack.c.l.b16 %v214
  %v859 = vpack.c.b16 %v856, %v855
  %v860 = vpack.c.b16 %v858, %v857
  %v864 = vsel %vm215, %v850, 0
  %866 = vmatpush.bf16.msra.mxu0 0
  %867 = vmatpush.bf16.msra.mxu0 0
  %868 = vmatpush.bf16.msra.mxu0 0
  %869 = vmatpush.bf16.msra.mxu0 0
  %870 = vmatpush.bf16.msra.mxu0 0
  %871 = vmatpush.bf16.msra.mxu0 0
  %872 = vmatpush.bf16.msra.mxu0 %v860
  %873 = vmatpush.bf16.msra.mxu0 %v859
  %874 = vmatmul.bf16.gmra.mxu0 %v864
  %v875 = vpop.f32.mrf.mxu0
  %v876 = vadd.f32 0.0, %v875
  %v877 = vpop.f32.mrf.mxu0
  %v878 = vadd.f32 0.0, %v877
  %879 = vdwg.mxu0
  %v880 = vadd.f32 %v714, %v876
  %v881 = vadd.f32 %v715, %v878
  %v882 = vld [vmem:[%s4] sm:$0x1]
  %v883 = vld [vmem:[%s5] sm:$0x1]
  %884 = vadd.xlane.f32.xlu0 %v880
  %v885 = vpop.xlane.xlu0 %884
  %886 = vadd.xlane.f32.xlu0 %v881
  %v887 = vpop.xlane.xlu0 %886
  %v888 = vrcp.pop 128.0
  %v889 = vmul.f32 128.0, %v888
  %v890 = vsub.f32 1.0, %v889
  %v891 = vmul.f32 %v888, %v890
  %v892 = vadd.f32 %v888, %v891
  %vm893 = vweird.f32 %v888
  %v894 = vsel %vm893, %v888, %v892
  %v895 = vmul.f32 %v885, %v894
  %v896 = vmul.f32 %v887, %v894
  %v897 = vsub.f32 %v880, %v895
  %v898 = vsub.f32 %v881, %v896
  %v899 = vmul.f32 %v897, %v897
  %v900 = vmul.f32 %v898, %v898
  %901 = vadd.xlane.f32.xlu0 %v899
  %v902 = vpop.xlane.xlu0 %901
  %903 = vadd.xlane.f32.xlu0 %v900
  %v904 = vpop.xlane.xlu0 %903
  %v905 = vmul.f32 %v902, %v894
  %v906 = vmul.f32 %v904, %v894
  %v907 = vadd.f32 %v905, 1e-05
  %v908 = vadd.f32 %v906, 1e-05
  %v909 = vrsqrt.pop %v907
  %v910 = vmul.f32 %v909, %v907
  %v911 = vmul.f32 %v910, %v909
  %v912 = vmul.f32 0.5, %v911
  %v913 = vsub.f32 1.5, %v912
  %v914 = vmul.f32 %v909, %v913
  %vm915 = vweird.f32 %v907
  %vm916 = vweird.f32 %v909
  %vm917 = vmor %vm915, %vm916
  %v918 = vsel %vm917, %v909, %v914
  %v919 = vrsqrt.pop %v908
  %v920 = vmul.f32 %v919, %v908
  %v921 = vmul.f32 %v920, %v919
  %v922 = vmul.f32 0.5, %v921
  %v923 = vsub.f32 1.5, %v922
  %v924 = vmul.f32 %v919, %v923
  %vm925 = vweird.f32 %v908
  %vm926 = vweird.f32 %v919
  %vm927 = vmor %vm925, %vm926
  %v928 = vsel %vm927, %v919, %v924
  %v929 = vmul.f32 %v897, %v918
  %v930 = vmul.f32 %v898, %v928
  %v932 = vperm.slane %v882, 0
  %v934 = vmul.f32 %v929, %v932
  %v935 = vmul.f32 %v930, %v932
  %v937 = vperm.slane %v883, 0
  %v939 = vadd.f32 %v934, %v937
  %v940 = vadd.f32 %v935, %v937
  %v941 = vpack.c.bf16 %v940, %v939
  %v942 = vld [vmem:[%s6] sm:$0xf]
  %v943 = vld [vmem:[%s6 + $0x4] sm:$0xf]
  %v944 = vld [vmem:[%s6 + $0x8] sm:$0xf]
  %v945 = vld [vmem:[%s6 + $0xc] sm:$0xf]
  %v946 = vld [vmem:[%s6 + $0x10] sm:$0xf]
  %v947 = vld [vmem:[%s6 + $0x14] sm:$0xf]
  %v948 = vld [vmem:[%s6 + $0x18] sm:$0xf]
  %v949 = vld [vmem:[%s6 + $0x1c] sm:$0xf]
  %v950 = vld [vmem:[%s6 + $0x20] sm:$0xf]
  %v951 = vld [vmem:[%s6 + $0x24] sm:$0xf]
  %v952 = vld [vmem:[%s6 + $0x28] sm:$0xf]
  %v953 = vld [vmem:[%s6 + $0x2c] sm:$0xf]
  %v954 = vld [vmem:[%s6 + $0x30] sm:$0xf]
  %v955 = vld [vmem:[%s6 + $0x34] sm:$0xf]
  %v956 = vld [vmem:[%s6 + $0x38] sm:$0xf]
  %v957 = vld [vmem:[%s6 + $0x3c] sm:$0xf]
  %v958 = vld [vmem:[%s7] sm:$0x1]
  %v960 = vperm.slane %v958, 0
  %v978 = vunpack.c.l.b16 %v942
  %v979 = vunpack.c.l.b16 %v943
  %v980 = vunpack.c.l.b16 %v944
  %v981 = vunpack.c.l.b16 %v945
  %v982 = vunpack.c.l.b16 %v946
  %v983 = vunpack.c.l.b16 %v947
  %v984 = vunpack.c.l.b16 %v948
  %v985 = vunpack.c.l.b16 %v949
  %v986 = vunpack.c.l.b16 %v950
  %v987 = vunpack.c.l.b16 %v951
  %v988 = vunpack.c.l.b16 %v952
  %v989 = vunpack.c.l.b16 %v953
  %v990 = vunpack.c.l.b16 %v954
  %v991 = vunpack.c.l.b16 %v955
  %v992 = vunpack.c.l.b16 %v956
  %v993 = vunpack.c.l.b16 %v957
  %v994 = vpack.c.b16 %v979, %v978
  %v995 = vpack.c.b16 %v981, %v980
  %v996 = vpack.c.b16 %v983, %v982
  %v997 = vpack.c.b16 %v985, %v984
  %v998 = vpack.c.b16 %v987, %v986
  %v999 = vpack.c.b16 %v989, %v988
  %v1000 = vpack.c.b16 %v991, %v990
  %v1001 = vpack.c.b16 %v993, %v992
  %1010 = vmatpush.bf16.msra.mxu0 %v1001
  %1011 = vmatpush.bf16.msra.mxu0 %v1000
  %1012 = vmatpush.bf16.msra.mxu0 %v999
  %1013 = vmatpush.bf16.msra.mxu0 %v998
  %1014 = vmatpush.bf16.msra.mxu0 %v997
  %1015 = vmatpush.bf16.msra.mxu0 %v996
  %1016 = vmatpush.bf16.msra.mxu0 %v995
  %1017 = vmatpush.bf16.msra.mxu0 %v994
  %1018 = vmatmul.bf16.gmra.mxu0 %v941
  %v1019 = vpop.f32.mrf.mxu0
  %v1020 = vadd.f32 %v960, %v1019
  %v1021 = vpop.f32.mrf.mxu0
  %v1022 = vadd.f32 %v960, %v1021
  %1023 = vdwg.mxu0
  %v1024 = vadd.f32 %v939, %v1020
  %v1025 = vadd.f32 %v940, %v1022
  %v1026 = vld [vmem:[%s8] sm:$0x1]
  %v1027 = vld [vmem:[%s9] sm:$0x1]
  %1028 = vadd.xlane.f32.xlu0 %v1024
  %v1029 = vpop.xlane.xlu0 %1028
  %1030 = vadd.xlane.f32.xlu0 %v1025
  %v1031 = vpop.xlane.xlu0 %1030
  %v1032 = vmul.f32 %v1029, %v894
  %v1033 = vmul.f32 %v1031, %v894
  %v1034 = vsub.f32 %v1024, %v1032
  %v1035 = vsub.f32 %v1025, %v1033
  %v1036 = vmul.f32 %v1034, %v1034
  %v1037 = vmul.f32 %v1035, %v1035
  %1038 = vadd.xlane.f32.xlu0 %v1036
  %v1039 = vpop.xlane.xlu0 %1038
  %1040 = vadd.xlane.f32.xlu0 %v1037
  %v1041 = vpop.xlane.xlu0 %1040
  %v1042 = vmul.f32 %v1039, %v894
  %v1043 = vmul.f32 %v1041, %v894
  %v1044 = vadd.f32 %v1042, 1e-05
  %v1045 = vadd.f32 %v1043, 1e-05
  %v1046 = vrsqrt.pop %v1044
  %v1047 = vmul.f32 %v1046, %v1044
  %v1048 = vmul.f32 %v1047, %v1046
  %v1049 = vmul.f32 0.5, %v1048
  %v1050 = vsub.f32 1.5, %v1049
  %v1051 = vmul.f32 %v1046, %v1050
  %vm1052 = vweird.f32 %v1044
  %vm1053 = vweird.f32 %v1046
  %vm1054 = vmor %vm1052, %vm1053
  %v1055 = vsel %vm1054, %v1046, %v1051
  %v1056 = vrsqrt.pop %v1045
  %v1057 = vmul.f32 %v1056, %v1045
  %v1058 = vmul.f32 %v1057, %v1056
  %v1059 = vmul.f32 0.5, %v1058
  %v1060 = vsub.f32 1.5, %v1059
  %v1061 = vmul.f32 %v1056, %v1060
  %vm1062 = vweird.f32 %v1045
  %vm1063 = vweird.f32 %v1056
  %vm1064 = vmor %vm1062, %vm1063
  %v1065 = vsel %vm1064, %v1056, %v1061
  %v1066 = vmul.f32 %v1034, %v1055
  %v1067 = vmul.f32 %v1035, %v1065
  %v1069 = vperm.slane %v1026, 0
  %v1071 = vmul.f32 %v1066, %v1069
  %v1072 = vmul.f32 %v1067, %v1069
  %v1074 = vperm.slane %v1027, 0
  %v1076 = vadd.f32 %v1071, %v1074
  %v1077 = vadd.f32 %v1072, %v1074
  %1078 = vst [vmem:[%s10] sm:$0xff] %v1076
  %1079 = vst [vmem:[%s10 + $0x8] sm:$0xff] %v1077
  // Predicated region
  $region42: #{forward.4} parent=0 // pred_check
    _
  $region43: #{forward.4} parent=0 // pred_check_branch
    %1081 = sbr.rel (0) target = $region45
  $region44: #{forward.4} parent=0 // pred_region
    _
  $region45: #{forward.4} parent=0 // pred_fallthru
    _
  // Predicated region
  $region46: #{forward.4} parent=0 // pred_check
    _
  $region47: #{forward.4} parent=0 // pred_check_branch
    %1083 = sbr.rel (0) target = $region49
  $region48: #{forward.4} parent=0 // pred_region
    _
  $region49: #{forward.4} parent=0 // pred_fallthru
    _

// kernel: forward.3
$region0: #{forward.3}
  #allocation0 [shape = 'u32[]', space=smem, size = 0x4, offset = 0x4, fixed_abs, tag = 'smem constant byte address 0x4 - core index']
  #allocation1 [shape = 'u32[72,128]{1,0:T(1,128)}', space=vmem, size = 0x9000, scoped, tag = 'internal scratch']
  %s0 = inlined_call_operand.hbm [shape: f32[2,8,128], index: 0, kind: input, shape index: {}]
  %s1 = inlined_call_operand.hbm [shape: bf16[128,128], index: 1, kind: input, shape index: {}]
  %s2 = inlined_call_operand.hbm [shape: bf16[128,128], index: 2, kind: input, shape index: {}]
  %s3 = inlined_call_operand.hbm [shape: bf16[128,128], index: 3, kind: input, shape index: {}]
  %s4 = inlined_call_operand.vmem [shape: f32[1,128], index: 4, kind: input, shape index: {}]
  %s5 = inlined_call_operand.hbm [shape: f32[1,128], index: 5, kind: input, shape index: {}]
  %s6 = inlined_call_operand.hbm [shape: bf16[128,128], index: 6, kind: input, shape index: {}]
  %s7 = inlined_call_operand.hbm [shape: f32[1,128], index: 7, kind: input, shape index: {}]
  %s8 = inlined_call_operand.vmem [shape: f32[1,128], index: 8, kind: input, shape index: {}]
  %s9 = inlined_call_operand.vmem [shape: f32[1,128], index: 9, kind: input, shape index: {}]
  %s10 = inlined_call_operand.vmem [shape: f32[2,8,128], index: 10, kind: output, shape index: {}]
  %s11 = sld [smem:[#allocation0]]
  $region78: #{forward.3} parent=0
    _
  %s13 = ssub.s32 1, %s11
  %s14 = scalar_select 0, %s13, %s11
  $region1: #{forward.3} parent=0
    #allocation2 [shape = 'u8[8192]{0}', space=vmem, size = 0x2000, scoped, tag = 'input window, operand 0, single buffered']
    #allocation3 [shape = 's32[1]{0}', space=sflag, size = 0x4, scoped, tag = 'scoped memory for forward.3']
    #allocation4 [shape = 'u8[32768]{0}', space=vmem, size = 0x8000, scoped, tag = 'input window, operand 1, single buffered']
    #allocation5 [shape = 's32[1]{0}', space=sflag, size = 0x4, scoped, tag = 'scoped memory for forward.3']
    #allocation6 [shape = 'u8[32768]{0}', space=vmem, size = 0x8000, scoped, tag = 'input window, operand 2, single buffered']
    #allocation7 [shape = 'u8[32768]{0}', space=vmem, size = 0x8000, scoped, tag = 'input window, operand 3, single buffered']
    #allocation8 [shape = 's32[1]{0}', space=sflag, size = 0x4, scoped, tag = 'scoped memory for forward.3']
    #allocation9 [shape = 'u8[512]{0}', space=vmem, size = 0x400, scoped, tag = 'input window, operand 5, single buffered']
    #allocation10 [shape = 'u8[32768]{0}', space=vmem, size = 0x8000, scoped, tag = 'input window, operand 6, single buffered']
    #allocation11 [shape = 's32[1]{0}', space=sflag, size = 0x4, scoped, tag = 'scoped memory for forward.3']
    #allocation12 [shape = 'u8[512]{0}', space=vmem, size = 0x400, scoped, tag = 'input window, operand 7, single buffered']
    %15 = vsyncpa [#allocation3], 0
    %16 = vsyncpa [#allocation5], 0
    %17 = vsyncpa [#allocation8], 0
    %18 = vsyncpa [#allocation11], 0
    // Predicated region
    $region2: #{forward.3} parent=1 // pred_check
      _
    $region3: #{forward.3} parent=1 // pred_check_branch
      %20 = sbr.rel (0) target = $region5
    $region4: #{forward.3} parent=1 // pred_region
      %22 = vsyncadd [#allocation3], 0
      %s23 = sshll.u32 %s0, 4
      %s24 = int_to_ptr.hbm [resolvable:$true] %s23
      %s25 = sshll.u32 [#allocation2], 4
      %s26 = int_to_ptr.vmem [resolvable:$true] %s25
      %31 = dma.hbm_to_vmem [thread:$0]  %s24, 256, %s26, [#allocation3], 128, 128, 8
    $region5: #{forward.3} parent=1 // pred_fallthru
      _
    // Predicated region
    $region6: #{forward.3} parent=1 // pred_check
      _
    $region7: #{forward.3} parent=1 // pred_check_branch
      %33 = sbr.rel (0) target = $region9
    $region8: #{forward.3} parent=1 // pred_region
      %35 = vsyncadd [#allocation5], 0
      %s36 = sshll.u32 %s1, 4
      %s37 = int_to_ptr.hbm [resolvable:$true] %s36
      %s38 = sshll.u32 [#allocation4], 4
      %s39 = int_to_ptr.vmem [resolvable:$true] %s38
      %44 = dma.hbm_to_vmem [thread:$0]  %s37, 1024, %s39, [#allocation5], 64, 64, 4
    $region9: #{forward.3} parent=1 // pred_fallthru
      _
    // Predicated region
    $region10: #{forward.3} parent=1 // pred_check
      _
    $region11: #{forward.3} parent=1 // pred_check_branch
      %46 = sbr.rel (0) target = $region13
    $region12: #{forward.3} parent=1 // pred_region
      %48 = vsyncadd [#allocation5], 0
      %s49 = sshll.u32 %s2, 4
      %s50 = int_to_ptr.hbm [resolvable:$true] %s49
      %s51 = sshll.u32 [#allocation6], 4
      %s52 = int_to_ptr.vmem [resolvable:$true] %s51
      %57 = dma.hbm_to_vmem [thread:$0]  %s50, 1024, %s52, [#allocation5], 64, 64, 4
    $region13: #{forward.3} parent=1 // pred_fallthru
      _
    // Predicated region
    $region14: #{forward.3} parent=1 // pred_check
      _
    $region15: #{forward.3} parent=1 // pred_check_branch
      %59 = sbr.rel (0) target = $region17
    $region16: #{forward.3} parent=1 // pred_region
      %61 = vsyncadd [#allocation8], 0
      %s62 = sshll.u32 %s3, 4
      %s63 = int_to_ptr.hbm [resolvable:$true] %s62
      %s64 = sshll.u32 [#allocation7], 4
      %s65 = int_to_ptr.vmem [resolvable:$true] %s64
      %70 = dma.hbm_to_vmem [thread:$0]  %s63, 1024, %s65, [#allocation8], 64, 64, 4
    $region17: #{forward.3} parent=1 // pred_fallthru
      _
    // Predicated region
    $region18: #{forward.3} parent=1 // pred_check
      _
    $region19: #{forward.3} parent=1 // pred_check_branch
      %72 = sbr.rel (0) target = $region21
    $region20: #{forward.3} parent=1 // pred_region
      _
    $region21: #{forward.3} parent=1 // pred_fallthru
      _
    // Predicated region
    $region22: #{forward.3} parent=1 // pred_check
      _
    $region23: #{forward.3} parent=1 // pred_check_branch
      %74 = sbr.rel (0) target = $region25
    $region24: #{forward.3} parent=1 // pred_region
      %76 = vsyncadd [#allocation8], 0
      %s78 = sshll.u32 %s5, 4
      %s79 = int_to_ptr.hbm [resolvable:$true] %s78
      %s80 = sshll.u32 [#allocation9], 4
      %s81 = int_to_ptr.vmem [resolvable:$true] %s80
      %83 = dma.hbm_to_vmem [thread:$0]  %s79, 16, %s81, [#allocation8]
    $region25: #{forward.3} parent=1 // pred_fallthru
      _
    // Predicated region
    $region26: #{forward.3} parent=1 // pred_check
      _
    $region27: #{forward.3} parent=1 // pred_check_branch
      %85 = sbr.rel (0) target = $region29
    $region28: #{forward.3} parent=1 // pred_region
      %87 = vsyncadd [#allocation11], 0
      %s88 = sshll.u32 %s6, 4
      %s89 = int_to_ptr.hbm [resolvable:$true] %s88
      %s90 = sshll.u32 [#allocation10], 4
      %s91 = int_to_ptr.vmem [resolvable:$true] %s90
      %96 = dma.hbm_to_vmem [thread:$0]  %s89, 1024, %s91, [#allocation11], 64, 64, 4
    $region29: #{forward.3} parent=1 // pred_fallthru
      _
    // Predicated region
    $region30: #{forward.3} parent=1 // pred_check
      _
    $region31: #{forward.3} parent=1 // pred_check_branch
      %98 = sbr.rel (0) target = $region33
    $region32: #{forward.3} parent=1 // pred_region
      %100 = vsyncadd [#allocation11], 0
      %s102 = sshll.u32 %s7, 4
      %s103 = int_to_ptr.hbm [resolvable:$true] %s102
      %s104 = sshll.u32 [#allocation12], 4
      %s105 = int_to_ptr.vmem [resolvable:$true] %s104
      %107 = dma.hbm_to_vmem [thread:$0]  %s103, 16, %s105, [#allocation11]
    $region33: #{forward.3} parent=1 // pred_fallthru
      _
    // Predicated region
    $region34: #{forward.3} parent=1 // pred_check
      _
    $region35: #{forward.3} parent=1 // pred_check_branch
      %109 = sbr.rel (0) target = $region37
    $region36: #{forward.3} parent=1 // pred_region
      _
    $region37: #{forward.3} parent=1 // pred_fallthru
      _
    // Predicated region
    $region38: #{forward.3} parent=1 // pred_check
      _
    $region39: #{forward.3} parent=1 // pred_check_branch
      %111 = sbr.rel (0) target = $region41
    $region40: #{forward.3} parent=1 // pred_region
      _
    $region41: #{forward.3} parent=1 // pred_fallthru
      _
    // Predicated region
    $region42: #{forward.3} parent=1 // pred_check
      _
    $region43: #{forward.3} parent=1 // pred_check_branch
      %113 = sbr.rel (0) target = $region45
    $region44: #{forward.3} parent=1 // pred_region
      %115 = dma.done [#allocation3], 256
    $region45: #{forward.3} parent=1 // pred_fallthru
      _
    // Predicated region
    $region46: #{forward.3} parent=1 // pred_check
      _
    $region47: #{forward.3} parent=1 // pred_check_branch
      %117 = sbr.rel (0) target = $region49
    $region48: #{forward.3} parent=1 // pred_region
      %119 = dma.done [#allocation5], 1024
    $region49: #{forward.3} parent=1 // pred_fallthru
      _
    // Predicated region
    $region50: #{forward.3} parent=1 // pred_check
      _
    $region51: #{forward.3} parent=1 // pred_check_branch
      %121 = sbr.rel (0) target = $region53
    $region52: #{forward.3} parent=1 // pred_region
      %123 = dma.done [#allocation5], 1024
    $region53: #{forward.3} parent=1 // pred_fallthru
      _
    // Predicated region
    $region54: #{forward.3} parent=1 // pred_check
      _
    $region55: #{forward.3} parent=1 // pred_check_branch
      %125 = sbr.rel (0) target = $region57
    $region56: #{forward.3} parent=1 // pred_region
      %127 = dma.done [#allocation8], 1024
    $region57: #{forward.3} parent=1 // pred_fallthru
      _
    // Predicated region
    $region58: #{forward.3} parent=1 // pred_check
      _
    $region59: #{forward.3} parent=1 // pred_check_branch
      %129 = sbr.rel (0) target = $region61
    $region60: #{forward.3} parent=1 // pred_region
      %131 = dma.done [#allocation8], 16
    $region61: #{forward.3} parent=1 // pred_fallthru
      _
    // Predicated region
    $region62: #{forward.3} parent=1 // pred_check
      _
    $region63: #{forward.3} parent=1 // pred_check_branch
      %133 = sbr.rel (0) target = $region65
    $region64: #{forward.3} parent=1 // pred_region
      %135 = dma.done [#allocation11], 1024
    $region65: #{forward.3} parent=1 // pred_fallthru
      _
    // Predicated region
    $region66: #{forward.3} parent=1 // pred_check
      _
    $region67: #{forward.3} parent=1 // pred_check_branch
      %137 = sbr.rel (0) target = $region69
    $region68: #{forward.3} parent=1 // pred_region
      %139 = dma.done [#allocation11], 16
    $region69: #{forward.3} parent=1 // pred_fallthru
      _
    %v141 = vld [vmem:[#allocation2] sm:$0xff]
    %v142 = vld [vmem:[#allocation2 + $0x8] sm:$0xff]
    %v143 = vpack.c.bf16 %v142, %v141
    %v144 = vld [vmem:[#allocation4] sm:$0xf]
    %v145 = vld [vmem:[#allocation4 + $0x4] sm:$0xf]
    %v146 = vld [vmem:[#allocation4 + $0x8] sm:$0xf]
    %v147 = vld [vmem:[#allocation4 + $0xc] sm:$0xf]
    %v148 = vld [vmem:[#allocation4 + $0x10] sm:$0xf]
    %v149 = vld [vmem:[#allocation4 + $0x14] sm:$0xf]
    %v150 = vld [vmem:[#allocation4 + $0x18] sm:$0xf]
    %v151 = vld [vmem:[#allocation4 + $0x1c] sm:$0xf]
    %v152 = vld [vmem:[#allocation4 + $0x20] sm:$0xf]
    %v153 = vld [vmem:[#allocation4 + $0x24] sm:$0xf]
    %v154 = vld [vmem:[#allocation4 + $0x28] sm:$0xf]
    %v155 = vld [vmem:[#allocation4 + $0x2c] sm:$0xf]
    %v156 = vld [vmem:[#allocation4 + $0x30] sm:$0xf]
    %v157 = vld [vmem:[#allocation4 + $0x34] sm:$0xf]
    %v158 = vld [vmem:[#allocation4 + $0x38] sm:$0xf]
    %v159 = vld [vmem:[#allocation4 + $0x3c] sm:$0xf]
    %v176 = vunpack.c.l.b16 %v144
    %v177 = vunpack.c.l.b16 %v145
    %v178 = vunpack.c.l.b16 %v146
    %v179 = vunpack.c.l.b16 %v147
    %v180 = vunpack.c.l.b16 %v148
    %v181 = vunpack.c.l.b16 %v149
    %v182 = vunpack.c.l.b16 %v150
    %v183 = vunpack.c.l.b16 %v151
    %v184 = vunpack.c.l.b16 %v152
    %v185 = vunpack.c.l.b16 %v153
    %v186 = vunpack.c.l.b16 %v154
    %v187 = vunpack.c.l.b16 %v155
    %v188 = vunpack.c.l.b16 %v156
    %v189 = vunpack.c.l.b16 %v157
    %v190 = vunpack.c.l.b16 %v158
    %v191 = vunpack.c.l.b16 %v159
    %v192 = vpack.c.b16 %v177, %v176
    %v193 = vpack.c.b16 %v179, %v178
    %v194 = vpack.c.b16 %v181, %v180
    %v195 = vpack.c.b16 %v183, %v182
    %v196 = vpack.c.b16 %v185, %v184
    %v197 = vpack.c.b16 %v187, %v186
    %v198 = vpack.c.b16 %v189, %v188
    %v199 = vpack.c.b16 %v191, %v190
    %208 = vmatpush.bf16.msra.mxu0 %v199
    %209 = vmatpush.bf16.msra.mxu0 %v198
    %210 = vmatpush.bf16.msra.mxu0 %v197
    %211 = vmatpush.bf16.msra.mxu0 %v196
    %212 = vmatpush.bf16.msra.mxu0 %v195
    %213 = vmatpush.bf16.msra.mxu0 %v194
    %214 = vmatpush.bf16.msra.mxu0 %v193
    %215 = vmatpush.bf16.msra.mxu0 %v192
    %216 = vmatmul.bf16.gmra.mxu0 %v143
    %v217 = vpop.f32.mrf.mxu0
    %v218 = vadd.f32 0.0, %v217
    %v219 = vpop.f32.mrf.mxu0
    %v220 = vadd.f32 0.0, %v219
    %221 = vdwg.mxu0
    %v222 = vld [vmem:[#allocation6] sm:$0xf]
    %v223 = vld [vmem:[#allocation6 + $0x4] sm:$0xf]
    %v224 = vld [vmem:[#allocation6 + $0x8] sm:$0xf]
    %v225 = vld [vmem:[#allocation6 + $0xc] sm:$0xf]
    %v226 = vld [vmem:[#allocation6 + $0x10] sm:$0xf]
    %v227 = vld [vmem:[#allocation6 + $0x14] sm:$0xf]
    %v228 = vld [vmem:[#allocation6 + $0x18] sm:$0xf]
    %v229 = vld [vmem:[#allocation6 + $0x1c] sm:$0xf]
    %v230 = vld [vmem:[#allocation6 + $0x20] sm:$0xf]
    %v231 = vld [vmem:[#allocation6 + $0x24] sm:$0xf]
    %v232 = vld [vmem:[#allocation6 + $0x28] sm:$0xf]
    %v233 = vld [vmem:[#allocation6 + $0x2c] sm:$0xf]
    %v234 = vld [vmem:[#allocation6 + $0x30] sm:$0xf]
    %v235 = vld [vmem:[#allocation6 + $0x34] sm:$0xf]
    %v236 = vld [vmem:[#allocation6 + $0x38] sm:$0xf]
    %v237 = vld [vmem:[#allocation6 + $0x3c] sm:$0xf]
    %v254 = vunpack.c.l.b16 %v222
    %v255 = vunpack.c.l.b16 %v223
    %v256 = vunpack.c.l.b16 %v224
    %v257 = vunpack.c.l.b16 %v225
    %v258 = vunpack.c.l.b16 %v226
    %v259 = vunpack.c.l.b16 %v227
    %v260 = vunpack.c.l.b16 %v228
    %v261 = vunpack.c.l.b16 %v229
    %v262 = vunpack.c.l.b16 %v230
    %v263 = vunpack.c.l.b16 %v231
    %v264 = vunpack.c.l.b16 %v232
    %v265 = vunpack.c.l.b16 %v233
    %v266 = vunpack.c.l.b16 %v234
    %v267 = vunpack.c.l.b16 %v235
    %v268 = vunpack.c.l.b16 %v236
    %v269 = vunpack.c.l.b16 %v237
    %v270 = vpack.c.b16 %v255, %v254
    %v271 = vpack.c.b16 %v257, %v256
    %v272 = vpack.c.b16 %v259, %v258
    %v273 = vpack.c.b16 %v261, %v260
    %v274 = vpack.c.b16 %v263, %v262
    %v275 = vpack.c.b16 %v265, %v264
    %v276 = vpack.c.b16 %v267, %v266
    %v277 = vpack.c.b16 %v269, %v268
    %286 = vmatpush.bf16.msra.mxu0 %v277
    %287 = vmatpush.bf16.msra.mxu0 %v276
    %288 = vmatpush.bf16.msra.mxu0 %v275
    %289 = vmatpush.bf16.msra.mxu0 %v274
    %290 = vmatpush.bf16.msra.mxu0 %v273
    %291 = vmatpush.bf16.msra.mxu0 %v272
    %292 = vmatpush.bf16.msra.mxu0 %v271
    %293 = vmatpush.bf16.msra.mxu0 %v270
    %294 = vmatmul.bf16.gmra.mxu0 %v143
    %v295 = vpop.f32.mrf.mxu0
    %v296 = vadd.f32 0.0, %v295
    %v297 = vpop.f32.mrf.mxu0
    %v298 = vadd.f32 0.0, %v297
    %299 = vdwg.mxu0
    %v300 = vpack.c.bf16 %v218, %v218
    %v301 = vpack.c.bf16 %v220, %v220
    %v302 = vpack.c.bf16 %v296, %v296
    %v303 = vpack.c.bf16 %v298, %v298
    %v304 = vld [vmem:[#allocation7] sm:$0xf]
    %v305 = vld [vmem:[#allocation7 + $0x4] sm:$0xf]
    %v306 = vld [vmem:[#allocation7 + $0x8] sm:$0xf]
    %v307 = vld [vmem:[#allocation7 + $0xc] sm:$0xf]
    %v308 = vld [vmem:[#allocation7 + $0x10] sm:$0xf]
    %v309 = vld [vmem:[#allocation7 + $0x14] sm:$0xf]
    %v310 = vld [vmem:[#allocation7 + $0x18] sm:$0xf]
    %v311 = vld [vmem:[#allocation7 + $0x1c] sm:$0xf]
    %v312 = vld [vmem:[#allocation7 + $0x20] sm:$0xf]
    %v313 = vld [vmem:[#allocation7 + $0x24] sm:$0xf]
    %v314 = vld [vmem:[#allocation7 + $0x28] sm:$0xf]
    %v315 = vld [vmem:[#allocation7 + $0x2c] sm:$0xf]
    %v316 = vld [vmem:[#allocation7 + $0x30] sm:$0xf]
    %v317 = vld [vmem:[#allocation7 + $0x34] sm:$0xf]
    %v318 = vld [vmem:[#allocation7 + $0x38] sm:$0xf]
    %v319 = vld [vmem:[#allocation7 + $0x3c] sm:$0xf]
    %vm320 = vcmask 261120
    %v322 = vsel %vm320, %v300, 0
    %v325 = vsel %vm320, %v302, 0
    %327 = vmatpush.bf16.xpose.msra.mxu0 0
    %328 = vmatpush.bf16.xpose.msra.mxu0 0
    %329 = vmatpush.bf16.xpose.msra.mxu0 0
    %330 = vmatpush.bf16.xpose.msra.mxu0 0
    %331 = vmatpush.bf16.xpose.msra.mxu0 0
    %332 = vmatpush.bf16.xpose.msra.mxu0 0
    %333 = vmatpush.bf16.xpose.msra.mxu0 0
    %334 = vmatpush.bf16.xpose.msra.mxu0 %v325
    %335 = vmatmul.bf16.gmra.mxu0 %v322
    %v336 = vpop.f32.mrf.mxu0
    %v337 = vadd.f32 0.0, %v336
    %v338 = vpop.f32.mrf.mxu0
    %339 = vdwg.mxu0
    %v341 = vsel %vm320, %v301, 0
    %v344 = vsel %vm320, %v303, 0
    %346 = vmatpush.bf16.xpose.msra.mxu0 0
    %347 = vmatpush.bf16.xpose.msra.mxu0 0
    %348 = vmatpush.bf16.xpose.msra.mxu0 0
    %349 = vmatpush.bf16.xpose.msra.mxu0 0
    %350 = vmatpush.bf16.xpose.msra.mxu0 0
    %351 = vmatpush.bf16.xpose.msra.mxu0 0
    %352 = vmatpush.bf16.xpose.msra.mxu0 0
    %353 = vmatpush.bf16.xpose.msra.mxu0 %v344
    %354 = vmatmul.bf16.gmra.mxu0 %v341
    %v355 = vpop.f32.mrf.mxu0
    %v356 = vadd.f32 0.0, %v355
    %v357 = vpop.f32.mrf.mxu0
    %358 = vdwg.mxu0
    %v359 = vmul.f32 %v337, 0.17677669
    %v360 = vmul.f32 %v356, 0.17677669
    %vm361 = vcmask 64512
    %v362 = vsel %vm361, %v359, -inf
    %363 = vmax.xlane.f32.xlu0 %v362
    %v364 = vpop.xlane.xlu0 %363
    %v365 = vsel %vm361, %v360, -inf
    %366 = vmax.xlane.f32.xlu0 %v365
    %v367 = vpop.xlane.xlu0 %366
    %v368 = vsub.f32 %v359, %v364
    %v369 = vsub.f32 %v360, %v367
    %v370 = vmul.f32 %v368, 1.442695
    %v371 = vpow.pop %v370
    %v372 = vmul.f32 %v369, 1.442695
    %v373 = vpow.pop %v372
    %v374 = vsel %vm361, %v371, 0.0
    %375 = vadd.xlane.f32.xlu0 %v374
    %v376 = vpop.xlane.xlu0 %375
    %v377 = vsel %vm361, %v373, 0.0
    %378 = vadd.xlane.f32.xlu0 %v377
    %v379 = vpop.xlane.xlu0 %378
    %v380 = vrcp.pop %v376
    %v381 = vmul.f32 %v376, %v380
    %v382 = vsub.f32 1.0, %v381
    %v383 = vmul.f32 %v380, %v382
    %v384 = vadd.f32 %v380, %v383
    %vm385 = vweird.f32 %v376
    %vm386 = vweird.f32 %v380
    %vm387 = vmor %vm385, %vm386
    %v388 = vsel %vm387, %v380, %v384
    %v389 = vand.u32 2147483647, %v376
    %vm390 = vcmp.eq.f32.partialorder %v389, 8.507059e+37
    %v391 = vand.u32 %v376, 2147483648
    %v392 = vor.u32 1.1754944e-38, %v391
    %v393 = vsel %vm390, %v392, %v388
    %v394 = vmul.f32 %v371, %v393
    %v395 = vrcp.pop %v379
    %v396 = vmul.f32 %v379, %v395
    %v397 = vsub.f32 1.0, %v396
    %v398 = vmul.f32 %v395, %v397
    %v399 = vadd.f32 %v395, %v398
    %vm400 = vweird.f32 %v379
    %vm401 = vweird.f32 %v395
    %vm402 = vmor %vm400, %vm401
    %v403 = vsel %vm402, %v395, %v399
    %v404 = vand.u32 2147483647, %v379
    %vm405 = vcmp.eq.f32.partialorder %v404, 8.507059e+37
    %v406 = vand.u32 %v379, 2147483648
    %v407 = vor.u32 1.1754944e-38, %v406
    %v408 = vsel %vm405, %v407, %v403
    %v409 = vmul.f32 %v373, %v408
    %v410 = vpack.c.bf16 %v394, %v394
    %v411 = vpack.c.bf16 %v409, %v409
    %v413 = vsel %vm361, %v410, 0
    %vm415 = vcmask 1043456
    %v416 = vsel %vm415, %v302, 0
    %418 = vmatpush.bf16.msra.mxu0 0
    %419 = vmatpush.bf16.msra.mxu0 0
    %420 = vmatpush.bf16.msra.mxu0 0
    %421 = vmatpush.bf16.msra.mxu0 0
    %422 = vmatpush.bf16.msra.mxu0 0
    %423 = vmatpush.bf16.msra.mxu0 0
    %424 = vmatpush.bf16.msra.mxu0 0
    %425 = vmatpush.bf16.msra.mxu0 %v416
    %426 = vmatmul.bf16.gmra.mxu0 %v413
    %v427 = vpop.f32.mrf.mxu0
    %v428 = vadd.f32 0.0, %v427
    %v429 = vpop.f32.mrf.mxu0
    %430 = vdwg.mxu0
    %v432 = vsel %vm361, %v411, 0
    %v434 = vsel %vm415, %v303, 0
    %436 = vmatpush.bf16.msra.mxu0 0
    %437 = vmatpush.bf16.msra.mxu0 0
    %438 = vmatpush.bf16.msra.mxu0 0
    %439 = vmatpush.bf16.msra.mxu0 0
    %440 = vmatpush.bf16.msra.mxu0 0
    %441 = vmatpush.bf16.msra.mxu0 0
    %442 = vmatpush.bf16.msra.mxu0 0
    %443 = vmatpush.bf16.msra.mxu0 %v434
    %444 = vmatmul.bf16.gmra.mxu0 %v432
    %v445 = vpop.f32.mrf.mxu0
    %v446 = vadd.f32 0.0, %v445
    %v447 = vpop.f32.mrf.mxu0
    %448 = vdwg.mxu0
    %v449 = vpack.c.bf16 %v446, %v428
    %v451 = vunpack.c.l.b16 %v300
    %v452 = vpack.c.b16 %v451, %v451
    %453 = vrot.lane.b32.xlu0 %v452, 96
    %v454 = vpop.permute.xlu0 %453
    %v456 = vunpack.c.l.b16 %v302
    %v457 = vpack.c.b16 %v456, %v456
    %458 = vrot.lane.b32.xlu0 %v457, 96
    %v459 = vpop.permute.xlu0 %458
    %v461 = vsel %vm320, %v454, 0
    %v464 = vsel %vm320, %v459, 0
    %466 = vmatpush.bf16.xpose.msra.mxu0 0
    %467 = vmatpush.bf16.xpose.msra.mxu0 0
    %468 = vmatpush.bf16.xpose.msra.mxu0 0
    %469 = vmatpush.bf16.xpose.msra.mxu0 0
    %470 = vmatpush.bf16.xpose.msra.mxu0 0
    %471 = vmatpush.bf16.xpose.msra.mxu0 0
    %472 = vmatpush.bf16.xpose.msra.mxu0 0
    %473 = vmatpush.bf16.xpose.msra.mxu0 %v464
    %474 = vmatmul.bf16.gmra.mxu0 %v461
    %v475 = vpop.f32.mrf.mxu0
    %v476 = vadd.f32 0.0, %v475
    %v477 = vpop.f32.mrf.mxu0
    %478 = vdwg.mxu0
    %v480 = vunpack.c.l.b16 %v301
    %v481 = vpack.c.b16 %v480, %v480
    %482 = vrot.lane.b32.xlu0 %v481, 96
    %v483 = vpop.permute.xlu0 %482
    %v485 = vunpack.c.l.b16 %v303
    %v486 = vpack.c.b16 %v485, %v485
    %487 = vrot.lane.b32.xlu0 %v486, 96
    %v488 = vpop.permute.xlu0 %487
    %v490 = vsel %vm320, %v483, 0
    %v493 = vsel %vm320, %v488, 0
    %495 = vmatpush.bf16.xpose.msra.mxu0 0
    %496 = vmatpush.bf16.xpose.msra.mxu0 0
    %497 = vmatpush.bf16.xpose.msra.mxu0 0
    %498 = vmatpush.bf16.xpose.msra.mxu0 0
    %499 = vmatpush.bf16.xpose.msra.mxu0 0
    %500 = vmatpush.bf16.xpose.msra.mxu0 0
    %501 = vmatpush.bf16.xpose.msra.mxu0 0
    %502 = vmatpush.bf16.xpose.msra.mxu0 %v493
    %503 = vmatmul.bf16.gmra.mxu0 %v490
    %v504 = vpop.f32.mrf.mxu0
    %v505 = vadd.f32 0.0, %v504
    %v506 = vpop.f32.mrf.mxu0
    %507 = vdwg.mxu0
    %v508 = vmul.f32 %v476, 0.17677669
    %v509 = vmul.f32 %v505, 0.17677669
    %v510 = vsel %vm361, %v508, -inf
    %511 = vmax.xlane.f32.xlu0 %v510
    %v512 = vpop.xlane.xlu0 %511
    %v513 = vsel %vm361, %v509, -inf
    %514 = vmax.xlane.f32.xlu0 %v513
    %v515 = vpop.xlane.xlu0 %514
    %v516 = vsub.f32 %v508, %v512
    %v517 = vsub.f32 %v509, %v515
    %v518 = vmul.f32 %v516, 1.442695
    %v519 = vpow.pop %v518
    %v520 = vmul.f32 %v517, 1.442695
    %v521 = vpow.pop %v520
    %v522 = vsel %vm361, %v519, 0.0
    %523 = vadd.xlane.f32.xlu0 %v522
    %v524 = vpop.xlane.xlu0 %523
    %v525 = vsel %vm361, %v521, 0.0
    %526 = vadd.xlane.f32.xlu0 %v525
    %v527 = vpop.xlane.xlu0 %526
    %v528 = vrcp.pop %v524
    %v529 = vmul.f32 %v524, %v528
    %v530 = vsub.f32 1.0, %v529
    %v531 = vmul.f32 %v528, %v530
    %v532 = vadd.f32 %v528, %v531
    %vm533 = vweird.f32 %v524
    %vm534 = vweird.f32 %v528
    %vm535 = vmor %vm533, %vm534
    %v536 = vsel %vm535, %v528, %v532
    %v537 = vand.u32 2147483647, %v524
    %vm538 = vcmp.eq.f32.partialorder %v537, 8.507059e+37
    %v539 = vand.u32 %v524, 2147483648
    %v540 = vor.u32 1.1754944e-38, %v539
    %v541 = vsel %vm538, %v540, %v536
    %v542 = vmul.f32 %v519, %v541
    %v543 = vrcp.pop %v527
    %v544 = vmul.f32 %v527, %v543
    %v545 = vsub.f32 1.0, %v544
    %v546 = vmul.f32 %v543, %v545
    %v547 = vadd.f32 %v543, %v546
    %vm548 = vweird.f32 %v527
    %vm549 = vweird.f32 %v543
    %vm550 = vmor %vm548, %vm549
    %v551 = vsel %vm550, %v543, %v547
    %v552 = vand.u32 2147483647, %v527
    %vm553 = vcmp.eq.f32.partialorder %v552, 8.507059e+37
    %v554 = vand.u32 %v527, 2147483648
    %v555 = vor.u32 1.1754944e-38, %v554
    %v556 = vsel %vm553, %v555, %v551
    %v557 = vmul.f32 %v521, %v556
    %v558 = vpack.c.bf16 %v542, %v542
    %v559 = vpack.c.bf16 %v557, %v557
    %v561 = vsel %vm361, %v558, 0
    %v563 = vsel %vm415, %v459, 0
    %565 = vmatpush.bf16.msra.mxu0 0
    %566 = vmatpush.bf16.msra.mxu0 0
    %567 = vmatpush.bf16.msra.mxu0 0
    %568 = vmatpush.bf16.msra.mxu0 0
    %569 = vmatpush.bf16.msra.mxu0 0
    %570 = vmatpush.bf16.msra.mxu0 0
    %571 = vmatpush.bf16.msra.mxu0 0
    %572 = vmatpush.bf16.msra.mxu0 %v563
    %573 = vmatmul.bf16.gmra.mxu0 %v561
    %v574 = vpop.f32.mrf.mxu0
    %v575 = vadd.f32 0.0, %v574
    %v576 = vpop.f32.mrf.mxu0
    %577 = vdwg.mxu0
    %v579 = vsel %vm361, %v559, 0
    %v581 = vsel %vm415, %v488, 0
    %583 = vmatpush.bf16.msra.mxu0 0
    %584 = vmatpush.bf16.msra.mxu0 0
    %585 = vmatpush.bf16.msra.mxu0 0
    %586 = vmatpush.bf16.msra.mxu0 0
    %587 = vmatpush.bf16.msra.mxu0 0
    %588 = vmatpush.bf16.msra.mxu0 0
    %589 = vmatpush.bf16.msra.mxu0 0
    %590 = vmatpush.bf16.msra.mxu0 %v581
    %591 = vmatmul.bf16.gmra.mxu0 %v579
    %v592 = vpop.f32.mrf.mxu0
    %v593 = vadd.f32 0.0, %v592
    %v594 = vpop.f32.mrf.mxu0
    %595 = vdwg.mxu0
    %v596 = vpack.c.bf16 %v593, %v575
    %v601 = vunpack.c.l.b16 %v308
    %v602 = vunpack.c.l.b16 %v309
    %v603 = vunpack.c.l.b16 %v310
    %v604 = vunpack.c.l.b16 %v311
    %v605 = vpack.c.b16 %v602, %v601
    %v606 = vpack.c.b16 %v604, %v603
    %v610 = vsel %vm320, %v596, 0
    %612 = vmatpush.bf16.msra.mxu0 0
    %613 = vmatpush.bf16.msra.mxu0 0
    %614 = vmatpush.bf16.msra.mxu0 0
    %615 = vmatpush.bf16.msra.mxu0 0
    %616 = vmatpush.bf16.msra.mxu0 0
    %617 = vmatpush.bf16.msra.mxu0 0
    %618 = vmatpush.bf16.msra.mxu0 %v606
    %619 = vmatpush.bf16.msra.mxu0 %v605
    %620 = vmatmul.bf16.gmra.mxu0 %v610
    %v621 = vpop.f32.mrf.mxu0
    %v622 = vadd.f32 0.0, %v621
    %v623 = vpop.f32.mrf.mxu0
    %v624 = vadd.f32 0.0, %v623
    %625 = vdwg.mxu0
    %v630 = vunpack.c.l.b16 %v304
    %v631 = vunpack.c.l.b16 %v305
    %v632 = vunpack.c.l.b16 %v306
    %v633 = vunpack.c.l.b16 %v307
    %v634 = vpack.c.b16 %v631, %v630
    %v635 = vpack.c.b16 %v633, %v632
    %v639 = vsel %vm320, %v449, 0
    %641 = vmatpush.bf16.msra.mxu0 0
    %642 = vmatpush.bf16.msra.mxu0 0
    %643 = vmatpush.bf16.msra.mxu0 0
    %644 = vmatpush.bf16.msra.mxu0 0
    %645 = vmatpush.bf16.msra.mxu0 0
    %646 = vmatpush.bf16.msra.mxu0 0
    %647 = vmatpush.bf16.msra.mxu0 %v635
    %648 = vmatpush.bf16.msra.mxu0 %v634
    %649 = vmatmul.bf16.gmra.mxu0 %v639
    %v650 = vpop.f32.mrf.mxu0
    %v651 = vadd.f32 %v622, %v650
    %v652 = vpop.f32.mrf.mxu0
    %v653 = vadd.f32 %v624, %v652
    %654 = vdwg.mxu0
    %655 = vrot.lane.b32.xlu0 %v452, 64
    %v656 = vpop.permute.xlu0 %655
    %657 = vrot.lane.b32.xlu0 %v457, 64
    %v658 = vpop.permute.xlu0 %657
    %v660 = vsel %vm320, %v656, 0
    %v663 = vsel %vm320, %v658, 0
    %665 = vmatpush.bf16.xpose.msra.mxu0 0
    %666 = vmatpush.bf16.xpose.msra.mxu0 0
    %667 = vmatpush.bf16.xpose.msra.mxu0 0
    %668 = vmatpush.bf16.xpose.msra.mxu0 0
    %669 = vmatpush.bf16.xpose.msra.mxu0 0
    %670 = vmatpush.bf16.xpose.msra.mxu0 0
    %671 = vmatpush.bf16.xpose.msra.mxu0 0
    %672 = vmatpush.bf16.xpose.msra.mxu0 %v663
    %673 = vmatmul.bf16.gmra.mxu0 %v660
    %v674 = vpop.f32.mrf.mxu0
    %v675 = vadd.f32 0.0, %v674
    %v676 = vpop.f32.mrf.mxu0
    %677 = vdwg.mxu0
    %678 = vrot.lane.b32.xlu0 %v481, 64
    %v679 = vpop.permute.xlu0 %678
    %680 = vrot.lane.b32.xlu0 %v486, 64
    %v681 = vpop.permute.xlu0 %680
    %v683 = vsel %vm320, %v679, 0
    %v686 = vsel %vm320, %v681, 0
    %688 = vmatpush.bf16.xpose.msra.mxu0 0
    %689 = vmatpush.bf16.xpose.msra.mxu0 0
    %690 = vmatpush.bf16.xpose.msra.mxu0 0
    %691 = vmatpush.bf16.xpose.msra.mxu0 0
    %692 = vmatpush.bf16.xpose.msra.mxu0 0
    %693 = vmatpush.bf16.xpose.msra.mxu0 0
    %694 = vmatpush.bf16.xpose.msra.mxu0 0
    %695 = vmatpush.bf16.xpose.msra.mxu0 %v686
    %696 = vmatmul.bf16.gmra.mxu0 %v683
    %v697 = vpop.f32.mrf.mxu0
    %v698 = vadd.f32 0.0, %v697
    %v699 = vpop.f32.mrf.mxu0
    %700 = vdwg.mxu0
    %v701 = vmul.f32 %v675, 0.17677669
    %v702 = vmul.f32 %v698, 0.17677669
    %v703 = vsel %vm361, %v701, -inf
    %704 = vmax.xlane.f32.xlu0 %v703
    %v705 = vpop.xlane.xlu0 %704
    %v706 = vsel %vm361, %v702, -inf
    %707 = vmax.xlane.f32.xlu0 %v706
    %v708 = vpop.xlane.xlu0 %707
    %v709 = vsub.f32 %v701, %v705
    %v710 = vsub.f32 %v702, %v708
    %v711 = vmul.f32 %v709, 1.442695
    %v712 = vpow.pop %v711
    %v713 = vmul.f32 %v710, 1.442695
    %v714 = vpow.pop %v713
    %v715 = vsel %vm361, %v712, 0.0
    %716 = vadd.xlane.f32.xlu0 %v715
    %v717 = vpop.xlane.xlu0 %716
    %v718 = vsel %vm361, %v714, 0.0
    %719 = vadd.xlane.f32.xlu0 %v718
    %v720 = vpop.xlane.xlu0 %719
    %v721 = vrcp.pop %v717
    %v722 = vmul.f32 %v717, %v721
    %v723 = vsub.f32 1.0, %v722
    %v724 = vmul.f32 %v721, %v723
    %v725 = vadd.f32 %v721, %v724
    %vm726 = vweird.f32 %v717
    %vm727 = vweird.f32 %v721
    %vm728 = vmor %vm726, %vm727
    %v729 = vsel %vm728, %v721, %v725
    %v730 = vand.u32 2147483647, %v717
    %vm731 = vcmp.eq.f32.partialorder %v730, 8.507059e+37
    %v732 = vand.u32 %v717, 2147483648
    %v733 = vor.u32 1.1754944e-38, %v732
    %v734 = vsel %vm731, %v733, %v729
    %v735 = vmul.f32 %v712, %v734
    %v736 = vrcp.pop %v720
    %v737 = vmul.f32 %v720, %v736
    %v738 = vsub.f32 1.0, %v737
    %v739 = vmul.f32 %v736, %v738
    %v740 = vadd.f32 %v736, %v739
    %vm741 = vweird.f32 %v720
    %vm742 = vweird.f32 %v736
    %vm743 = vmor %vm741, %vm742
    %v744 = vsel %vm743, %v736, %v740
    %v745 = vand.u32 2147483647, %v720
    %vm746 = vcmp.eq.f32.partialorder %v745, 8.507059e+37
    %v747 = vand.u32 %v720, 2147483648
    %v748 = vor.u32 1.1754944e-38, %v747
    %v749 = vsel %vm746, %v748, %v744
    %v750 = vmul.f32 %v714, %v749
    %v751 = vpack.c.bf16 %v735, %v735
    %v752 = vpack.c.bf16 %v750, %v750
    %v754 = vsel %vm361, %v751, 0
    %v756 = vsel %vm415, %v658, 0
    %758 = vmatpush.bf16.msra.mxu0 0
    %759 = vmatpush.bf16.msra.mxu0 0
    %760 = vmatpush.bf16.msra.mxu0 0
    %761 = vmatpush.bf16.msra.mxu0 0
    %762 = vmatpush.bf16.msra.mxu0 0
    %763 = vmatpush.bf16.msra.mxu0 0
    %764 = vmatpush.bf16.msra.mxu0 0
    %765 = vmatpush.bf16.msra.mxu0 %v756
    %766 = vmatmul.bf16.gmra.mxu0 %v754
    %v767 = vpop.f32.mrf.mxu0
    %v768 = vadd.f32 0.0, %v767
    %v769 = vpop.f32.mrf.mxu0
    %770 = vdwg.mxu0
    %v772 = vsel %vm361, %v752, 0
    %v774 = vsel %vm415, %v681, 0
    %776 = vmatpush.bf16.msra.mxu0 0
    %777 = vmatpush.bf16.msra.mxu0 0
    %778 = vmatpush.bf16.msra.mxu0 0
    %779 = vmatpush.bf16.msra.mxu0 0
    %780 = vmatpush.bf16.msra.mxu0 0
    %781 = vmatpush.bf16.msra.mxu0 0
    %782 = vmatpush.bf16.msra.mxu0 0
    %783 = vmatpush.bf16.msra.mxu0 %v774
    %784 = vmatmul.bf16.gmra.mxu0 %v772
    %v785 = vpop.f32.mrf.mxu0
    %v786 = vadd.f32 0.0, %v785
    %v787 = vpop.f32.mrf.mxu0
    %788 = vdwg.mxu0
    %v789 = vpack.c.bf16 %v786, %v768
    %v794 = vunpack.c.l.b16 %v312
    %v795 = vunpack.c.l.b16 %v313
    %v796 = vunpack.c.l.b16 %v314
    %v797 = vunpack.c.l.b16 %v315
    %v798 = vpack.c.b16 %v795, %v794
    %v799 = vpack.c.b16 %v797, %v796
    %v803 = vsel %vm320, %v789, 0
    %805 = vmatpush.bf16.msra.mxu0 0
    %806 = vmatpush.bf16.msra.mxu0 0
    %807 = vmatpush.bf16.msra.mxu0 0
    %808 = vmatpush.bf16.msra.mxu0 0
    %809 = vmatpush.bf16.msra.mxu0 0
    %810 = vmatpush.bf16.msra.mxu0 0
    %811 = vmatpush.bf16.msra.mxu0 %v799
    %812 = vmatpush.bf16.msra.mxu0 %v798
    %813 = vmatmul.bf16.gmra.mxu0 %v803
    %v814 = vpop.f32.mrf.mxu0
    %v815 = vadd.f32 0.0, %v814
    %v816 = vpop.f32.mrf.mxu0
    %v817 = vadd.f32 0.0, %v816
    %818 = vdwg.mxu0
    %v819 = vadd.f32 %v651, %v815
    %v820 = vadd.f32 %v653, %v817
    %821 = vrot.lane.b32.xlu0 %v452, 32
    %v822 = vpop.permute.xlu0 %821
    %823 = vrot.lane.b32.xlu0 %v457, 32
    %v824 = vpop.permute.xlu0 %823
    %v826 = vsel %vm320, %v822, 0
    %v829 = vsel %vm320, %v824, 0
    %831 = vmatpush.bf16.xpose.msra.mxu0 0
    %832 = vmatpush.bf16.xpose.msra.mxu0 0
    %833 = vmatpush.bf16.xpose.msra.mxu0 0
    %834 = vmatpush.bf16.xpose.msra.mxu0 0
    %835 = vmatpush.bf16.xpose.msra.mxu0 0
    %836 = vmatpush.bf16.xpose.msra.mxu0 0
    %837 = vmatpush.bf16.xpose.msra.mxu0 0
    %838 = vmatpush.bf16.xpose.msra.mxu0 %v829
    %839 = vmatmul.bf16.gmra.mxu0 %v826
    %v840 = vpop.f32.mrf.mxu0
    %v841 = vadd.f32 0.0, %v840
    %v842 = vpop.f32.mrf.mxu0
    %843 = vdwg.mxu0
    %844 = vrot.lane.b32.xlu0 %v481, 32
    %v845 = vpop.permute.xlu0 %844
    %846 = vrot.lane.b32.xlu0 %v486, 32
    %v847 = vpop.permute.xlu0 %846
    %v849 = vsel %vm320, %v845, 0
    %v852 = vsel %vm320, %v847, 0
    %854 = vmatpush.bf16.xpose.msra.mxu0 0
    %855 = vmatpush.bf16.xpose.msra.mxu0 0
    %856 = vmatpush.bf16.xpose.msra.mxu0 0
    %857 = vmatpush.bf16.xpose.msra.mxu0 0
    %858 = vmatpush.bf16.xpose.msra.mxu0 0
    %859 = vmatpush.bf16.xpose.msra.mxu0 0
    %860 = vmatpush.bf16.xpose.msra.mxu0 0
    %861 = vmatpush.bf16.xpose.msra.mxu0 %v852
    %862 = vmatmul.bf16.gmra.mxu0 %v849
    %v863 = vpop.f32.mrf.mxu0
    %v864 = vadd.f32 0.0, %v863
    %v865 = vpop.f32.mrf.mxu0
    %866 = vdwg.mxu0
    %v867 = vmul.f32 %v841, 0.17677669
    %v868 = vmul.f32 %v864, 0.17677669
    %v869 = vsel %vm361, %v867, -inf
    %870 = vmax.xlane.f32.xlu0 %v869
    %v871 = vpop.xlane.xlu0 %870
    %v872 = vsel %vm361, %v868, -inf
    %873 = vmax.xlane.f32.xlu0 %v872
    %v874 = vpop.xlane.xlu0 %873
    %v875 = vsub.f32 %v867, %v871
    %v876 = vsub.f32 %v868, %v874
    %v877 = vmul.f32 %v875, 1.442695
    %v878 = vpow.pop %v877
    %v879 = vmul.f32 %v876, 1.442695
    %v880 = vpow.pop %v879
    %v881 = vsel %vm361, %v878, 0.0
    %882 = vadd.xlane.f32.xlu0 %v881
    %v883 = vpop.xlane.xlu0 %882
    %v884 = vsel %vm361, %v880, 0.0
    %885 = vadd.xlane.f32.xlu0 %v884
    %v886 = vpop.xlane.xlu0 %885
    %v887 = vrcp.pop %v883
    %v888 = vmul.f32 %v883, %v887
    %v889 = vsub.f32 1.0, %v888
    %v890 = vmul.f32 %v887, %v889
    %v891 = vadd.f32 %v887, %v890
    %vm892 = vweird.f32 %v883
    %vm893 = vweird.f32 %v887
    %vm894 = vmor %vm892, %vm893
    %v895 = vsel %vm894, %v887, %v891
    %v896 = vand.u32 2147483647, %v883
    %vm897 = vcmp.eq.f32.partialorder %v896, 8.507059e+37
    %v898 = vand.u32 %v883, 2147483648
    %v899 = vor.u32 1.1754944e-38, %v898
    %v900 = vsel %vm897, %v899, %v895
    %v901 = vmul.f32 %v878, %v900
    %v902 = vrcp.pop %v886
    %v903 = vmul.f32 %v886, %v902
    %v904 = vsub.f32 1.0, %v903
    %v905 = vmul.f32 %v902, %v904
    %v906 = vadd.f32 %v902, %v905
    %vm907 = vweird.f32 %v886
    %vm908 = vweird.f32 %v902
    %vm909 = vmor %vm907, %vm908
    %v910 = vsel %vm909, %v902, %v906
    %v911 = vand.u32 2147483647, %v886
    %vm912 = vcmp.eq.f32.partialorder %v911, 8.507059e+37
    %v913 = vand.u32 %v886, 2147483648
    %v914 = vor.u32 1.1754944e-38, %v913
    %v915 = vsel %vm912, %v914, %v910
    %v916 = vmul.f32 %v880, %v915
    %v917 = vpack.c.bf16 %v901, %v901
    %v918 = vpack.c.bf16 %v916, %v916
    %v920 = vsel %vm361, %v917, 0
    %v922 = vsel %vm415, %v824, 0
    %924 = vmatpush.bf16.msra.mxu0 0
    %925 = vmatpush.bf16.msra.mxu0 0
    %926 = vmatpush.bf16.msra.mxu0 0
    %927 = vmatpush.bf16.msra.mxu0 0
    %928 = vmatpush.bf16.msra.mxu0 0
    %929 = vmatpush.bf16.msra.mxu0 0
    %930 = vmatpush.bf16.msra.mxu0 0
    %931 = vmatpush.bf16.msra.mxu0 %v922
    %932 = vmatmul.bf16.gmra.mxu0 %v920
    %v933 = vpop.f32.mrf.mxu0
    %v934 = vadd.f32 0.0, %v933
    %v935 = vpop.f32.mrf.mxu0
    %936 = vdwg.mxu0
    %v938 = vsel %vm361, %v918, 0
    %v940 = vsel %vm415, %v847, 0
    %942 = vmatpush.bf16.msra.mxu0 0
    %943 = vmatpush.bf16.msra.mxu0 0
    %944 = vmatpush.bf16.msra.mxu0 0
    %945 = vmatpush.bf16.msra.mxu0 0
    %946 = vmatpush.bf16.msra.mxu0 0
    %947 = vmatpush.bf16.msra.mxu0 0
    %948 = vmatpush.bf16.msra.mxu0 0
    %949 = vmatpush.bf16.msra.mxu0 %v940
    %950 = vmatmul.bf16.gmra.mxu0 %v938
    %v951 = vpop.f32.mrf.mxu0
    %v952 = vadd.f32 0.0, %v951
    %v953 = vpop.f32.mrf.mxu0
    %954 = vdwg.mxu0
    %v955 = vpack.c.bf16 %v952, %v934
    %v960 = vunpack.c.l.b16 %v316
    %v961 = vunpack.c.l.b16 %v317
    %v962 = vunpack.c.l.b16 %v318
    %v963 = vunpack.c.l.b16 %v319
    %v964 = vpack.c.b16 %v961, %v960
    %v965 = vpack.c.b16 %v963, %v962
    %v969 = vsel %vm320, %v955, 0
    %971 = vmatpush.bf16.msra.mxu0 0
    %972 = vmatpush.bf16.msra.mxu0 0
    %973 = vmatpush.bf16.msra.mxu0 0
    %974 = vmatpush.bf16.msra.mxu0 0
    %975 = vmatpush.bf16.msra.mxu0 0
    %976 = vmatpush.bf16.msra.mxu0 0
    %977 = vmatpush.bf16.msra.mxu0 %v965
    %978 = vmatpush.bf16.msra.mxu0 %v964
    %979 = vmatmul.bf16.gmra.mxu0 %v969
    %v980 = vpop.f32.mrf.mxu0
    %v981 = vadd.f32 0.0, %v980
    %v982 = vpop.f32.mrf.mxu0
    %v983 = vadd.f32 0.0, %v982
    %984 = vdwg.mxu0
    %v985 = vadd.f32 %v819, %v981
    %v986 = vadd.f32 %v820, %v983
    %v987 = vadd.f32 %v985, %v141
    %v988 = vadd.f32 %v986, %v142
    %v989 = vld [vmem:[%s4] sm:$0x1]
    %v990 = vld [vmem:[#allocation9] sm:$0x1]
    %991 = vadd.xlane.f32.xlu0 %v987
    %v992 = vpop.xlane.xlu0 %991
    %993 = vadd.xlane.f32.xlu0 %v988
    %v994 = vpop.xlane.xlu0 %993
    %v995 = vrcp.pop 128.0
    %v996 = vmul.f32 128.0, %v995
    %v997 = vsub.f32 1.0, %v996
    %v998 = vmul.f32 %v995, %v997
    %v999 = vadd.f32 %v995, %v998
    %vm1000 = vweird.f32 %v995
    %v1001 = vsel %vm1000, %v995, %v999
    %v1002 = vmul.f32 %v992, %v1001
    %v1003 = vmul.f32 %v994, %v1001
    %v1004 = vsub.f32 %v987, %v1002
    %v1005 = vsub.f32 %v988, %v1003
    %v1006 = vmul.f32 %v1004, %v1004
    %v1007 = vmul.f32 %v1005, %v1005
    %1008 = vadd.xlane.f32.xlu0 %v1006
    %v1009 = vpop.xlane.xlu0 %1008
    %1010 = vadd.xlane.f32.xlu0 %v1007
    %v1011 = vpop.xlane.xlu0 %1010
    %v1012 = vmul.f32 %v1009, %v1001
    %v1013 = vmul.f32 %v1011, %v1001
    %v1014 = vadd.f32 %v1012, 1e-05
    %v1015 = vadd.f32 %v1013, 1e-05
    %v1016 = vrsqrt.pop %v1014
    %v1017 = vmul.f32 %v1016, %v1014
    %v1018 = vmul.f32 %v1017, %v1016
    %v1019 = vmul.f32 0.5, %v1018
    %v1020 = vsub.f32 1.5, %v1019
    %v1021 = vmul.f32 %v1016, %v1020
    %vm1022 = vweird.f32 %v1014
    %vm1023 = vweird.f32 %v1016
    %vm1024 = vmor %vm1022, %vm1023
    %v1025 = vsel %vm1024, %v1016, %v1021
    %v1026 = vrsqrt.pop %v1015
    %v1027 = vmul.f32 %v1026, %v1015
    %v1028 = vmul.f32 %v1027, %v1026
    %v1029 = vmul.f32 0.5, %v1028
    %v1030 = vsub.f32 1.5, %v1029
    %v1031 = vmul.f32 %v1026, %v1030
    %vm1032 = vweird.f32 %v1015
    %vm1033 = vweird.f32 %v1026
    %vm1034 = vmor %vm1032, %vm1033
    %v1035 = vsel %vm1034, %v1026, %v1031
    %v1036 = vmul.f32 %v1004, %v1025
    %v1037 = vmul.f32 %v1005, %v1035
    %v1039 = vperm.slane %v989, 0
    %v1041 = vmul.f32 %v1036, %v1039
    %v1042 = vmul.f32 %v1037, %v1039
    %v1044 = vperm.slane %v990, 0
    %v1046 = vadd.f32 %v1041, %v1044
    %v1047 = vadd.f32 %v1042, %v1044
    %v1048 = vpack.c.bf16 %v1047, %v1046
    %v1049 = vld [vmem:[#allocation10] sm:$0xf]
    %v1050 = vld [vmem:[#allocation10 + $0x4] sm:$0xf]
    %v1051 = vld [vmem:[#allocation10 + $0x8] sm:$0xf]
    %v1052 = vld [vmem:[#allocation10 + $0xc] sm:$0xf]
    %v1053 = vld [vmem:[#allocation10 + $0x10] sm:$0xf]
    %v1054 = vld [vmem:[#allocation10 + $0x14] sm:$0xf]
    %v1055 = vld [vmem:[#allocation10 + $0x18] sm:$0xf]
    %v1056 = vld [vmem:[#allocation10 + $0x1c] sm:$0xf]
    %v1057 = vld [vmem:[#allocation10 + $0x20] sm:$0xf]
    %v1058 = vld [vmem:[#allocation10 + $0x24] sm:$0xf]
    %v1059 = vld [vmem:[#allocation10 + $0x28] sm:$0xf]
    %v1060 = vld [vmem:[#allocation10 + $0x2c] sm:$0xf]
    %v1061 = vld [vmem:[#allocation10 + $0x30] sm:$0xf]
    %v1062 = vld [vmem:[#allocation10 + $0x34] sm:$0xf]
    %v1063 = vld [vmem:[#allocation10 + $0x38] sm:$0xf]
    %v1064 = vld [vmem:[#allocation10 + $0x3c] sm:$0xf]
    %v1065 = vld [vmem:[#allocation12] sm:$0x1]
    %v1067 = vperm.slane %v1065, 0
    %v1085 = vunpack.c.l.b16 %v1049
    %v1086 = vunpack.c.l.b16 %v1050
    %v1087 = vunpack.c.l.b16 %v1051
    %v1088 = vunpack.c.l.b16 %v1052
    %v1089 = vunpack.c.l.b16 %v1053
    %v1090 = vunpack.c.l.b16 %v1054
    %v1091 = vunpack.c.l.b16 %v1055
    %v1092 = vunpack.c.l.b16 %v1056
    %v1093 = vunpack.c.l.b16 %v1057
    %v1094 = vunpack.c.l.b16 %v1058
    %v1095 = vunpack.c.l.b16 %v1059
    %v1096 = vunpack.c.l.b16 %v1060
    %v1097 = vunpack.c.l.b16 %v1061
    %v1098 = vunpack.c.l.b16 %v1062
    %v1099 = vunpack.c.l.b16 %v1063
    %v1100 = vunpack.c.l.b16 %v1064
    %v1101 = vpack.c.b16 %v1086, %v1085
    %v1102 = vpack.c.b16 %v1088, %v1087
    %v1103 = vpack.c.b16 %v1090, %v1089
    %v1104 = vpack.c.b16 %v1092, %v1091
    %v1105 = vpack.c.b16 %v1094, %v1093
    %v1106 = vpack.c.b16 %v1096, %v1095
    %v1107 = vpack.c.b16 %v1098, %v1097
    %v1108 = vpack.c.b16 %v1100, %v1099
    %1117 = vmatpush.bf16.msra.mxu0 %v1108
    %1118 = vmatpush.bf16.msra.mxu0 %v1107
    %1119 = vmatpush.bf16.msra.mxu0 %v1106
    %1120 = vmatpush.bf16.msra.mxu0 %v1105
    %1121 = vmatpush.bf16.msra.mxu0 %v1104
    %1122 = vmatpush.bf16.msra.mxu0 %v1103
    %1123 = vmatpush.bf16.msra.mxu0 %v1102
    %1124 = vmatpush.bf16.msra.mxu0 %v1101
    %1125 = vmatmul.bf16.gmra.mxu0 %v1048
    %v1126 = vpop.f32.mrf.mxu0
    %v1127 = vadd.f32 %v1067, %v1126
    %v1128 = vpop.f32.mrf.mxu0
    %v1129 = vadd.f32 %v1067, %v1128
    %1130 = vdwg.mxu0
    %v1131 = vadd.f32 %v1046, %v1127
    %v1132 = vadd.f32 %v1047, %v1129
    %v1133 = vld [vmem:[%s8] sm:$0x1]
    %v1134 = vld [vmem:[%s9] sm:$0x1]
    %1135 = vadd.xlane.f32.xlu0 %v1131
    %v1136 = vpop.xlane.xlu0 %1135
    %1137 = vadd.xlane.f32.xlu0 %v1132
    %v1138 = vpop.xlane.xlu0 %1137
    %v1139 = vmul.f32 %v1136, %v1001
    %v1140 = vmul.f32 %v1138, %v1001
    %v1141 = vsub.f32 %v1131, %v1139
    %v1142 = vsub.f32 %v1132, %v1140
    %v1143 = vmul.f32 %v1141, %v1141
    %v1144 = vmul.f32 %v1142, %v1142
    %1145 = vadd.xlane.f32.xlu0 %v1143
    %v1146 = vpop.xlane.xlu0 %1145
    %1147 = vadd.xlane.f32.xlu0 %v1144
    %v1148 = vpop.xlane.xlu0 %1147
    %v1149 = vmul.f32 %v1146, %v1001
    %v1150 = vmul.f32 %v1148, %v1001
    %v1151 = vadd.f32 %v1149, 1e-05
    %v1152 = vadd.f32 %v1150, 1e-05
    %v1153 = vrsqrt.pop %v1151
    %v1154 = vmul.f32 %v1153, %v1151
    %v1155 = vmul.f32 %v1154, %v1153
    %v1156 = vmul.f32 0.5, %v1155
    %v1157 = vsub.f32 1.5, %v1156
    %v1158 = vmul.f32 %v1153, %v1157
    %vm1159 = vweird.f32 %v1151
    %vm1160 = vweird.f32 %v1153
    %vm1161 = vmor %vm1159, %vm1160
    %v1162 = vsel %vm1161, %v1153, %v1158
    %v1163 = vrsqrt.pop %v1152
    %v1164 = vmul.f32 %v1163, %v1152
    %v1165 = vmul.f32 %v1164, %v1163
    %v1166 = vmul.f32 0.5, %v1165
    %v1167 = vsub.f32 1.5, %v1166
    %v1168 = vmul.f32 %v1163, %v1167
    %vm1169 = vweird.f32 %v1152
    %vm1170 = vweird.f32 %v1163
    %vm1171 = vmor %vm1169, %vm1170
    %v1172 = vsel %vm1171, %v1163, %v1168
    %v1173 = vmul.f32 %v1141, %v1162
    %v1174 = vmul.f32 %v1142, %v1172
    %v1176 = vperm.slane %v1133, 0
    %v1178 = vmul.f32 %v1173, %v1176
    %v1179 = vmul.f32 %v1174, %v1176
    %v1181 = vperm.slane %v1134, 0
    %v1183 = vadd.f32 %v1178, %v1181
    %v1184 = vadd.f32 %v1179, %v1181
    %1185 = vst [vmem:[%s10] sm:$0xff] %v1183
    %1186 = vst [vmem:[%s10 + $0x8] sm:$0xff] %v1184
    // Predicated region
    $region70: #{forward.3} parent=1 // pred_check
      _
    $region71: #{forward.3} parent=1 // pred_check_branch
      %1188 = sbr.rel (0) target = $region73
    $region72: #{forward.3} parent=1 // pred_region
      _
    $region73: #{forward.3} parent=1 // pred_fallthru
      _
    // Predicated region
    $region74: #{forward.3} parent=1 // pred_check
      _
    $region75: #{forward.3} parent=1 // pred_check_branch
      %1190 = sbr.rel (0) target = $region77
    $region76: #{forward.3} parent=1 // pred_region
      _
    $region77: #{forward.3} parent=1 // pred_fallthru
      _
    %1191 = vsyncpa [#allocation3], 1
    %1192 = vsyncpa [#allocation5], 1
    %1193 = vsyncpa [#allocation8], 1
    %1194 = vsyncpa [#allocation11], 1

</llo_original>
